<compile_context>
chip_gen: v6e
topology: v6e:2x2x1
jax: 0.10.0
libtpu: 0.0.40
codegen_flags: <defaults>
</compile_context>

<pallas_src>
import jax
import jax.numpy as jnp
import numpy as np
from jax.experimental import pallas as pl
from jax.experimental.pallas import tpu as pltpu

# classifier MLP dims: 1024 -> 512 -> 256 -> 128 -> 64 -> 32 -> 16 -> 2
CLS_DIMS = [1024, 512, 256, 128, 64, 32, 16, 2]
# lane-padded widths used inside the kernel (everything below 128 padded up to 128)
PAD_DIMS = [1024, 512, 256, 128, 128, 128, 128]
N_HIDDEN = 6          # number of (Linear, BN, Dropout, PReLU) blocks
NUM_CLASSES = 2
BN_EPS = 1e-5
FEAT_DIM = 256        # cfg.MODEL.BACKBONE.FEAT_DIM (small synthetic choice; multiple of 128)
EMBEDDING_DIM = 1024  # hard-coded in the module
OUT_PAD = 128         # lane-dense padded logits width (real logits live in columns [:2])
TILE_ALIGN = 16       # bf16 sublane packing; also satisfies the f32 (8, 128) rule


def _round_up(x, m):
    return ((x + m - 1) // m) * m


def verif_head_kernel(alpha_ref, x_ref, conv_w_ref,
                      w1_ref, w2_ref, w3_ref, w4_ref, w5_ref, w6_ref,
                      ss_ref, w_last_ref, out_ref):
    """One batch tile of the whole VerifHead hot path.

    alpha_ref  : (N_HIDDEN,) f32 SMEM (scalar-prefetched shared PReLU alphas)
    x_ref      : (TB, FEAT_DIM) bf16 feature tile
    conv_w_ref : (FEAT_DIM, 1024) bf16 bottleneck weight (1x1 conv == matmul)
    w*_ref     : bf16 Linear weights, zero-padded to PAD_DIMS lane widths
    ss_ref     : (16, 1024) f32; row i = BN scale_i, row 8+i = fused (bias + BN) shift_i
    w_last_ref : (128, OUT_PAD) bf16 final Linear(16, 2, bias=False), zero-padded
    out_ref    : (TB, OUT_PAD) f32 padded logits (columns [:2] are real)
    """
    # bottleneck: Conv2d(feat_dim, 1024, 1, 1, bias=False) on (B, C, 1, 1) == matmul.
    # Cast the (TB, 1024) intermediate to bf16 immediately so large live values / spills
    # between layers are half-width (epilogue math below stays f32).
    h = jnp.dot(x_ref[...], conv_w_ref[...],
                preferred_element_type=jnp.float32).astype(jnp.bfloat16)

    # classifier: 6 x [Linear -> BatchNorm1d(eval) -> Dropout(identity) -> PReLU]
    for i, w_ref in enumerate((w1_ref, w2_ref, w3_ref, w4_ref, w5_ref, w6_ref)):
        d = PAD_DIMS[i + 1]                                         # padded fan_out (>= 128)
        acc = jnp.dot(h, w_ref[...], preferred_element_type=jnp.float32)
        # Linear bias + eval-mode BN as an f32 per-channel scale/shift (padded lanes stay 0
        # because both the padded weight columns and the padded shift entries are zero).
        acc = acc * ss_ref[i:i + 1, :d] + ss_ref[8 + i:8 + i + 1, :d]
        alpha = alpha_ref[i]                                        # shared PReLU alpha
        acc = jnp.where(acc > 0, acc, alpha * acc)
        h = acc.astype(jnp.bfloat16)                                # bf16 inter-layer activation

    # final Linear(16, 2, bias=False); weight zero-padded to 128 lanes for a dense store
    out_ref[...] = jnp.dot(h, w_last_ref[...],
                           preferred_element_type=jnp.float32).astype(out_ref.dtype)


def init_params(key, feat_dim=FEAT_DIM):
    """Deterministic synthetic parameters (shapes follow the PyTorch module), kernel-prepped."""
    n_keys = 1 + 6 * N_HIDDEN + 1
    keys = iter(jax.random.split(key, n_keys))

    params = {}
    # Conv2d(feat_dim, 1024, 1, 1, bias=False): weight (1024, feat_dim, 1, 1)
    conv_w = jax.random.normal(next(keys), (EMBEDDING_DIM, feat_dim), jnp.float32)
    conv_w = conv_w / jnp.sqrt(jnp.float32(feat_dim))
    params["conv_w_t"] = conv_w.T.astype(jnp.bfloat16)              # (feat_dim, 1024) bf16

    w_list = []
    scale_shift = jnp.zeros((16, EMBEDDING_DIM), jnp.float32)       # rows 0..5 scale, 8..13 shift
    for i in range(N_HIDDEN):
        fan_in, fan_out = CLS_DIMS[i], CLS_DIMS[i + 1]
        pin, pout = PAD_DIMS[i], PAD_DIMS[i + 1]
        w = jax.random.normal(next(keys), (fan_out, fan_in), jnp.float32) / jnp.sqrt(
            jnp.float32(fan_in))
        b = 0.01 * jax.random.normal(next(keys), (fan_out,), jnp.float32)
        gamma = 1.0 + 0.1 * jax.random.normal(next(keys), (fan_out,), jnp.float32)
        beta = 0.05 * jax.random.normal(next(keys), (fan_out,), jnp.float32)
        rmean = 0.05 * jax.random.normal(next(keys), (fan_out,), jnp.float32)
        rvar = 1.0 + 0.1 * jnp.abs(jax.random.normal(next(keys), (fan_out,), jnp.float32))
        scale = gamma / jnp.sqrt(rvar + BN_EPS)                     # BN scale, kept f32
        shift = beta + (b - rmean) * scale                          # bias + BN shift, f32 exact
        # weight zero-padded to lane-dense widths; padded rows/cols are exactly zero
        wp = jnp.zeros((pin, pout), jnp.float32).at[:fan_in, :fan_out].set(w.T)
        w_list.append(wp.astype(jnp.bfloat16))
        scale_shift = scale_shift.at[i, :fan_out].set(scale)
        scale_shift = scale_shift.at[8 + i, :fan_out].set(shift)
    params["w_list"] = w_list
    params["scale_shift"] = scale_shift

    # Linear(16, 2, bias=False), zero-padded to (128, OUT_PAD) for lane-dense in/out
    w_last = jax.random.normal(next(keys), (NUM_CLASSES, CLS_DIMS[-2]), jnp.float32) / jnp.sqrt(
        jnp.float32(CLS_DIMS[-2]))
    wlp = jnp.zeros((PAD_DIMS[6], OUT_PAD), jnp.float32).at[:CLS_DIMS[-2], :NUM_CLASSES].set(
        w_last.T)
    params["w_last"] = wlp.astype(jnp.bfloat16)

    # nn.PReLU() default: one shared alpha = 0.25 per PReLU module
    params["alphas"] = jnp.full((N_HIDDEN,), 0.25, jnp.float32)
    return params


def _choose_tile(n, tile_batch):
    """Pick a sublane-aligned batch tile; keep >=2 grid steps so v7x's 2nd TC gets work."""
    tile_batch = max(TILE_ALIGN, _round_up(int(tile_batch), TILE_ALIGN))
    n_aligned = _round_up(max(int(n), 1), TILE_ALIGN)
    if n_aligned > TILE_ALIGN:
        tb = min(tile_batch, _round_up(pl.cdiv(n_aligned, 2), TILE_ALIGN))
    else:
        tb = n_aligned
    n_pad = _round_up(n_aligned, tb)
    return tb, n_pad


def verif_head_forward(features, params, neck_feat="before", tile_batch=1024):
    n, feat_dim = features.shape
    tb, n_pad = _choose_tile(n, tile_batch)

    # bf16 feature tiles halve the x HBM->VMEM DMA (ideally the backbone already emits bf16)
    x = features.astype(jnp.bfloat16)
    if n_pad != n:
        x = jnp.pad(x, ((0, n_pad - n), (0, 0)))

    grid = (n_pad // tb,)

    # constant index_map -> weights/scales stay VMEM-resident across batch tiles (no re-DMA);
    # total VMEM (~2 MiB of weights + TB-sized tiles) stays far under the 48 MiB limit, so the
    # default double-buffering of these resident operands is harmless.
    def const2d(i, alphas):
        return (0, 0)

    flat_inputs = [x, params["conv_w_t"], *params["w_list"],
                   params["scale_shift"], params["w_last"]]
    in_specs = [pl.BlockSpec((tb, feat_dim), lambda i, alphas: (i, 0))]
    in_specs += [pl.BlockSpec(a.shape, const2d) for a in flat_inputs[1:]]

    flops_per_row = 2 * (feat_dim * EMBEDDING_DIM
                         + sum(PAD_DIMS[i] * PAD_DIMS[i + 1] for i in range(N_HIDDEN))
                         + PAD_DIMS[6] * OUT_PAD)
    bytes_in = sum(int(np.prod(a.shape)) * a.dtype.itemsize for a in flat_inputs)
    bytes_out = n_pad * OUT_PAD * 4
    cost = pl.CostEstimate(flops=flops_per_row * n_pad, transcendentals=0,
                           bytes_accessed=int(bytes_in + bytes_out))

    padded_logits = pl.pallas_call(
        verif_head_kernel,
        out_shape=jax.ShapeDtypeStruct((n_pad, OUT_PAD), jnp.float32),
        grid_spec=pltpu.PrefetchScalarGridSpec(
            num_scalar_prefetch=1,               # PReLU alphas land in SMEM
            grid=grid,
            in_specs=in_specs,
            out_specs=pl.BlockSpec((tb, OUT_PAD), lambda i, alphas: (i, 0)),
        ),
        compiler_params=pltpu.CompilerParams(
            dimension_semantics=("parallel",),   # shard batch tiles across v7x TensorCores
            vmem_limit_bytes=48 * 1024 * 1024,   # safe on v7x (64 MiB phys), ample everywhere
        ),
        cost_estimate=cost,
    )(params["alphas"], *flat_inputs)

    # Padded columns 2..127 are exact zeros (final weight padding is zero and there is no
    # post-matmul epilogue).  At very large batch, consumers should read columns 0:2 of the
    # padded buffer directly instead of forcing this extra slicing pass.
    cls_outputs = padded_logits[:n, :NUM_CLASSES]

    if neck_feat == "before":
        feat = features          # global_feat[..., 0, 0]
    elif neck_feat == "after":
        # TODO(synk): expose bn_feat (post-bottleneck feature) as a second lane-dense kernel
        # output if neck_feat='after' is needed.
        raise NotImplementedError("neck_feat='after' not wired as a kernel output")
    else:
        raise KeyError(f"{neck_feat} is invalid for MODEL.HEADS.NECK_FEAT")

    return {"cls_outputs": cls_outputs,
            "pred_class_logits": cls_outputs,
            "features": feat}


def reference_forward(features, params):
    """Plain-JAX reference with identical eval-mode semantics / numerics as the kernel."""
    h = jnp.dot(features.astype(jnp.bfloat16), params["conv_w_t"],
                preferred_element_type=jnp.float32).astype(jnp.bfloat16)
    ss = params["scale_shift"]
    for i in range(N_HIDDEN):
        d = PAD_DIMS[i + 1]
        acc = jnp.dot(h, params["w_list"][i], preferred_element_type=jnp.float32)
        acc = acc * ss[i:i + 1, :d] + ss[8 + i:8 + i + 1, :d]
        a = params["alphas"][i]
        acc = jnp.where(acc > 0, acc, a * acc)
        h = acc.astype(jnp.bfloat16)
    logits = jnp.dot(h, params["w_last"], preferred_element_type=jnp.float32)
    return logits[:, :NUM_CLASSES]


if __name__ == "__main__":
    key = jax.random.PRNGKey(0)
    k_feat, k_params = jax.random.split(key)

    batch = 8
    features = jax.random.normal(k_feat, (batch, FEAT_DIM), jnp.float32)
    params = init_params(k_params, FEAT_DIM)

    out = verif_head_forward(features, params)
    jax.block_until_ready(out)

    ref_logits = reference_forward(features, params)
    np.testing.assert_allclose(np.asarray(out["cls_outputs"]),
                               np.asarray(ref_logits), rtol=2e-2, atol=2e-2)
    assert out["cls_outputs"].shape == (batch, NUM_CLASSES)
    assert out["pred_class_logits"].shape == (batch, NUM_CLASSES)
    assert out["features"].shape == (batch, FEAT_DIM)

    # quick multi-tile smoke test (exercises the >=2 grid-step / padding path)
    big = jax.random.normal(k_feat, (300, FEAT_DIM), jnp.float32)
    out_big = verif_head_forward(big, params, tile_batch=1024)
    jax.block_until_ready(out_big)
    np.testing.assert_allclose(np.asarray(out_big["cls_outputs"]),
                               np.asarray(reference_forward(big, params)),
                               rtol=2e-2, atol=2e-2)

    print("KERNEL_OK")
</pallas_src>

<mosaic_0001>
module attributes {stable_mosaic.version = 11 : i64} {
  func.func @verif_head_kernel(%arg0: i32, %arg1: memref<6xf32, #tpu.memory_space<smem>>, %arg2: memref<16x256xbf16, #tpu.memory_space<vmem>>, %arg3: memref<256x1024xbf16, #tpu.memory_space<vmem>>, %arg4: memref<1024x512xbf16, #tpu.memory_space<vmem>>, %arg5: memref<512x256xbf16, #tpu.memory_space<vmem>>, %arg6: memref<256x128xbf16, #tpu.memory_space<vmem>>, %arg7: memref<128x128xbf16, #tpu.memory_space<vmem>>, %arg8: memref<128x128xbf16, #tpu.memory_space<vmem>>, %arg9: memref<128x128xbf16, #tpu.memory_space<vmem>>, %arg10: memref<16x1024xf32, #tpu.memory_space<vmem>>, %arg11: memref<128x128xbf16, #tpu.memory_space<vmem>>, %arg12: memref<16x128xf32, #tpu.memory_space<vmem>>) attributes {dimension_semantics = [#tpu.dimension_semantics<parallel>], iteration_bounds = array<i64: 1>, scalar_prefetch = 1 : i64, scratch_operands = 0 : i64, tpu.core_type = #tpu.core_type<tc>, window_params = [{transform_indices = @transform_0, window_bounds = array<i64: 16, 256>}, {pipeline_mode = #tpu.pipeline_mode<synchronous>, transform_indices = @transform_1, window_bounds = array<i64: 256, 1024>}, {pipeline_mode = #tpu.pipeline_mode<synchronous>, transform_indices = @transform_2, window_bounds = array<i64: 1024, 512>}, {pipeline_mode = #tpu.pipeline_mode<synchronous>, transform_indices = @transform_3, window_bounds = array<i64: 512, 256>}, {pipeline_mode = #tpu.pipeline_mode<synchronous>, transform_indices = @transform_4, window_bounds = array<i64: 256, 128>}, {pipeline_mode = #tpu.pipeline_mode<synchronous>, transform_indices = @transform_5, window_bounds = array<i64: 128, 128>}, {pipeline_mode = #tpu.pipeline_mode<synchronous>, transform_indices = @transform_6, window_bounds = array<i64: 128, 128>}, {pipeline_mode = #tpu.pipeline_mode<synchronous>, transform_indices = @transform_7, window_bounds = array<i64: 128, 128>}, {pipeline_mode = #tpu.pipeline_mode<synchronous>, transform_indices = @transform_8, window_bounds = array<i64: 16, 1024>}, {pipeline_mode = #tpu.pipeline_mode<synchronous>, transform_indices = @transform_9, window_bounds = array<i64: 128, 128>}, {transform_indices = @transform_10, window_bounds = array<i64: 16, 128>}]} {
    %c0 = arith.constant 0 : index
    %c0_0 = arith.constant 0 : index
    %0 = vector.load %arg2[%c0, %c0_0] : memref<16x256xbf16, #tpu.memory_space<vmem>>, vector<16x256xbf16>
    %c0_1 = arith.constant 0 : index
    %c0_2 = arith.constant 0 : index
    %1 = vector.load %arg3[%c0_1, %c0_2] : memref<256x1024xbf16, #tpu.memory_space<vmem>>, vector<256x1024xbf16>
    %cst = arith.constant dense<0.000000e+00> : vector<16x1024xf32>
    %2 = tpu.matmul %0, %1, %cst {dimension_numbers = #tpu.dot_dimension_numbers<[1], [0], [0], [1], [0, 0, 1, 1], [], []>} : vector<16x256xbf16>, vector<256x1024xbf16>, vector<16x1024xf32> -> vector<16x1024xf32>
    %3 = arith.truncf %2 : vector<16x1024xf32> to vector<16x1024xbf16>
    %c0_3 = arith.constant 0 : index
    %c0_4 = arith.constant 0 : index
    %4 = vector.load %arg4[%c0_3, %c0_4] : memref<1024x512xbf16, #tpu.memory_space<vmem>>, vector<1024x512xbf16>
    %cst_5 = arith.constant dense<0.000000e+00> : vector<16x512xf32>
    %5 = tpu.matmul %3, %4, %cst_5 {dimension_numbers = #tpu.dot_dimension_numbers<[1], [0], [0], [1], [0, 0, 1, 1], [], []>} : vector<16x1024xbf16>, vector<1024x512xbf16>, vector<16x512xf32> -> vector<16x512xf32>
    %c0_6 = arith.constant 0 : index
    %c0_7 = arith.constant 0 : index
    %6 = vector.load %arg10[%c0_6, %c0_7] : memref<16x1024xf32, #tpu.memory_space<vmem>>, vector<1x512xf32>
    %7 = vector.broadcast %6 : vector<1x512xf32> to vector<16x512xf32>
    %8 = arith.mulf %5, %7 : vector<16x512xf32>
    %c8 = arith.constant 8 : index
    %c0_8 = arith.constant 0 : index
    %9 = vector.load %arg10[%c8, %c0_8] : memref<16x1024xf32, #tpu.memory_space<vmem>>, vector<1x512xf32>
    %10 = vector.broadcast %9 : vector<1x512xf32> to vector<16x512xf32>
    %11 = arith.addf %8, %10 : vector<16x512xf32>
    %c0_9 = arith.constant 0 : index
    %12 = memref.load %arg1[%c0_9] : memref<6xf32, #tpu.memory_space<smem>>
    %cst_10 = arith.constant 0.000000e+00 : f32
    %13 = vector.broadcast %cst_10 : f32 to vector<16x512xf32>
    %14 = arith.cmpf ogt, %11, %13 : vector<16x512xf32>
    %15 = vector.broadcast %12 : f32 to vector<16x512xf32>
    %16 = arith.mulf %15, %11 : vector<16x512xf32>
    %17 = arith.select %14, %11, %16 : vector<16x512xi1>, vector<16x512xf32>
    %18 = arith.truncf %17 : vector<16x512xf32> to vector<16x512xbf16>
    %c0_11 = arith.constant 0 : index
    %c0_12 = arith.constant 0 : index
    %19 = vector.load %arg5[%c0_11, %c0_12] : memref<512x256xbf16, #tpu.memory_space<vmem>>, vector<512x256xbf16>
    %cst_13 = arith.constant dense<0.000000e+00> : vector<16x256xf32>
    %20 = tpu.matmul %18, %19, %cst_13 {dimension_numbers = #tpu.dot_dimension_numbers<[1], [0], [0], [1], [0, 0, 1, 1], [], []>} : vector<16x512xbf16>, vector<512x256xbf16>, vector<16x256xf32> -> vector<16x256xf32>
    %c1 = arith.constant 1 : index
    %c0_14 = arith.constant 0 : index
    %21 = vector.load %arg10[%c1, %c0_14] : memref<16x1024xf32, #tpu.memory_space<vmem>>, vector<1x256xf32>
    %22 = vector.broadcast %21 : vector<1x256xf32> to vector<16x256xf32>
    %23 = arith.mulf %20, %22 : vector<16x256xf32>
    %c9 = arith.constant 9 : index
    %c0_15 = arith.constant 0 : index
    %24 = vector.load %arg10[%c9, %c0_15] : memref<16x1024xf32, #tpu.memory_space<vmem>>, vector<1x256xf32>
    %25 = vector.broadcast %24 : vector<1x256xf32> to vector<16x256xf32>
    %26 = arith.addf %23, %25 : vector<16x256xf32>
    %c1_16 = arith.constant 1 : index
    %27 = memref.load %arg1[%c1_16] : memref<6xf32, #tpu.memory_space<smem>>
    %cst_17 = arith.constant 0.000000e+00 : f32
    %28 = vector.broadcast %cst_17 : f32 to vector<16x256xf32>
    %29 = arith.cmpf ogt, %26, %28 : vector<16x256xf32>
    %30 = vector.broadcast %27 : f32 to vector<16x256xf32>
    %31 = arith.mulf %30, %26 : vector<16x256xf32>
    %32 = arith.select %29, %26, %31 : vector<16x256xi1>, vector<16x256xf32>
    %33 = arith.truncf %32 : vector<16x256xf32> to vector<16x256xbf16>
    %c0_18 = arith.constant 0 : index
    %c0_19 = arith.constant 0 : index
    %34 = vector.load %arg6[%c0_18, %c0_19] : memref<256x128xbf16, #tpu.memory_space<vmem>>, vector<256x128xbf16>
    %cst_20 = arith.constant dense<0.000000e+00> : vector<16x128xf32>
    %35 = tpu.matmul %33, %34, %cst_20 {dimension_numbers = #tpu.dot_dimension_numbers<[1], [0], [0], [1], [0, 0, 1, 1], [], []>} : vector<16x256xbf16>, vector<256x128xbf16>, vector<16x128xf32> -> vector<16x128xf32>
    %c2 = arith.constant 2 : index
    %c0_21 = arith.constant 0 : index
    %36 = vector.load %arg10[%c2, %c0_21] : memref<16x1024xf32, #tpu.memory_space<vmem>>, vector<1x128xf32>
    %37 = vector.broadcast %36 : vector<1x128xf32> to vector<16x128xf32>
    %38 = arith.mulf %35, %37 : vector<16x128xf32>
    %c10 = arith.constant 10 : index
    %c0_22 = arith.constant 0 : index
    %39 = vector.load %arg10[%c10, %c0_22] : memref<16x1024xf32, #tpu.memory_space<vmem>>, vector<1x128xf32>
    %40 = vector.broadcast %39 : vector<1x128xf32> to vector<16x128xf32>
    %41 = arith.addf %38, %40 : vector<16x128xf32>
    %c2_23 = arith.constant 2 : index
    %42 = memref.load %arg1[%c2_23] : memref<6xf32, #tpu.memory_space<smem>>
    %cst_24 = arith.constant 0.000000e+00 : f32
    %43 = vector.broadcast %cst_24 : f32 to vector<16x128xf32>
    %44 = arith.cmpf ogt, %41, %43 : vector<16x128xf32>
    %45 = vector.broadcast %42 : f32 to vector<16x128xf32>
    %46 = arith.mulf %45, %41 : vector<16x128xf32>
    %47 = arith.select %44, %41, %46 : vector<16x128xi1>, vector<16x128xf32>
    %48 = arith.truncf %47 : vector<16x128xf32> to vector<16x128xbf16>
    %c0_25 = arith.constant 0 : index
    %c0_26 = arith.constant 0 : index
    %49 = vector.load %arg7[%c0_25, %c0_26] : memref<128x128xbf16, #tpu.memory_space<vmem>>, vector<128x128xbf16>
    %cst_27 = arith.constant dense<0.000000e+00> : vector<16x128xf32>
    %50 = tpu.matmul %48, %49, %cst_27 {dimension_numbers = #tpu.dot_dimension_numbers<[1], [0], [0], [1], [0, 0, 1, 1], [], []>} : vector<16x128xbf16>, vector<128x128xbf16>, vector<16x128xf32> -> vector<16x128xf32>
    %c3 = arith.constant 3 : index
    %c0_28 = arith.constant 0 : index
    %51 = vector.load %arg10[%c3, %c0_28] : memref<16x1024xf32, #tpu.memory_space<vmem>>, vector<1x128xf32>
    %52 = vector.broadcast %51 : vector<1x128xf32> to vector<16x128xf32>
    %53 = arith.mulf %50, %52 : vector<16x128xf32>
    %c11 = arith.constant 11 : index
    %c0_29 = arith.constant 0 : index
    %54 = vector.load %arg10[%c11, %c0_29] : memref<16x1024xf32, #tpu.memory_space<vmem>>, vector<1x128xf32>
    %55 = vector.broadcast %54 : vector<1x128xf32> to vector<16x128xf32>
    %56 = arith.addf %53, %55 : vector<16x128xf32>
    %c3_30 = arith.constant 3 : index
    %57 = memref.load %arg1[%c3_30] : memref<6xf32, #tpu.memory_space<smem>>
    %cst_31 = arith.constant 0.000000e+00 : f32
    %58 = vector.broadcast %cst_31 : f32 to vector<16x128xf32>
    %59 = arith.cmpf ogt, %56, %58 : vector<16x128xf32>
    %60 = vector.broadcast %57 : f32 to vector<16x128xf32>
    %61 = arith.mulf %60, %56 : vector<16x128xf32>
    %62 = arith.select %59, %56, %61 : vector<16x128xi1>, vector<16x128xf32>
    %63 = arith.truncf %62 : vector<16x128xf32> to vector<16x128xbf16>
    %c0_32 = arith.constant 0 : index
    %c0_33 = arith.constant 0 : index
    %64 = vector.load %arg8[%c0_32, %c0_33] : memref<128x128xbf16, #tpu.memory_space<vmem>>, vector<128x128xbf16>
    %cst_34 = arith.constant dense<0.000000e+00> : vector<16x128xf32>
    %65 = tpu.matmul %63, %64, %cst_34 {dimension_numbers = #tpu.dot_dimension_numbers<[1], [0], [0], [1], [0, 0, 1, 1], [], []>} : vector<16x128xbf16>, vector<128x128xbf16>, vector<16x128xf32> -> vector<16x128xf32>
    %c4 = arith.constant 4 : index
    %c0_35 = arith.constant 0 : index
    %66 = vector.load %arg10[%c4, %c0_35] : memref<16x1024xf32, #tpu.memory_space<vmem>>, vector<1x128xf32>
    %67 = vector.broadcast %66 : vector<1x128xf32> to vector<16x128xf32>
    %68 = arith.mulf %65, %67 : vector<16x128xf32>
    %c12 = arith.constant 12 : index
    %c0_36 = arith.constant 0 : index
    %69 = vector.load %arg10[%c12, %c0_36] : memref<16x1024xf32, #tpu.memory_space<vmem>>, vector<1x128xf32>
    %70 = vector.broadcast %69 : vector<1x128xf32> to vector<16x128xf32>
    %71 = arith.addf %68, %70 : vector<16x128xf32>
    %c4_37 = arith.constant 4 : index
    %72 = memref.load %arg1[%c4_37] : memref<6xf32, #tpu.memory_space<smem>>
    %cst_38 = arith.constant 0.000000e+00 : f32
    %73 = vector.broadcast %cst_38 : f32 to vector<16x128xf32>
    %74 = arith.cmpf ogt, %71, %73 : vector<16x128xf32>
    %75 = vector.broadcast %72 : f32 to vector<16x128xf32>
    %76 = arith.mulf %75, %71 : vector<16x128xf32>
    %77 = arith.select %74, %71, %76 : vector<16x128xi1>, vector<16x128xf32>
    %78 = arith.truncf %77 : vector<16x128xf32> to vector<16x128xbf16>
    %c0_39 = arith.constant 0 : index
    %c0_40 = arith.constant 0 : index
    %79 = vector.load %arg9[%c0_39, %c0_40] : memref<128x128xbf16, #tpu.memory_space<vmem>>, vector<128x128xbf16>
    %cst_41 = arith.constant dense<0.000000e+00> : vector<16x128xf32>
    %80 = tpu.matmul %78, %79, %cst_41 {dimension_numbers = #tpu.dot_dimension_numbers<[1], [0], [0], [1], [0, 0, 1, 1], [], []>} : vector<16x128xbf16>, vector<128x128xbf16>, vector<16x128xf32> -> vector<16x128xf32>
    %c5 = arith.constant 5 : index
    %c0_42 = arith.constant 0 : index
    %81 = vector.load %arg10[%c5, %c0_42] : memref<16x1024xf32, #tpu.memory_space<vmem>>, vector<1x128xf32>
    %82 = vector.broadcast %81 : vector<1x128xf32> to vector<16x128xf32>
    %83 = arith.mulf %80, %82 : vector<16x128xf32>
    %c13 = arith.constant 13 : index
    %c0_43 = arith.constant 0 : index
    %84 = vector.load %arg10[%c13, %c0_43] : memref<16x1024xf32, #tpu.memory_space<vmem>>, vector<1x128xf32>
    %85 = vector.broadcast %84 : vector<1x128xf32> to vector<16x128xf32>
    %86 = arith.addf %83, %85 : vector<16x128xf32>
    %c5_44 = arith.constant 5 : index
    %87 = memref.load %arg1[%c5_44] : memref<6xf32, #tpu.memory_space<smem>>
    %cst_45 = arith.constant 0.000000e+00 : f32
    %88 = vector.broadcast %cst_45 : f32 to vector<16x128xf32>
    %89 = arith.cmpf ogt, %86, %88 : vector<16x128xf32>
    %90 = vector.broadcast %87 : f32 to vector<16x128xf32>
    %91 = arith.mulf %90, %86 : vector<16x128xf32>
    %92 = arith.select %89, %86, %91 : vector<16x128xi1>, vector<16x128xf32>
    %93 = arith.truncf %92 : vector<16x128xf32> to vector<16x128xbf16>
    %c0_46 = arith.constant 0 : index
    %c0_47 = arith.constant 0 : index
    %94 = vector.load %arg11[%c0_46, %c0_47] : memref<128x128xbf16, #tpu.memory_space<vmem>>, vector<128x128xbf16>
    %cst_48 = arith.constant dense<0.000000e+00> : vector<16x128xf32>
    %95 = tpu.matmul %93, %94, %cst_48 {dimension_numbers = #tpu.dot_dimension_numbers<[1], [0], [0], [1], [0, 0, 1, 1], [], []>} : vector<16x128xbf16>, vector<128x128xbf16>, vector<16x128xf32> -> vector<16x128xf32>
    %c0_49 = arith.constant 0 : index
    %c0_50 = arith.constant 0 : index
    %96 = vector.load %arg12[%c0_49, %c0_50] : memref<16x128xf32, #tpu.memory_space<vmem>>, vector<16x128xf32>
    tpu.vector_store %arg12[%c0_49, %c0_50], %95 {strides = array<i32>} : memref<16x128xf32, #tpu.memory_space<vmem>>, vector<16x128xf32>,
    return
  }
  func.func @transform_0(%arg0: i32, %arg1: memref<6xf32, #tpu.memory_space<smem>>) -> (i32, i32) {
    %c0_i32 = arith.constant 0 : i32
    %c0_i32_0 = arith.constant 0 : i32
    return %arg0, %c0_i32 : i32, i32
  }
  func.func @transform_1(%arg0: i32, %arg1: memref<6xf32, #tpu.memory_space<smem>>) -> (i32, i32) {
    %c0_i32 = arith.constant 0 : i32
    %c0_i32_0 = arith.constant 0 : i32
    %c0_i32_1 = arith.constant 0 : i32
    return %c0_i32, %c0_i32_0 : i32, i32
  }
  func.func @transform_2(%arg0: i32, %arg1: memref<6xf32, #tpu.memory_space<smem>>) -> (i32, i32) {
    %c0_i32 = arith.constant 0 : i32
    %c0_i32_0 = arith.constant 0 : i32
    %c0_i32_1 = arith.constant 0 : i32
    return %c0_i32, %c0_i32_0 : i32, i32
  }
  func.func @transform_3(%arg0: i32, %arg1: memref<6xf32, #tpu.memory_space<smem>>) -> (i32, i32) {
    %c0_i32 = arith.constant 0 : i32
    %c0_i32_0 = arith.constant 0 : i32
    %c0_i32_1 = arith.constant 0 : i32
    return %c0_i32, %c0_i32_0 : i32, i32
  }
  func.func @transform_4(%arg0: i32, %arg1: memref<6xf32, #tpu.memory_space<smem>>) -> (i32, i32) {
    %c0_i32 = arith.constant 0 : i32
    %c0_i32_0 = arith.constant 0 : i32
    %c0_i32_1 = arith.constant 0 : i32
    return %c0_i32, %c0_i32_0 : i32, i32
  }
  func.func @transform_5(%arg0: i32, %arg1: memref<6xf32, #tpu.memory_space<smem>>) -> (i32, i32) {
    %c0_i32 = arith.constant 0 : i32
    %c0_i32_0 = arith.constant 0 : i32
    %c0_i32_1 = arith.constant 0 : i32
    return %c0_i32, %c0_i32_0 : i32, i32
  }
  func.func @transform_6(%arg0: i32, %arg1: memref<6xf32, #tpu.memory_space<smem>>) -> (i32, i32) {
    %c0_i32 = arith.constant 0 : i32
    %c0_i32_0 = arith.constant 0 : i32
    %c0_i32_1 = arith.constant 0 : i32
    return %c0_i32, %c0_i32_0 : i32, i32
  }
  func.func @transform_7(%arg0: i32, %arg1: memref<6xf32, #tpu.memory_space<smem>>) -> (i32, i32) {
    %c0_i32 = arith.constant 0 : i32
    %c0_i32_0 = arith.constant 0 : i32
    %c0_i32_1 = arith.constant 0 : i32
    return %c0_i32, %c0_i32_0 : i32, i32
  }
  func.func @transform_8(%arg0: i32, %arg1: memref<6xf32, #tpu.memory_space<smem>>) -> (i32, i32) {
    %c0_i32 = arith.constant 0 : i32
    %c0_i32_0 = arith.constant 0 : i32
    %c0_i32_1 = arith.constant 0 : i32
    return %c0_i32, %c0_i32_0 : i32, i32
  }
  func.func @transform_9(%arg0: i32, %arg1: memref<6xf32, #tpu.memory_space<smem>>) -> (i32, i32) {
    %c0_i32 = arith.constant 0 : i32
    %c0_i32_0 = arith.constant 0 : i32
    %c0_i32_1 = arith.constant 0 : i32
    return %c0_i32, %c0_i32_0 : i32, i32
  }
  func.func @transform_10(%arg0: i32, %arg1: memref<6xf32, #tpu.memory_space<smem>>) -> (i32, i32) {
    %c0_i32 = arith.constant 0 : i32
    %c0_i32_0 = arith.constant 0 : i32
    return %arg0, %c0_i32 : i32, i32
  }
}

</mosaic_0001>

<llo_original>
// kernel: tpu_custom_call.1
$region0: #{tpu_custom_call.1}
  #allocation0 [shape = 'u32[]', space=smem, size = 0x4, offset = 0x4, fixed_abs, tag = 'smem constant byte address 0x4 - core index']
  #allocation1 [shape = 'u32[144,128]{1,0:T(1,128)}', space=vmem, size = 0x12000, scoped, tag = 'internal scratch']
  #allocation2 [shape = 's32[1]{0}', space=sflag, size = 0x4, scoped, tag = 'scoped memory for tpu_custom_call.1']
  #allocation3 [shape = 'u8[512]{0}', space=smem, size = 0x200, scoped, tag = 'prefetched SMEM operand 0']
  %s0 = inlined_call_operand.hbm [shape: f32[6], index: 0, kind: input, shape index: {}]
  %s1 = inlined_call_operand.hbm [shape: bf16[16,256], index: 1, kind: input, shape index: {}]
  %s2 = inlined_call_operand.hbm [shape: bf16[256,1024], index: 2, kind: input, shape index: {}]
  %s3 = inlined_call_operand.hbm [shape: bf16[1024,512], index: 3, kind: input, shape index: {}]
  %s4 = inlined_call_operand.hbm [shape: bf16[512,256], index: 4, kind: input, shape index: {}]
  %s5 = inlined_call_operand.hbm [shape: bf16[256,128], index: 5, kind: input, shape index: {}]
  %s6 = inlined_call_operand.hbm [shape: bf16[128,128], index: 6, kind: input, shape index: {}]
  %s7 = inlined_call_operand.hbm [shape: bf16[128,128], index: 7, kind: input, shape index: {}]
  %s8 = inlined_call_operand.hbm [shape: bf16[128,128], index: 8, kind: input, shape index: {}]
  %s9 = inlined_call_operand.hbm [shape: f32[16,1024], index: 9, kind: input, shape index: {}]
  %s10 = inlined_call_operand.hbm [shape: bf16[128,128], index: 10, kind: input, shape index: {}]
  %s11 = inlined_call_operand.hbm [shape: f32[16,128], index: 11, kind: output, shape index: {}]
  %s12 = sld [smem:[#allocation0]]
  $region90: #{tpu_custom_call.1} parent=0
    _
  %s14 = ssub.s32 1, %s12
  %s15 = scalar_select 0, %s14, %s12
  %17 = dma.hbm_to_smem %s0, 16, [#allocation3], [#allocation2]
  %18 = dma.done [#allocation2], 16
  %19 = sfence
  $region1: #{tpu_custom_call.1} parent=0
    #allocation4 [shape = 'u8[8192]{0}', space=vmem, size = 0x2000, scoped, tag = 'input window, operand 1, single buffered']
    #allocation5 [shape = 's32[1]{0}', space=sflag, size = 0x4, scoped, tag = 'scoped memory for tpu_custom_call.1']
    #allocation6 [shape = 's32[1]{0}', space=sflag, size = 0x4, scoped, tag = 'scoped memory for tpu_custom_call.1']
    #allocation7 [shape = 'u8[524288]{0}', space=vmem, size = 0x80000, scoped, tag = 'input window, operand 2, single buffered']
    #allocation8 [shape = 's32[1]{0}', space=sflag, size = 0x4, scoped, tag = 'scoped memory for tpu_custom_call.1']
    #allocation9 [shape = 'u8[1048576]{0}', space=vmem, size = 0x100000, scoped, tag = 'input window, operand 3, single buffered']
    #allocation10 [shape = 'u8[262144]{0}', space=vmem, size = 0x40000, scoped, tag = 'input window, operand 4, single buffered']
    #allocation11 [shape = 's32[1]{0}', space=sflag, size = 0x4, scoped, tag = 'scoped memory for tpu_custom_call.1']
    #allocation12 [shape = 'u8[65536]{0}', space=vmem, size = 0x10000, scoped, tag = 'input window, operand 5, single buffered']
    #allocation13 [shape = 'u8[32768]{0}', space=vmem, size = 0x8000, scoped, tag = 'input window, operand 6, single buffered']
    #allocation14 [shape = 's32[1]{0}', space=sflag, size = 0x4, scoped, tag = 'scoped memory for tpu_custom_call.1']
    #allocation15 [shape = 'u8[32768]{0}', space=vmem, size = 0x8000, scoped, tag = 'input window, operand 7, single buffered']
    #allocation16 [shape = 'u8[32768]{0}', space=vmem, size = 0x8000, scoped, tag = 'input window, operand 8, single buffered']
    #allocation17 [shape = 's32[1]{0}', space=sflag, size = 0x4, scoped, tag = 'scoped memory for tpu_custom_call.1']
    #allocation18 [shape = 'u8[65536]{0}', space=vmem, size = 0x10000, scoped, tag = 'input window, operand 9, single buffered']
    #allocation19 [shape = 'u8[32768]{0}', space=vmem, size = 0x8000, scoped, tag = 'input window, operand 10, single buffered']
    #allocation20 [shape = 's32[1]{0}', space=sflag, size = 0x4, scoped, tag = 'scoped memory for tpu_custom_call.1']
    #allocation21 [shape = 'u8[8192]{0}', space=vmem, size = 0x2000, scoped, tag = 'output window, operand 0, single buffered']
    %20 = vsyncpa [#allocation5], 0
    %21 = vsyncpa [#allocation8], 0
    %22 = vsyncpa [#allocation11], 0
    %23 = vsyncpa [#allocation14], 0
    %24 = vsyncpa [#allocation17], 0
    %25 = vsyncpa [#allocation20], 0
    %26 = vsyncpa [#allocation6], 0
    // Predicated region
    $region2: #{tpu_custom_call.1} parent=1 // pred_check
      _
    $region3: #{tpu_custom_call.1} parent=1 // pred_check_branch
      %28 = sbr.rel (0) target = $region5
    $region4: #{tpu_custom_call.1} parent=1 // pred_region
      %s30 = ssub.s32 256, 256
      %31 = vsyncadd [#allocation5], %s30
      %s32 = sshll.u32 [#allocation4], 4
      %s33 = int_to_ptr.vmem [resolvable:$true] %s32
      %38 = dma.hbm_to_vmem [thread:$0]  %s1, 256, %s33, [#allocation5], 128, 128, 8
    $region5: #{tpu_custom_call.1} parent=1 // pred_fallthru
      _
    // Predicated region
    $region6: #{tpu_custom_call.1} parent=1 // pred_check
      _
    $region7: #{tpu_custom_call.1} parent=1 // pred_check_branch
      %40 = sbr.rel (0) target = $region9
    $region8: #{tpu_custom_call.1} parent=1 // pred_region
      %s42 = ssub.s32 16384, 16384
      %43 = vsyncadd [#allocation8], %s42
      %s44 = sshll.u32 [#allocation7], 4
      %s45 = int_to_ptr.vmem [resolvable:$true] %s44
      %50 = dma.hbm_to_vmem [thread:$0]  %s2, 16384, %s45, [#allocation8], 512, 512, 32
    $region9: #{tpu_custom_call.1} parent=1 // pred_fallthru
      _
    // Predicated region
    $region10: #{tpu_custom_call.1} parent=1 // pred_check
      _
    $region11: #{tpu_custom_call.1} parent=1 // pred_check_branch
      %52 = sbr.rel (0) target = $region13
    $region12: #{tpu_custom_call.1} parent=1 // pred_region
      %s54 = ssub.s32 32768, 32768
      %55 = vsyncadd [#allocation8], %s54
      %s56 = sshll.u32 [#allocation9], 4
      %s57 = int_to_ptr.vmem [resolvable:$true] %s56
      %62 = dma.hbm_to_vmem [thread:$0]  %s3, 32768, %s57, [#allocation8], 256, 256, 16
    $region13: #{tpu_custom_call.1} parent=1 // pred_fallthru
      _
    // Predicated region
    $region14: #{tpu_custom_call.1} parent=1 // pred_check
      _
    $region15: #{tpu_custom_call.1} parent=1 // pred_check_branch
      %64 = sbr.rel (0) target = $region17
    $region16: #{tpu_custom_call.1} parent=1 // pred_region
      %s66 = ssub.s32 8192, 8192
      %67 = vsyncadd [#allocation11], %s66
      %s68 = sshll.u32 [#allocation10], 4
      %s69 = int_to_ptr.vmem [resolvable:$true] %s68
      %74 = dma.hbm_to_vmem [thread:$0]  %s4, 8192, %s69, [#allocation11], 128, 128, 8
    $region17: #{tpu_custom_call.1} parent=1 // pred_fallthru
      _
    // Predicated region
    $region18: #{tpu_custom_call.1} parent=1 // pred_check
      _
    $region19: #{tpu_custom_call.1} parent=1 // pred_check_branch
      %76 = sbr.rel (0) target = $region21
    $region20: #{tpu_custom_call.1} parent=1 // pred_region
      %s78 = ssub.s32 2048, 2048
      %79 = vsyncadd [#allocation11], %s78
      %s80 = sshll.u32 [#allocation12], 4
      %s81 = int_to_ptr.vmem [resolvable:$true] %s80
      %86 = dma.hbm_to_vmem [thread:$0]  %s5, 2048, %s81, [#allocation11], 64, 64, 4
    $region21: #{tpu_custom_call.1} parent=1 // pred_fallthru
      _
    // Predicated region
    $region22: #{tpu_custom_call.1} parent=1 // pred_check
      _
    $region23: #{tpu_custom_call.1} parent=1 // pred_check_branch
      %88 = sbr.rel (0) target = $region25
    $region24: #{tpu_custom_call.1} parent=1 // pred_region
      %s90 = ssub.s32 1024, 1024
      %91 = vsyncadd [#allocation14], %s90
      %s92 = sshll.u32 [#allocation13], 4
      %s93 = int_to_ptr.vmem [resolvable:$true] %s92
      %98 = dma.hbm_to_vmem [thread:$0]  %s6, 1024, %s93, [#allocation14], 64, 64, 4
    $region25: #{tpu_custom_call.1} parent=1 // pred_fallthru
      _
    // Predicated region
    $region26: #{tpu_custom_call.1} parent=1 // pred_check
      _
    $region27: #{tpu_custom_call.1} parent=1 // pred_check_branch
      %100 = sbr.rel (0) target = $region29
    $region28: #{tpu_custom_call.1} parent=1 // pred_region
      %s102 = ssub.s32 1024, 1024
      %103 = vsyncadd [#allocation14], %s102
      %s104 = sshll.u32 [#allocation15], 4
      %s105 = int_to_ptr.vmem [resolvable:$true] %s104
      %110 = dma.hbm_to_vmem [thread:$0]  %s7, 1024, %s105, [#allocation14], 64, 64, 4
    $region29: #{tpu_custom_call.1} parent=1 // pred_fallthru
      _
    // Predicated region
    $region30: #{tpu_custom_call.1} parent=1 // pred_check
      _
    $region31: #{tpu_custom_call.1} parent=1 // pred_check_branch
      %112 = sbr.rel (0) target = $region33
    $region32: #{tpu_custom_call.1} parent=1 // pred_region
      %s114 = ssub.s32 1024, 1024
      %115 = vsyncadd [#allocation17], %s114
      %s116 = sshll.u32 [#allocation16], 4
      %s117 = int_to_ptr.vmem [resolvable:$true] %s116
      %122 = dma.hbm_to_vmem [thread:$0]  %s8, 1024, %s117, [#allocation17], 64, 64, 4
    $region33: #{tpu_custom_call.1} parent=1 // pred_fallthru
      _
    // Predicated region
    $region34: #{tpu_custom_call.1} parent=1 // pred_check
      _
    $region35: #{tpu_custom_call.1} parent=1 // pred_check_branch
      %124 = sbr.rel (0) target = $region37
    $region36: #{tpu_custom_call.1} parent=1 // pred_region
      %s126 = ssub.s32 2048, 2048
      %127 = vsyncadd [#allocation17], %s126
      %s128 = sshll.u32 [#allocation18], 4
      %s129 = int_to_ptr.vmem [resolvable:$true] %s128
      %134 = dma.hbm_to_vmem [thread:$0]  %s9, 2048, %s129, [#allocation17], 1024, 1024, 64
    $region37: #{tpu_custom_call.1} parent=1 // pred_fallthru
      _
    // Predicated region
    $region38: #{tpu_custom_call.1} parent=1 // pred_check
      _
    $region39: #{tpu_custom_call.1} parent=1 // pred_check_branch
      %136 = sbr.rel (0) target = $region41
    $region40: #{tpu_custom_call.1} parent=1 // pred_region
      %s138 = ssub.s32 1024, 1024
      %139 = vsyncadd [#allocation20], %s138
      %s140 = sshll.u32 [#allocation19], 4
      %s141 = int_to_ptr.vmem [resolvable:$true] %s140
      %146 = dma.hbm_to_vmem [thread:$0]  %s10, 1024, %s141, [#allocation20], 64, 64, 4
    $region41: #{tpu_custom_call.1} parent=1 // pred_fallthru
      _
    // Predicated region
    $region42: #{tpu_custom_call.1} parent=1 // pred_check
      _
    $region43: #{tpu_custom_call.1} parent=1 // pred_check_branch
      %148 = sbr.rel (0) target = $region45
    $region44: #{tpu_custom_call.1} parent=1 // pred_region
      %149 = dma.done [#allocation5], 256
    $region45: #{tpu_custom_call.1} parent=1 // pred_fallthru
      _
    // Predicated region
    $region46: #{tpu_custom_call.1} parent=1 // pred_check
      _
    $region47: #{tpu_custom_call.1} parent=1 // pred_check_branch
      %151 = sbr.rel (0) target = $region49
    $region48: #{tpu_custom_call.1} parent=1 // pred_region
      %152 = dma.done [#allocation8], 16384
    $region49: #{tpu_custom_call.1} parent=1 // pred_fallthru
      _
    // Predicated region
    $region50: #{tpu_custom_call.1} parent=1 // pred_check
      _
    $region51: #{tpu_custom_call.1} parent=1 // pred_check_branch
      %154 = sbr.rel (0) target = $region53
    $region52: #{tpu_custom_call.1} parent=1 // pred_region
      %155 = dma.done [#allocation8], 32768
    $region53: #{tpu_custom_call.1} parent=1 // pred_fallthru
      _
    // Predicated region
    $region54: #{tpu_custom_call.1} parent=1 // pred_check
      _
    $region55: #{tpu_custom_call.1} parent=1 // pred_check_branch
      %157 = sbr.rel (0) target = $region57
    $region56: #{tpu_custom_call.1} parent=1 // pred_region
      %158 = dma.done [#allocation11], 8192
    $region57: #{tpu_custom_call.1} parent=1 // pred_fallthru
      _
    // Predicated region
    $region58: #{tpu_custom_call.1} parent=1 // pred_check
      _
    $region59: #{tpu_custom_call.1} parent=1 // pred_check_branch
      %160 = sbr.rel (0) target = $region61
    $region60: #{tpu_custom_call.1} parent=1 // pred_region
      %161 = dma.done [#allocation11], 2048
    $region61: #{tpu_custom_call.1} parent=1 // pred_fallthru
      _
    // Predicated region
    $region62: #{tpu_custom_call.1} parent=1 // pred_check
      _
    $region63: #{tpu_custom_call.1} parent=1 // pred_check_branch
      %163 = sbr.rel (0) target = $region65
    $region64: #{tpu_custom_call.1} parent=1 // pred_region
      %164 = dma.done [#allocation14], 1024
    $region65: #{tpu_custom_call.1} parent=1 // pred_fallthru
      _
    // Predicated region
    $region66: #{tpu_custom_call.1} parent=1 // pred_check
      _
    $region67: #{tpu_custom_call.1} parent=1 // pred_check_branch
      %166 = sbr.rel (0) target = $region69
    $region68: #{tpu_custom_call.1} parent=1 // pred_region
      %167 = dma.done [#allocation14], 1024
    $region69: #{tpu_custom_call.1} parent=1 // pred_fallthru
      _
    // Predicated region
    $region70: #{tpu_custom_call.1} parent=1 // pred_check
      _
    $region71: #{tpu_custom_call.1} parent=1 // pred_check_branch
      %169 = sbr.rel (0) target = $region73
    $region72: #{tpu_custom_call.1} parent=1 // pred_region
      %170 = dma.done [#allocation17], 1024
    $region73: #{tpu_custom_call.1} parent=1 // pred_fallthru
      _
    // Predicated region
    $region74: #{tpu_custom_call.1} parent=1 // pred_check
      _
    $region75: #{tpu_custom_call.1} parent=1 // pred_check_branch
      %172 = sbr.rel (0) target = $region77
    $region76: #{tpu_custom_call.1} parent=1 // pred_region
      %173 = dma.done [#allocation17], 2048
    $region77: #{tpu_custom_call.1} parent=1 // pred_fallthru
      _
    // Predicated region
    $region78: #{tpu_custom_call.1} parent=1 // pred_check
      _
    $region79: #{tpu_custom_call.1} parent=1 // pred_check_branch
      %175 = sbr.rel (0) target = $region81
    $region80: #{tpu_custom_call.1} parent=1 // pred_region
      %176 = dma.done [#allocation20], 1024
    $region81: #{tpu_custom_call.1} parent=1 // pred_fallthru
      _
    %v178 = vld [vmem:[#allocation4] sm:$0xff]
    %v179 = vld [vmem:[#allocation4 + $0x8] sm:$0xff]
    %v180 = vld [vmem:[#allocation7] sm:$0xff]
    %v181 = vld [vmem:[#allocation7 + $0x8] sm:$0xff]
    %v182 = vld [vmem:[#allocation7 + $0x10] sm:$0xff]
    %v183 = vld [vmem:[#allocation7 + $0x18] sm:$0xff]
    %v184 = vld [vmem:[#allocation7 + $0x20] sm:$0xff]
    %v185 = vld [vmem:[#allocation7 + $0x28] sm:$0xff]
    %v186 = vld [vmem:[#allocation7 + $0x30] sm:$0xff]
    %v187 = vld [vmem:[#allocation7 + $0x38] sm:$0xff]
    %v188 = vld [vmem:[#allocation7 + $0x40] sm:$0xff]
    %v189 = vld [vmem:[#allocation7 + $0x48] sm:$0xff]
    %v190 = vld [vmem:[#allocation7 + $0x50] sm:$0xff]
    %v191 = vld [vmem:[#allocation7 + $0x58] sm:$0xff]
    %v192 = vld [vmem:[#allocation7 + $0x60] sm:$0xff]
    %v193 = vld [vmem:[#allocation7 + $0x68] sm:$0xff]
    %v194 = vld [vmem:[#allocation7 + $0x70] sm:$0xff]
    %v195 = vld [vmem:[#allocation7 + $0x78] sm:$0xff]
    %v196 = vld [vmem:[#allocation7 + $0x80] sm:$0xff]
    %v197 = vld [vmem:[#allocation7 + $0x88] sm:$0xff]
    %v198 = vld [vmem:[#allocation7 + $0x90] sm:$0xff]
    %v199 = vld [vmem:[#allocation7 + $0x98] sm:$0xff]
    %v200 = vld [vmem:[#allocation7 + $0xa0] sm:$0xff]
    %v201 = vld [vmem:[#allocation7 + $0xa8] sm:$0xff]
    %v202 = vld [vmem:[#allocation7 + $0xb0] sm:$0xff]
    %v203 = vld [vmem:[#allocation7 + $0xb8] sm:$0xff]
    %v204 = vld [vmem:[#allocation7 + $0xc0] sm:$0xff]
    %v205 = vld [vmem:[#allocation7 + $0xc8] sm:$0xff]
    %v206 = vld [vmem:[#allocation7 + $0xd0] sm:$0xff]
    %v207 = vld [vmem:[#allocation7 + $0xd8] sm:$0xff]
    %v208 = vld [vmem:[#allocation7 + $0xe0] sm:$0xff]
    %v209 = vld [vmem:[#allocation7 + $0xe8] sm:$0xff]
    %v210 = vld [vmem:[#allocation7 + $0xf0] sm:$0xff]
    %v211 = vld [vmem:[#allocation7 + $0xf8] sm:$0xff]
    %v212 = vld [vmem:[#allocation7 + $0x100] sm:$0xff]
    %v213 = vld [vmem:[#allocation7 + $0x108] sm:$0xff]
    %v214 = vld [vmem:[#allocation7 + $0x110] sm:$0xff]
    %v215 = vld [vmem:[#allocation7 + $0x118] sm:$0xff]
    %v216 = vld [vmem:[#allocation7 + $0x120] sm:$0xff]
    %v217 = vld [vmem:[#allocation7 + $0x128] sm:$0xff]
    %v218 = vld [vmem:[#allocation7 + $0x130] sm:$0xff]
    %v219 = vld [vmem:[#allocation7 + $0x138] sm:$0xff]
    %v220 = vld [vmem:[#allocation7 + $0x140] sm:$0xff]
    %v221 = vld [vmem:[#allocation7 + $0x148] sm:$0xff]
    %v222 = vld [vmem:[#allocation7 + $0x150] sm:$0xff]
    %v223 = vld [vmem:[#allocation7 + $0x158] sm:$0xff]
    %v224 = vld [vmem:[#allocation7 + $0x160] sm:$0xff]
    %v225 = vld [vmem:[#allocation7 + $0x168] sm:$0xff]
    %v226 = vld [vmem:[#allocation7 + $0x170] sm:$0xff]
    %v227 = vld [vmem:[#allocation7 + $0x178] sm:$0xff]
    %v228 = vld [vmem:[#allocation7 + $0x180] sm:$0xff]
    %v229 = vld [vmem:[#allocation7 + $0x188] sm:$0xff]
    %v230 = vld [vmem:[#allocation7 + $0x190] sm:$0xff]
    %v231 = vld [vmem:[#allocation7 + $0x198] sm:$0xff]
    %v232 = vld [vmem:[#allocation7 + $0x1a0] sm:$0xff]
    %v233 = vld [vmem:[#allocation7 + $0x1a8] sm:$0xff]
    %v234 = vld [vmem:[#allocation7 + $0x1b0] sm:$0xff]
    %v235 = vld [vmem:[#allocation7 + $0x1b8] sm:$0xff]
    %v236 = vld [vmem:[#allocation7 + $0x1c0] sm:$0xff]
    %v237 = vld [vmem:[#allocation7 + $0x1c8] sm:$0xff]
    %v238 = vld [vmem:[#allocation7 + $0x1d0] sm:$0xff]
    %v239 = vld [vmem:[#allocation7 + $0x1d8] sm:$0xff]
    %v240 = vld [vmem:[#allocation7 + $0x1e0] sm:$0xff]
    %v241 = vld [vmem:[#allocation7 + $0x1e8] sm:$0xff]
    %v242 = vld [vmem:[#allocation7 + $0x1f0] sm:$0xff]
    %v243 = vld [vmem:[#allocation7 + $0x1f8] sm:$0xff]
    %v244 = vld [vmem:[#allocation7 + $0x200] sm:$0xff]
    %v245 = vld [vmem:[#allocation7 + $0x208] sm:$0xff]
    %v246 = vld [vmem:[#allocation7 + $0x210] sm:$0xff]
    %v247 = vld [vmem:[#allocation7 + $0x218] sm:$0xff]
    %v248 = vld [vmem:[#allocation7 + $0x220] sm:$0xff]
    %v249 = vld [vmem:[#allocation7 + $0x228] sm:$0xff]
    %v250 = vld [vmem:[#allocation7 + $0x230] sm:$0xff]
    %v251 = vld [vmem:[#allocation7 + $0x238] sm:$0xff]
    %v252 = vld [vmem:[#allocation7 + $0x240] sm:$0xff]
    %v253 = vld [vmem:[#allocation7 + $0x248] sm:$0xff]
    %v254 = vld [vmem:[#allocation7 + $0x250] sm:$0xff]
    %v255 = vld [vmem:[#allocation7 + $0x258] sm:$0xff]
    %v256 = vld [vmem:[#allocation7 + $0x260] sm:$0xff]
    %v257 = vld [vmem:[#allocation7 + $0x268] sm:$0xff]
    %v258 = vld [vmem:[#allocation7 + $0x270] sm:$0xff]
    %v259 = vld [vmem:[#allocation7 + $0x278] sm:$0xff]
    %v260 = vld [vmem:[#allocation7 + $0x280] sm:$0xff]
    %v261 = vld [vmem:[#allocation7 + $0x288] sm:$0xff]
    %v262 = vld [vmem:[#allocation7 + $0x290] sm:$0xff]
    %v263 = vld [vmem:[#allocation7 + $0x298] sm:$0xff]
    %v264 = vld [vmem:[#allocation7 + $0x2a0] sm:$0xff]
    %v265 = vld [vmem:[#allocation7 + $0x2a8] sm:$0xff]
    %v266 = vld [vmem:[#allocation7 + $0x2b0] sm:$0xff]
    %v267 = vld [vmem:[#allocation7 + $0x2b8] sm:$0xff]
    %v268 = vld [vmem:[#allocation7 + $0x2c0] sm:$0xff]
    %v269 = vld [vmem:[#allocation7 + $0x2c8] sm:$0xff]
    %v270 = vld [vmem:[#allocation7 + $0x2d0] sm:$0xff]
    %v271 = vld [vmem:[#allocation7 + $0x2d8] sm:$0xff]
    %v272 = vld [vmem:[#allocation7 + $0x2e0] sm:$0xff]
    %v273 = vld [vmem:[#allocation7 + $0x2e8] sm:$0xff]
    %v274 = vld [vmem:[#allocation7 + $0x2f0] sm:$0xff]
    %v275 = vld [vmem:[#allocation7 + $0x2f8] sm:$0xff]
    %v276 = vld [vmem:[#allocation7 + $0x300] sm:$0xff]
    %v277 = vld [vmem:[#allocation7 + $0x308] sm:$0xff]
    %v278 = vld [vmem:[#allocation7 + $0x310] sm:$0xff]
    %v279 = vld [vmem:[#allocation7 + $0x318] sm:$0xff]
    %v280 = vld [vmem:[#allocation7 + $0x320] sm:$0xff]
    %v281 = vld [vmem:[#allocation7 + $0x328] sm:$0xff]
    %v282 = vld [vmem:[#allocation7 + $0x330] sm:$0xff]
    %v283 = vld [vmem:[#allocation7 + $0x338] sm:$0xff]
    %v284 = vld [vmem:[#allocation7 + $0x340] sm:$0xff]
    %v285 = vld [vmem:[#allocation7 + $0x348] sm:$0xff]
    %v286 = vld [vmem:[#allocation7 + $0x350] sm:$0xff]
    %v287 = vld [vmem:[#allocation7 + $0x358] sm:$0xff]
    %v288 = vld [vmem:[#allocation7 + $0x360] sm:$0xff]
    %v289 = vld [vmem:[#allocation7 + $0x368] sm:$0xff]
    %v290 = vld [vmem:[#allocation7 + $0x370] sm:$0xff]
    %v291 = vld [vmem:[#allocation7 + $0x378] sm:$0xff]
    %v292 = vld [vmem:[#allocation7 + $0x380] sm:$0xff]
    %v293 = vld [vmem:[#allocation7 + $0x388] sm:$0xff]
    %v294 = vld [vmem:[#allocation7 + $0x390] sm:$0xff]
    %v295 = vld [vmem:[#allocation7 + $0x398] sm:$0xff]
    %v296 = vld [vmem:[#allocation7 + $0x3a0] sm:$0xff]
    %v297 = vld [vmem:[#allocation7 + $0x3a8] sm:$0xff]
    %v298 = vld [vmem:[#allocation7 + $0x3b0] sm:$0xff]
    %v299 = vld [vmem:[#allocation7 + $0x3b8] sm:$0xff]
    %v300 = vld [vmem:[#allocation7 + $0x3c0] sm:$0xff]
    %v301 = vld [vmem:[#allocation7 + $0x3c8] sm:$0xff]
    %v302 = vld [vmem:[#allocation7 + $0x3d0] sm:$0xff]
    %v303 = vld [vmem:[#allocation7 + $0x3d8] sm:$0xff]
    %v304 = vld [vmem:[#allocation7 + $0x3e0] sm:$0xff]
    %v305 = vld [vmem:[#allocation7 + $0x3e8] sm:$0xff]
    %v306 = vld [vmem:[#allocation7 + $0x3f0] sm:$0xff]
    %v307 = vld [vmem:[#allocation7 + $0x3f8] sm:$0xff]
    %v310 = vunpack.c.l.b16 %v178
    %v311 = vunpack.c.h.b16 %v178
    %v312 = vunpack.c.l.b16 %v179
    %v313 = vunpack.c.h.b16 %v179
    %v314 = vpack.c.b16 %v312, %v310
    %v315 = vpack.c.b16 %v313, %v311
    %v446 = vunpack.c.l.b16 %v180
    %v447 = vunpack.c.h.b16 %v180
    %v448 = vunpack.c.l.b16 %v181
    %v449 = vunpack.c.h.b16 %v181
    %v450 = vunpack.c.l.b16 %v182
    %v451 = vunpack.c.h.b16 %v182
    %v452 = vunpack.c.l.b16 %v183
    %v453 = vunpack.c.h.b16 %v183
    %v454 = vunpack.c.l.b16 %v184
    %v455 = vunpack.c.h.b16 %v184
    %v456 = vunpack.c.l.b16 %v185
    %v457 = vunpack.c.h.b16 %v185
    %v458 = vunpack.c.l.b16 %v186
    %v459 = vunpack.c.h.b16 %v186
    %v460 = vunpack.c.l.b16 %v187
    %v461 = vunpack.c.h.b16 %v187
    %v462 = vunpack.c.l.b16 %v188
    %v463 = vunpack.c.h.b16 %v188
    %v464 = vunpack.c.l.b16 %v189
    %v465 = vunpack.c.h.b16 %v189
    %v466 = vunpack.c.l.b16 %v190
    %v467 = vunpack.c.h.b16 %v190
    %v468 = vunpack.c.l.b16 %v191
    %v469 = vunpack.c.h.b16 %v191
    %v470 = vunpack.c.l.b16 %v192
    %v471 = vunpack.c.h.b16 %v192
    %v472 = vunpack.c.l.b16 %v193
    %v473 = vunpack.c.h.b16 %v193
    %v474 = vunpack.c.l.b16 %v194
    %v475 = vunpack.c.h.b16 %v194
    %v476 = vunpack.c.l.b16 %v195
    %v477 = vunpack.c.h.b16 %v195
    %v478 = vunpack.c.l.b16 %v196
    %v479 = vunpack.c.h.b16 %v196
    %v480 = vunpack.c.l.b16 %v197
    %v481 = vunpack.c.h.b16 %v197
    %v482 = vunpack.c.l.b16 %v198
    %v483 = vunpack.c.h.b16 %v198
    %v484 = vunpack.c.l.b16 %v199
    %v485 = vunpack.c.h.b16 %v199
    %v486 = vunpack.c.l.b16 %v200
    %v487 = vunpack.c.h.b16 %v200
    %v488 = vunpack.c.l.b16 %v201
    %v489 = vunpack.c.h.b16 %v201
    %v490 = vunpack.c.l.b16 %v202
    %v491 = vunpack.c.h.b16 %v202
    %v492 = vunpack.c.l.b16 %v203
    %v493 = vunpack.c.h.b16 %v203
    %v494 = vunpack.c.l.b16 %v204
    %v495 = vunpack.c.h.b16 %v204
    %v496 = vunpack.c.l.b16 %v205
    %v497 = vunpack.c.h.b16 %v205
    %v498 = vunpack.c.l.b16 %v206
    %v499 = vunpack.c.h.b16 %v206
    %v500 = vunpack.c.l.b16 %v207
    %v501 = vunpack.c.h.b16 %v207
    %v502 = vunpack.c.l.b16 %v208
    %v503 = vunpack.c.h.b16 %v208
    %v504 = vunpack.c.l.b16 %v209
    %v505 = vunpack.c.h.b16 %v209
    %v506 = vunpack.c.l.b16 %v210
    %v507 = vunpack.c.h.b16 %v210
    %v508 = vunpack.c.l.b16 %v211
    %v509 = vunpack.c.h.b16 %v211
    %v510 = vunpack.c.l.b16 %v212
    %v511 = vunpack.c.h.b16 %v212
    %v512 = vunpack.c.l.b16 %v213
    %v513 = vunpack.c.h.b16 %v213
    %v514 = vunpack.c.l.b16 %v214
    %v515 = vunpack.c.h.b16 %v214
    %v516 = vunpack.c.l.b16 %v215
    %v517 = vunpack.c.h.b16 %v215
    %v518 = vunpack.c.l.b16 %v216
    %v519 = vunpack.c.h.b16 %v216
    %v520 = vunpack.c.l.b16 %v217
    %v521 = vunpack.c.h.b16 %v217
    %v522 = vunpack.c.l.b16 %v218
    %v523 = vunpack.c.h.b16 %v218
    %v524 = vunpack.c.l.b16 %v219
    %v525 = vunpack.c.h.b16 %v219
    %v526 = vunpack.c.l.b16 %v220
    %v527 = vunpack.c.h.b16 %v220
    %v528 = vunpack.c.l.b16 %v221
    %v529 = vunpack.c.h.b16 %v221
    %v530 = vunpack.c.l.b16 %v222
    %v531 = vunpack.c.h.b16 %v222
    %v532 = vunpack.c.l.b16 %v223
    %v533 = vunpack.c.h.b16 %v223
    %v534 = vunpack.c.l.b16 %v224
    %v535 = vunpack.c.h.b16 %v224
    %v536 = vunpack.c.l.b16 %v225
    %v537 = vunpack.c.h.b16 %v225
    %v538 = vunpack.c.l.b16 %v226
    %v539 = vunpack.c.h.b16 %v226
    %v540 = vunpack.c.l.b16 %v227
    %v541 = vunpack.c.h.b16 %v227
    %v542 = vunpack.c.l.b16 %v228
    %v543 = vunpack.c.h.b16 %v228
    %v544 = vunpack.c.l.b16 %v229
    %v545 = vunpack.c.h.b16 %v229
    %v546 = vunpack.c.l.b16 %v230
    %v547 = vunpack.c.h.b16 %v230
    %v548 = vunpack.c.l.b16 %v231
    %v549 = vunpack.c.h.b16 %v231
    %v550 = vunpack.c.l.b16 %v232
    %v551 = vunpack.c.h.b16 %v232
    %v552 = vunpack.c.l.b16 %v233
    %v553 = vunpack.c.h.b16 %v233
    %v554 = vunpack.c.l.b16 %v234
    %v555 = vunpack.c.h.b16 %v234
    %v556 = vunpack.c.l.b16 %v235
    %v557 = vunpack.c.h.b16 %v235
    %v558 = vunpack.c.l.b16 %v236
    %v559 = vunpack.c.h.b16 %v236
    %v560 = vunpack.c.l.b16 %v237
    %v561 = vunpack.c.h.b16 %v237
    %v562 = vunpack.c.l.b16 %v238
    %v563 = vunpack.c.h.b16 %v238
    %v564 = vunpack.c.l.b16 %v239
    %v565 = vunpack.c.h.b16 %v239
    %v566 = vunpack.c.l.b16 %v240
    %v567 = vunpack.c.h.b16 %v240
    %v568 = vunpack.c.l.b16 %v241
    %v569 = vunpack.c.h.b16 %v241
    %v570 = vunpack.c.l.b16 %v242
    %v571 = vunpack.c.h.b16 %v242
    %v572 = vunpack.c.l.b16 %v243
    %v573 = vunpack.c.h.b16 %v243
    %v574 = vunpack.c.l.b16 %v244
    %v575 = vunpack.c.h.b16 %v244
    %v576 = vunpack.c.l.b16 %v245
    %v577 = vunpack.c.h.b16 %v245
    %v578 = vunpack.c.l.b16 %v246
    %v579 = vunpack.c.h.b16 %v246
    %v580 = vunpack.c.l.b16 %v247
    %v581 = vunpack.c.h.b16 %v247
    %v582 = vunpack.c.l.b16 %v248
    %v583 = vunpack.c.h.b16 %v248
    %v584 = vunpack.c.l.b16 %v249
    %v585 = vunpack.c.h.b16 %v249
    %v586 = vunpack.c.l.b16 %v250
    %v587 = vunpack.c.h.b16 %v250
    %v588 = vunpack.c.l.b16 %v251
    %v589 = vunpack.c.h.b16 %v251
    %v590 = vunpack.c.l.b16 %v252
    %v591 = vunpack.c.h.b16 %v252
    %v592 = vunpack.c.l.b16 %v253
    %v593 = vunpack.c.h.b16 %v253
    %v594 = vunpack.c.l.b16 %v254
    %v595 = vunpack.c.h.b16 %v254
    %v596 = vunpack.c.l.b16 %v255
    %v597 = vunpack.c.h.b16 %v255
    %v598 = vunpack.c.l.b16 %v256
    %v599 = vunpack.c.h.b16 %v256
    %v600 = vunpack.c.l.b16 %v257
    %v601 = vunpack.c.h.b16 %v257
    %v602 = vunpack.c.l.b16 %v258
    %v603 = vunpack.c.h.b16 %v258
    %v604 = vunpack.c.l.b16 %v259
    %v605 = vunpack.c.h.b16 %v259
    %v606 = vunpack.c.l.b16 %v260
    %v607 = vunpack.c.h.b16 %v260
    %v608 = vunpack.c.l.b16 %v261
    %v609 = vunpack.c.h.b16 %v261
    %v610 = vunpack.c.l.b16 %v262
    %v611 = vunpack.c.h.b16 %v262
    %v612 = vunpack.c.l.b16 %v263
    %v613 = vunpack.c.h.b16 %v263
    %v614 = vunpack.c.l.b16 %v264
    %v615 = vunpack.c.h.b16 %v264
    %v616 = vunpack.c.l.b16 %v265
    %v617 = vunpack.c.h.b16 %v265
    %v618 = vunpack.c.l.b16 %v266
    %v619 = vunpack.c.h.b16 %v266
    %v620 = vunpack.c.l.b16 %v267
    %v621 = vunpack.c.h.b16 %v267
    %v622 = vunpack.c.l.b16 %v268
    %v623 = vunpack.c.h.b16 %v268
    %v624 = vunpack.c.l.b16 %v269
    %v625 = vunpack.c.h.b16 %v269
    %v626 = vunpack.c.l.b16 %v270
    %v627 = vunpack.c.h.b16 %v270
    %v628 = vunpack.c.l.b16 %v271
    %v629 = vunpack.c.h.b16 %v271
    %v630 = vunpack.c.l.b16 %v272
    %v631 = vunpack.c.h.b16 %v272
    %v632 = vunpack.c.l.b16 %v273
    %v633 = vunpack.c.h.b16 %v273
    %v634 = vunpack.c.l.b16 %v274
    %v635 = vunpack.c.h.b16 %v274
    %v636 = vunpack.c.l.b16 %v275
    %v637 = vunpack.c.h.b16 %v275
    %v638 = vunpack.c.l.b16 %v276
    %v639 = vunpack.c.h.b16 %v276
    %v640 = vunpack.c.l.b16 %v277
    %v641 = vunpack.c.h.b16 %v277
    %v642 = vunpack.c.l.b16 %v278
    %v643 = vunpack.c.h.b16 %v278
    %v644 = vunpack.c.l.b16 %v279
    %v645 = vunpack.c.h.b16 %v279
    %v646 = vunpack.c.l.b16 %v280
    %v647 = vunpack.c.h.b16 %v280
    %v648 = vunpack.c.l.b16 %v281
    %v649 = vunpack.c.h.b16 %v281
    %v650 = vunpack.c.l.b16 %v282
    %v651 = vunpack.c.h.b16 %v282
    %v652 = vunpack.c.l.b16 %v283
    %v653 = vunpack.c.h.b16 %v283
    %v654 = vunpack.c.l.b16 %v284
    %v655 = vunpack.c.h.b16 %v284
    %v656 = vunpack.c.l.b16 %v285
    %v657 = vunpack.c.h.b16 %v285
    %v658 = vunpack.c.l.b16 %v286
    %v659 = vunpack.c.h.b16 %v286
    %v660 = vunpack.c.l.b16 %v287
    %v661 = vunpack.c.h.b16 %v287
    %v662 = vunpack.c.l.b16 %v288
    %v663 = vunpack.c.h.b16 %v288
    %v664 = vunpack.c.l.b16 %v289
    %v665 = vunpack.c.h.b16 %v289
    %v666 = vunpack.c.l.b16 %v290
    %v667 = vunpack.c.h.b16 %v290
    %v668 = vunpack.c.l.b16 %v291
    %v669 = vunpack.c.h.b16 %v291
    %v670 = vunpack.c.l.b16 %v292
    %v671 = vunpack.c.h.b16 %v292
    %v672 = vunpack.c.l.b16 %v293
    %v673 = vunpack.c.h.b16 %v293
    %v674 = vunpack.c.l.b16 %v294
    %v675 = vunpack.c.h.b16 %v294
    %v676 = vunpack.c.l.b16 %v295
    %v677 = vunpack.c.h.b16 %v295
    %v678 = vunpack.c.l.b16 %v296
    %v679 = vunpack.c.h.b16 %v296
    %v680 = vunpack.c.l.b16 %v297
    %v681 = vunpack.c.h.b16 %v297
    %v682 = vunpack.c.l.b16 %v298
    %v683 = vunpack.c.h.b16 %v298
    %v684 = vunpack.c.l.b16 %v299
    %v685 = vunpack.c.h.b16 %v299
    %v686 = vunpack.c.l.b16 %v300
    %v687 = vunpack.c.h.b16 %v300
    %v688 = vunpack.c.l.b16 %v301
    %v689 = vunpack.c.h.b16 %v301
    %v690 = vunpack.c.l.b16 %v302
    %v691 = vunpack.c.h.b16 %v302
    %v692 = vunpack.c.l.b16 %v303
    %v693 = vunpack.c.h.b16 %v303
    %v694 = vunpack.c.l.b16 %v304
    %v695 = vunpack.c.h.b16 %v304
    %v696 = vunpack.c.l.b16 %v305
    %v697 = vunpack.c.h.b16 %v305
    %v698 = vunpack.c.l.b16 %v306
    %v699 = vunpack.c.h.b16 %v306
    %v700 = vunpack.c.l.b16 %v307
    %v701 = vunpack.c.h.b16 %v307
    %v702 = vpack.c.b16 %v454, %v446
    %v703 = vpack.c.b16 %v455, %v447
    %v704 = vpack.c.b16 %v456, %v448
    %v705 = vpack.c.b16 %v457, %v449
    %v706 = vpack.c.b16 %v458, %v450
    %v707 = vpack.c.b16 %v459, %v451
    %v708 = vpack.c.b16 %v460, %v452
    %v709 = vpack.c.b16 %v461, %v453
    %v710 = vpack.c.b16 %v470, %v462
    %v711 = vpack.c.b16 %v471, %v463
    %v712 = vpack.c.b16 %v472, %v464
    %v713 = vpack.c.b16 %v473, %v465
    %v714 = vpack.c.b16 %v474, %v466
    %v715 = vpack.c.b16 %v475, %v467
    %v716 = vpack.c.b16 %v476, %v468
    %v717 = vpack.c.b16 %v477, %v469
    %v718 = vpack.c.b16 %v486, %v478
    %v719 = vpack.c.b16 %v487, %v479
    %v720 = vpack.c.b16 %v488, %v480
    %v721 = vpack.c.b16 %v489, %v481
    %v722 = vpack.c.b16 %v490, %v482
    %v723 = vpack.c.b16 %v491, %v483
    %v724 = vpack.c.b16 %v492, %v484
    %v725 = vpack.c.b16 %v493, %v485
    %v726 = vpack.c.b16 %v502, %v494
    %v727 = vpack.c.b16 %v503, %v495
    %v728 = vpack.c.b16 %v504, %v496
    %v729 = vpack.c.b16 %v505, %v497
    %v730 = vpack.c.b16 %v506, %v498
    %v731 = vpack.c.b16 %v507, %v499
    %v732 = vpack.c.b16 %v508, %v500
    %v733 = vpack.c.b16 %v509, %v501
    %v734 = vpack.c.b16 %v518, %v510
    %v735 = vpack.c.b16 %v519, %v511
    %v736 = vpack.c.b16 %v520, %v512
    %v737 = vpack.c.b16 %v521, %v513
    %v738 = vpack.c.b16 %v522, %v514
    %v739 = vpack.c.b16 %v523, %v515
    %v740 = vpack.c.b16 %v524, %v516
    %v741 = vpack.c.b16 %v525, %v517
    %v742 = vpack.c.b16 %v534, %v526
    %v743 = vpack.c.b16 %v535, %v527
    %v744 = vpack.c.b16 %v536, %v528
    %v745 = vpack.c.b16 %v537, %v529
    %v746 = vpack.c.b16 %v538, %v530
    %v747 = vpack.c.b16 %v539, %v531
    %v748 = vpack.c.b16 %v540, %v532
    %v749 = vpack.c.b16 %v541, %v533
    %v750 = vpack.c.b16 %v550, %v542
    %v751 = vpack.c.b16 %v551, %v543
    %v752 = vpack.c.b16 %v552, %v544
    %v753 = vpack.c.b16 %v553, %v545
    %v754 = vpack.c.b16 %v554, %v546
    %v755 = vpack.c.b16 %v555, %v547
    %v756 = vpack.c.b16 %v556, %v548
    %v757 = vpack.c.b16 %v557, %v549
    %v758 = vpack.c.b16 %v566, %v558
    %v759 = vpack.c.b16 %v567, %v559
    %v760 = vpack.c.b16 %v568, %v560
    %v761 = vpack.c.b16 %v569, %v561
    %v762 = vpack.c.b16 %v570, %v562
    %v763 = vpack.c.b16 %v571, %v563
    %v764 = vpack.c.b16 %v572, %v564
    %v765 = vpack.c.b16 %v573, %v565
    %v766 = vpack.c.b16 %v582, %v574
    %v767 = vpack.c.b16 %v583, %v575
    %v768 = vpack.c.b16 %v584, %v576
    %v769 = vpack.c.b16 %v585, %v577
    %v770 = vpack.c.b16 %v586, %v578
    %v771 = vpack.c.b16 %v587, %v579
    %v772 = vpack.c.b16 %v588, %v580
    %v773 = vpack.c.b16 %v589, %v581
    %v774 = vpack.c.b16 %v598, %v590
    %v775 = vpack.c.b16 %v599, %v591
    %v776 = vpack.c.b16 %v600, %v592
    %v777 = vpack.c.b16 %v601, %v593
    %v778 = vpack.c.b16 %v602, %v594
    %v779 = vpack.c.b16 %v603, %v595
    %v780 = vpack.c.b16 %v604, %v596
    %v781 = vpack.c.b16 %v605, %v597
    %v782 = vpack.c.b16 %v614, %v606
    %v783 = vpack.c.b16 %v615, %v607
    %v784 = vpack.c.b16 %v616, %v608
    %v785 = vpack.c.b16 %v617, %v609
    %v786 = vpack.c.b16 %v618, %v610
    %v787 = vpack.c.b16 %v619, %v611
    %v788 = vpack.c.b16 %v620, %v612
    %v789 = vpack.c.b16 %v621, %v613
    %v790 = vpack.c.b16 %v630, %v622
    %v791 = vpack.c.b16 %v631, %v623
    %v792 = vpack.c.b16 %v632, %v624
    %v793 = vpack.c.b16 %v633, %v625
    %v794 = vpack.c.b16 %v634, %v626
    %v795 = vpack.c.b16 %v635, %v627
    %v796 = vpack.c.b16 %v636, %v628
    %v797 = vpack.c.b16 %v637, %v629
    %v798 = vpack.c.b16 %v646, %v638
    %v799 = vpack.c.b16 %v647, %v639
    %v800 = vpack.c.b16 %v648, %v640
    %v801 = vpack.c.b16 %v649, %v641
    %v802 = vpack.c.b16 %v650, %v642
    %v803 = vpack.c.b16 %v651, %v643
    %v804 = vpack.c.b16 %v652, %v644
    %v805 = vpack.c.b16 %v653, %v645
    %v806 = vpack.c.b16 %v662, %v654
    %v807 = vpack.c.b16 %v663, %v655
    %v808 = vpack.c.b16 %v664, %v656
    %v809 = vpack.c.b16 %v665, %v657
    %v810 = vpack.c.b16 %v666, %v658
    %v811 = vpack.c.b16 %v667, %v659
    %v812 = vpack.c.b16 %v668, %v660
    %v813 = vpack.c.b16 %v669, %v661
    %v814 = vpack.c.b16 %v678, %v670
    %v815 = vpack.c.b16 %v679, %v671
    %v816 = vpack.c.b16 %v680, %v672
    %v817 = vpack.c.b16 %v681, %v673
    %v818 = vpack.c.b16 %v682, %v674
    %v819 = vpack.c.b16 %v683, %v675
    %v820 = vpack.c.b16 %v684, %v676
    %v821 = vpack.c.b16 %v685, %v677
    %v822 = vpack.c.b16 %v694, %v686
    %v823 = vpack.c.b16 %v695, %v687
    %v824 = vpack.c.b16 %v696, %v688
    %v825 = vpack.c.b16 %v697, %v689
    %v826 = vpack.c.b16 %v698, %v690
    %v827 = vpack.c.b16 %v699, %v691
    %v828 = vpack.c.b16 %v700, %v692
    %v829 = vpack.c.b16 %v701, %v693
    %958 = vmatprep.subr.bf16.mxu0 %v759
    %959 = vmatpush1.bf16.msra.mxu0 %v758
    %960 = vmatprep.subr.bf16.mxu0 %v751
    %961 = vmatpush1.bf16.msra.mxu0 %v750
    %962 = vmatprep.subr.bf16.mxu0 %v743
    %963 = vmatpush1.bf16.msra.mxu0 %v742
    %964 = vmatprep.subr.bf16.mxu0 %v735
    %965 = vmatpush1.bf16.msra.mxu0 %v734
    %966 = vmatprep.subr.bf16.mxu0 %v727
    %967 = vmatpush1.bf16.msra.mxu0 %v726
    %968 = vmatprep.subr.bf16.mxu0 %v719
    %969 = vmatpush1.bf16.msra.mxu0 %v718
    %970 = vmatprep.subr.bf16.mxu0 %v711
    %971 = vmatpush1.bf16.msra.mxu0 %v710
    %972 = vmatprep.subr.bf16.mxu0 %v703
    %973 = vmatpush1.bf16.msra.mxu0 %v702
    %974 = vmatprep.subr.bf16.mxu0 %v823
    %975 = vmatpush2.bf16.msra.mxu0 %v822
    %976 = vmatprep.subr.bf16.mxu0 %v815
    %977 = vmatpush2.bf16.msra.mxu0 %v814
    %978 = vmatprep.subr.bf16.mxu0 %v807
    %979 = vmatpush2.bf16.msra.mxu0 %v806
    %980 = vmatprep.subr.bf16.mxu0 %v799
    %981 = vmatpush2.bf16.msra.mxu0 %v798
    %982 = vmatprep.subr.bf16.mxu0 %v791
    %983 = vmatpush2.bf16.msra.mxu0 %v790
    %984 = vmatprep.subr.bf16.mxu0 %v783
    %985 = vmatpush2.bf16.msra.mxu0 %v782
    %986 = vmatprep.subr.bf16.mxu0 %v775
    %987 = vmatpush2.bf16.msra.mxu0 %v774
    %988 = vmatprep.subr.bf16.mxu0 %v767
    %989 = vmatpush2.bf16.msra.mxu0 %v766
    %990 = vmatprep.mubr.bf16.mxu0 %v315
    %991 = vmatmul.mubr.bf16.gmra.mxu0 %v314
    %v992 = vpop.f32.mrf.mxu0
    %v993 = vadd.f32 0.0, %v992
    %v994 = vpop.f32.mrf.mxu0
    %v995 = vadd.f32 0.0, %v994
    %v996 = vpop.f32.mrf.mxu0
    %v997 = vadd.f32 0.0, %v996
    %v998 = vpop.f32.mrf.mxu0
    %v999 = vadd.f32 0.0, %v998
    %1000 = vdwg.mxu0
    %1001 = vmatprep.subr.bf16.mxu0 %v761
    %1002 = vmatpush1.bf16.msra.mxu0 %v760
    %1003 = vmatprep.subr.bf16.mxu0 %v753
    %1004 = vmatpush1.bf16.msra.mxu0 %v752
    %1005 = vmatprep.subr.bf16.mxu0 %v745
    %1006 = vmatpush1.bf16.msra.mxu0 %v744
    %1007 = vmatprep.subr.bf16.mxu0 %v737
    %1008 = vmatpush1.bf16.msra.mxu0 %v736
    %1009 = vmatprep.subr.bf16.mxu0 %v729
    %1010 = vmatpush1.bf16.msra.mxu0 %v728
    %1011 = vmatprep.subr.bf16.mxu0 %v721
    %1012 = vmatpush1.bf16.msra.mxu0 %v720
    %1013 = vmatprep.subr.bf16.mxu0 %v713
    %1014 = vmatpush1.bf16.msra.mxu0 %v712
    %1015 = vmatprep.subr.bf16.mxu0 %v705
    %1016 = vmatpush1.bf16.msra.mxu0 %v704
    %1017 = vmatprep.subr.bf16.mxu0 %v825
    %1018 = vmatpush2.bf16.msra.mxu0 %v824
    %1019 = vmatprep.subr.bf16.mxu0 %v817
    %1020 = vmatpush2.bf16.msra.mxu0 %v816
    %1021 = vmatprep.subr.bf16.mxu0 %v809
    %1022 = vmatpush2.bf16.msra.mxu0 %v808
    %1023 = vmatprep.subr.bf16.mxu0 %v801
    %1024 = vmatpush2.bf16.msra.mxu0 %v800
    %1025 = vmatprep.subr.bf16.mxu0 %v793
    %1026 = vmatpush2.bf16.msra.mxu0 %v792
    %1027 = vmatprep.subr.bf16.mxu0 %v785
    %1028 = vmatpush2.bf16.msra.mxu0 %v784
    %1029 = vmatprep.subr.bf16.mxu0 %v777
    %1030 = vmatpush2.bf16.msra.mxu0 %v776
    %1031 = vmatprep.subr.bf16.mxu0 %v769
    %1032 = vmatpush2.bf16.msra.mxu0 %v768
    %1033 = vmatprep.mubr.bf16.mxu0 %v315
    %1034 = vmatmul.mubr.bf16.gmra.mxu0 %v314
    %v1035 = vpop.f32.mrf.mxu0
    %v1036 = vadd.f32 0.0, %v1035
    %v1037 = vpop.f32.mrf.mxu0
    %v1038 = vadd.f32 0.0, %v1037
    %v1039 = vpop.f32.mrf.mxu0
    %v1040 = vadd.f32 0.0, %v1039
    %v1041 = vpop.f32.mrf.mxu0
    %v1042 = vadd.f32 0.0, %v1041
    %1043 = vdwg.mxu0
    %1044 = vmatprep.subr.bf16.mxu0 %v763
    %1045 = vmatpush1.bf16.msra.mxu0 %v762
    %1046 = vmatprep.subr.bf16.mxu0 %v755
    %1047 = vmatpush1.bf16.msra.mxu0 %v754
    %1048 = vmatprep.subr.bf16.mxu0 %v747
    %1049 = vmatpush1.bf16.msra.mxu0 %v746
    %1050 = vmatprep.subr.bf16.mxu0 %v739
    %1051 = vmatpush1.bf16.msra.mxu0 %v738
    %1052 = vmatprep.subr.bf16.mxu0 %v731
    %1053 = vmatpush1.bf16.msra.mxu0 %v730
    %1054 = vmatprep.subr.bf16.mxu0 %v723
    %1055 = vmatpush1.bf16.msra.mxu0 %v722
    %1056 = vmatprep.subr.bf16.mxu0 %v715
    %1057 = vmatpush1.bf16.msra.mxu0 %v714
    %1058 = vmatprep.subr.bf16.mxu0 %v707
    %1059 = vmatpush1.bf16.msra.mxu0 %v706
    %1060 = vmatprep.subr.bf16.mxu0 %v827
    %1061 = vmatpush2.bf16.msra.mxu0 %v826
    %1062 = vmatprep.subr.bf16.mxu0 %v819
    %1063 = vmatpush2.bf16.msra.mxu0 %v818
    %1064 = vmatprep.subr.bf16.mxu0 %v811
    %1065 = vmatpush2.bf16.msra.mxu0 %v810
    %1066 = vmatprep.subr.bf16.mxu0 %v803
    %1067 = vmatpush2.bf16.msra.mxu0 %v802
    %1068 = vmatprep.subr.bf16.mxu0 %v795
    %1069 = vmatpush2.bf16.msra.mxu0 %v794
    %1070 = vmatprep.subr.bf16.mxu0 %v787
    %1071 = vmatpush2.bf16.msra.mxu0 %v786
    %1072 = vmatprep.subr.bf16.mxu0 %v779
    %1073 = vmatpush2.bf16.msra.mxu0 %v778
    %1074 = vmatprep.subr.bf16.mxu0 %v771
    %1075 = vmatpush2.bf16.msra.mxu0 %v770
    %1076 = vmatprep.mubr.bf16.mxu0 %v315
    %1077 = vmatmul.mubr.bf16.gmra.mxu0 %v314
    %v1078 = vpop.f32.mrf.mxu0
    %v1079 = vadd.f32 0.0, %v1078
    %v1080 = vpop.f32.mrf.mxu0
    %v1081 = vadd.f32 0.0, %v1080
    %v1082 = vpop.f32.mrf.mxu0
    %v1083 = vadd.f32 0.0, %v1082
    %v1084 = vpop.f32.mrf.mxu0
    %v1085 = vadd.f32 0.0, %v1084
    %1086 = vdwg.mxu0
    %1087 = vmatprep.subr.bf16.mxu0 %v765
    %1088 = vmatpush1.bf16.msra.mxu0 %v764
    %1089 = vmatprep.subr.bf16.mxu0 %v757
    %1090 = vmatpush1.bf16.msra.mxu0 %v756
    %1091 = vmatprep.subr.bf16.mxu0 %v749
    %1092 = vmatpush1.bf16.msra.mxu0 %v748
    %1093 = vmatprep.subr.bf16.mxu0 %v741
    %1094 = vmatpush1.bf16.msra.mxu0 %v740
    %1095 = vmatprep.subr.bf16.mxu0 %v733
    %1096 = vmatpush1.bf16.msra.mxu0 %v732
    %1097 = vmatprep.subr.bf16.mxu0 %v725
    %1098 = vmatpush1.bf16.msra.mxu0 %v724
    %1099 = vmatprep.subr.bf16.mxu0 %v717
    %1100 = vmatpush1.bf16.msra.mxu0 %v716
    %1101 = vmatprep.subr.bf16.mxu0 %v709
    %1102 = vmatpush1.bf16.msra.mxu0 %v708
    %1103 = vmatprep.subr.bf16.mxu0 %v829
    %1104 = vmatpush2.bf16.msra.mxu0 %v828
    %1105 = vmatprep.subr.bf16.mxu0 %v821
    %1106 = vmatpush2.bf16.msra.mxu0 %v820
    %1107 = vmatprep.subr.bf16.mxu0 %v813
    %1108 = vmatpush2.bf16.msra.mxu0 %v812
    %1109 = vmatprep.subr.bf16.mxu0 %v805
    %1110 = vmatpush2.bf16.msra.mxu0 %v804
    %1111 = vmatprep.subr.bf16.mxu0 %v797
    %1112 = vmatpush2.bf16.msra.mxu0 %v796
    %1113 = vmatprep.subr.bf16.mxu0 %v789
    %1114 = vmatpush2.bf16.msra.mxu0 %v788
    %1115 = vmatprep.subr.bf16.mxu0 %v781
    %1116 = vmatpush2.bf16.msra.mxu0 %v780
    %1117 = vmatprep.subr.bf16.mxu0 %v773
    %1118 = vmatpush2.bf16.msra.mxu0 %v772
    %1119 = vmatprep.mubr.bf16.mxu0 %v315
    %1120 = vmatmul.mubr.bf16.gmra.mxu0 %v314
    %v1121 = vpop.f32.mrf.mxu0
    %v1122 = vadd.f32 0.0, %v1121
    %v1123 = vpop.f32.mrf.mxu0
    %v1124 = vadd.f32 0.0, %v1123
    %v1125 = vpop.f32.mrf.mxu0
    %v1126 = vadd.f32 0.0, %v1125
    %v1127 = vpop.f32.mrf.mxu0
    %v1128 = vadd.f32 0.0, %v1127
    %1129 = vdwg.mxu0
    %v1130 = vpack.c.bf16 %v997, %v993
    %v1131 = vpack.c.bf16 %v999, %v995
    %v1132 = vpack.c.bf16 %v1040, %v1036
    %v1133 = vpack.c.bf16 %v1042, %v1038
    %v1134 = vpack.c.bf16 %v1083, %v1079
    %v1135 = vpack.c.bf16 %v1085, %v1081
    %v1136 = vpack.c.bf16 %v1126, %v1122
    %v1137 = vpack.c.bf16 %v1128, %v1124
    %v1138 = vld [vmem:[#allocation9] sm:$0xff]
    %v1139 = vld [vmem:[#allocation9 + $0x8] sm:$0xff]
    %v1140 = vld [vmem:[#allocation9 + $0x10] sm:$0xff]
    %v1141 = vld [vmem:[#allocation9 + $0x18] sm:$0xff]
    %v1142 = vld [vmem:[#allocation9 + $0x20] sm:$0xff]
    %v1143 = vld [vmem:[#allocation9 + $0x28] sm:$0xff]
    %v1144 = vld [vmem:[#allocation9 + $0x30] sm:$0xff]
    %v1145 = vld [vmem:[#allocation9 + $0x38] sm:$0xff]
    %v1146 = vld [vmem:[#allocation9 + $0x40] sm:$0xff]
    %v1147 = vld [vmem:[#allocation9 + $0x48] sm:$0xff]
    %v1148 = vld [vmem:[#allocation9 + $0x50] sm:$0xff]
    %v1149 = vld [vmem:[#allocation9 + $0x58] sm:$0xff]
    %v1150 = vld [vmem:[#allocation9 + $0x60] sm:$0xff]
    %v1151 = vld [vmem:[#allocation9 + $0x68] sm:$0xff]
    %v1152 = vld [vmem:[#allocation9 + $0x70] sm:$0xff]
    %v1153 = vld [vmem:[#allocation9 + $0x78] sm:$0xff]
    %v1154 = vld [vmem:[#allocation9 + $0x80] sm:$0xff]
    %v1155 = vld [vmem:[#allocation9 + $0x88] sm:$0xff]
    %v1156 = vld [vmem:[#allocation9 + $0x90] sm:$0xff]
    %v1157 = vld [vmem:[#allocation9 + $0x98] sm:$0xff]
    %v1158 = vld [vmem:[#allocation9 + $0xa0] sm:$0xff]
    %v1159 = vld [vmem:[#allocation9 + $0xa8] sm:$0xff]
    %v1160 = vld [vmem:[#allocation9 + $0xb0] sm:$0xff]
    %v1161 = vld [vmem:[#allocation9 + $0xb8] sm:$0xff]
    %v1162 = vld [vmem:[#allocation9 + $0xc0] sm:$0xff]
    %v1163 = vld [vmem:[#allocation9 + $0xc8] sm:$0xff]
    %v1164 = vld [vmem:[#allocation9 + $0xd0] sm:$0xff]
    %v1165 = vld [vmem:[#allocation9 + $0xd8] sm:$0xff]
    %v1166 = vld [vmem:[#allocation9 + $0xe0] sm:$0xff]
    %v1167 = vld [vmem:[#allocation9 + $0xe8] sm:$0xff]
    %v1168 = vld [vmem:[#allocation9 + $0xf0] sm:$0xff]
    %v1169 = vld [vmem:[#allocation9 + $0xf8] sm:$0xff]
    %v1170 = vld [vmem:[#allocation9 + $0x100] sm:$0xff]
    %v1171 = vld [vmem:[#allocation9 + $0x108] sm:$0xff]
    %v1172 = vld [vmem:[#allocation9 + $0x110] sm:$0xff]
    %v1173 = vld [vmem:[#allocation9 + $0x118] sm:$0xff]
    %v1174 = vld [vmem:[#allocation9 + $0x120] sm:$0xff]
    %v1175 = vld [vmem:[#allocation9 + $0x128] sm:$0xff]
    %v1176 = vld [vmem:[#allocation9 + $0x130] sm:$0xff]
    %v1177 = vld [vmem:[#allocation9 + $0x138] sm:$0xff]
    %v1178 = vld [vmem:[#allocation9 + $0x140] sm:$0xff]
    %v1179 = vld [vmem:[#allocation9 + $0x148] sm:$0xff]
    %v1180 = vld [vmem:[#allocation9 + $0x150] sm:$0xff]
    %v1181 = vld [vmem:[#allocation9 + $0x158] sm:$0xff]
    %v1182 = vld [vmem:[#allocation9 + $0x160] sm:$0xff]
    %v1183 = vld [vmem:[#allocation9 + $0x168] sm:$0xff]
    %v1184 = vld [vmem:[#allocation9 + $0x170] sm:$0xff]
    %v1185 = vld [vmem:[#allocation9 + $0x178] sm:$0xff]
    %v1186 = vld [vmem:[#allocation9 + $0x180] sm:$0xff]
    %v1187 = vld [vmem:[#allocation9 + $0x188] sm:$0xff]
    %v1188 = vld [vmem:[#allocation9 + $0x190] sm:$0xff]
    %v1189 = vld [vmem:[#allocation9 + $0x198] sm:$0xff]
    %v1190 = vld [vmem:[#allocation9 + $0x1a0] sm:$0xff]
    %v1191 = vld [vmem:[#allocation9 + $0x1a8] sm:$0xff]
    %v1192 = vld [vmem:[#allocation9 + $0x1b0] sm:$0xff]
    %v1193 = vld [vmem:[#allocation9 + $0x1b8] sm:$0xff]
    %v1194 = vld [vmem:[#allocation9 + $0x1c0] sm:$0xff]
    %v1195 = vld [vmem:[#allocation9 + $0x1c8] sm:$0xff]
    %v1196 = vld [vmem:[#allocation9 + $0x1d0] sm:$0xff]
    %v1197 = vld [vmem:[#allocation9 + $0x1d8] sm:$0xff]
    %v1198 = vld [vmem:[#allocation9 + $0x1e0] sm:$0xff]
    %v1199 = vld [vmem:[#allocation9 + $0x1e8] sm:$0xff]
    %v1200 = vld [vmem:[#allocation9 + $0x1f0] sm:$0xff]
    %v1201 = vld [vmem:[#allocation9 + $0x1f8] sm:$0xff]
    %v1202 = vld [vmem:[#allocation9 + $0x200] sm:$0xff]
    %v1203 = vld [vmem:[#allocation9 + $0x208] sm:$0xff]
    %v1204 = vld [vmem:[#allocation9 + $0x210] sm:$0xff]
    %v1205 = vld [vmem:[#allocation9 + $0x218] sm:$0xff]
    %v1206 = vld [vmem:[#allocation9 + $0x220] sm:$0xff]
    %v1207 = vld [vmem:[#allocation9 + $0x228] sm:$0xff]
    %v1208 = vld [vmem:[#allocation9 + $0x230] sm:$0xff]
    %v1209 = vld [vmem:[#allocation9 + $0x238] sm:$0xff]
    %v1210 = vld [vmem:[#allocation9 + $0x240] sm:$0xff]
    %v1211 = vld [vmem:[#allocation9 + $0x248] sm:$0xff]
    %v1212 = vld [vmem:[#allocation9 + $0x250] sm:$0xff]
    %v1213 = vld [vmem:[#allocation9 + $0x258] sm:$0xff]
    %v1214 = vld [vmem:[#allocation9 + $0x260] sm:$0xff]
    %v1215 = vld [vmem:[#allocation9 + $0x268] sm:$0xff]
    %v1216 = vld [vmem:[#allocation9 + $0x270] sm:$0xff]
    %v1217 = vld [vmem:[#allocation9 + $0x278] sm:$0xff]
    %v1218 = vld [vmem:[#allocation9 + $0x280] sm:$0xff]
    %v1219 = vld [vmem:[#allocation9 + $0x288] sm:$0xff]
    %v1220 = vld [vmem:[#allocation9 + $0x290] sm:$0xff]
    %v1221 = vld [vmem:[#allocation9 + $0x298] sm:$0xff]
    %v1222 = vld [vmem:[#allocation9 + $0x2a0] sm:$0xff]
    %v1223 = vld [vmem:[#allocation9 + $0x2a8] sm:$0xff]
    %v1224 = vld [vmem:[#allocation9 + $0x2b0] sm:$0xff]
    %v1225 = vld [vmem:[#allocation9 + $0x2b8] sm:$0xff]
    %v1226 = vld [vmem:[#allocation9 + $0x2c0] sm:$0xff]
    %v1227 = vld [vmem:[#allocation9 + $0x2c8] sm:$0xff]
    %v1228 = vld [vmem:[#allocation9 + $0x2d0] sm:$0xff]
    %v1229 = vld [vmem:[#allocation9 + $0x2d8] sm:$0xff]
    %v1230 = vld [vmem:[#allocation9 + $0x2e0] sm:$0xff]
    %v1231 = vld [vmem:[#allocation9 + $0x2e8] sm:$0xff]
    %v1232 = vld [vmem:[#allocation9 + $0x2f0] sm:$0xff]
    %v1233 = vld [vmem:[#allocation9 + $0x2f8] sm:$0xff]
    %v1234 = vld [vmem:[#allocation9 + $0x300] sm:$0xff]
    %v1235 = vld [vmem:[#allocation9 + $0x308] sm:$0xff]
    %v1236 = vld [vmem:[#allocation9 + $0x310] sm:$0xff]
    %v1237 = vld [vmem:[#allocation9 + $0x318] sm:$0xff]
    %v1238 = vld [vmem:[#allocation9 + $0x320] sm:$0xff]
    %v1239 = vld [vmem:[#allocation9 + $0x328] sm:$0xff]
    %v1240 = vld [vmem:[#allocation9 + $0x330] sm:$0xff]
    %v1241 = vld [vmem:[#allocation9 + $0x338] sm:$0xff]
    %v1242 = vld [vmem:[#allocation9 + $0x340] sm:$0xff]
    %v1243 = vld [vmem:[#allocation9 + $0x348] sm:$0xff]
    %v1244 = vld [vmem:[#allocation9 + $0x350] sm:$0xff]
    %v1245 = vld [vmem:[#allocation9 + $0x358] sm:$0xff]
    %v1246 = vld [vmem:[#allocation9 + $0x360] sm:$0xff]
    %v1247 = vld [vmem:[#allocation9 + $0x368] sm:$0xff]
    %v1248 = vld [vmem:[#allocation9 + $0x370] sm:$0xff]
    %v1249 = vld [vmem:[#allocation9 + $0x378] sm:$0xff]
    %v1250 = vld [vmem:[#allocation9 + $0x380] sm:$0xff]
    %v1251 = vld [vmem:[#allocation9 + $0x388] sm:$0xff]
    %v1252 = vld [vmem:[#allocation9 + $0x390] sm:$0xff]
    %v1253 = vld [vmem:[#allocation9 + $0x398] sm:$0xff]
    %v1254 = vld [vmem:[#allocation9 + $0x3a0] sm:$0xff]
    %v1255 = vld [vmem:[#allocation9 + $0x3a8] sm:$0xff]
    %v1256 = vld [vmem:[#allocation9 + $0x3b0] sm:$0xff]
    %v1257 = vld [vmem:[#allocation9 + $0x3b8] sm:$0xff]
    %v1258 = vld [vmem:[#allocation9 + $0x3c0] sm:$0xff]
    %v1259 = vld [vmem:[#allocation9 + $0x3c8] sm:$0xff]
    %v1260 = vld [vmem:[#allocation9 + $0x3d0] sm:$0xff]
    %v1261 = vld [vmem:[#allocation9 + $0x3d8] sm:$0xff]
    %v1262 = vld [vmem:[#allocation9 + $0x3e0] sm:$0xff]
    %v1263 = vld [vmem:[#allocation9 + $0x3e8] sm:$0xff]
    %v1264 = vld [vmem:[#allocation9 + $0x3f0] sm:$0xff]
    %v1265 = vld [vmem:[#allocation9 + $0x3f8] sm:$0xff]
    %v1266 = vld [vmem:[#allocation9 + $0x400] sm:$0xff]
    %v1267 = vld [vmem:[#allocation9 + $0x408] sm:$0xff]
    %v1268 = vld [vmem:[#allocation9 + $0x410] sm:$0xff]
    %v1269 = vld [vmem:[#allocation9 + $0x418] sm:$0xff]
    %v1270 = vld [vmem:[#allocation9 + $0x420] sm:$0xff]
    %v1271 = vld [vmem:[#allocation9 + $0x428] sm:$0xff]
    %v1272 = vld [vmem:[#allocation9 + $0x430] sm:$0xff]
    %v1273 = vld [vmem:[#allocation9 + $0x438] sm:$0xff]
    %v1274 = vld [vmem:[#allocation9 + $0x440] sm:$0xff]
    %v1275 = vld [vmem:[#allocation9 + $0x448] sm:$0xff]
    %v1276 = vld [vmem:[#allocation9 + $0x450] sm:$0xff]
    %v1277 = vld [vmem:[#allocation9 + $0x458] sm:$0xff]
    %v1278 = vld [vmem:[#allocation9 + $0x460] sm:$0xff]
    %v1279 = vld [vmem:[#allocation9 + $0x468] sm:$0xff]
    %v1280 = vld [vmem:[#allocation9 + $0x470] sm:$0xff]
    %v1281 = vld [vmem:[#allocation9 + $0x478] sm:$0xff]
    %v1282 = vld [vmem:[#allocation9 + $0x480] sm:$0xff]
    %v1283 = vld [vmem:[#allocation9 + $0x488] sm:$0xff]
    %v1284 = vld [vmem:[#allocation9 + $0x490] sm:$0xff]
    %v1285 = vld [vmem:[#allocation9 + $0x498] sm:$0xff]
    %v1286 = vld [vmem:[#allocation9 + $0x4a0] sm:$0xff]
    %v1287 = vld [vmem:[#allocation9 + $0x4a8] sm:$0xff]
    %v1288 = vld [vmem:[#allocation9 + $0x4b0] sm:$0xff]
    %v1289 = vld [vmem:[#allocation9 + $0x4b8] sm:$0xff]
    %v1290 = vld [vmem:[#allocation9 + $0x4c0] sm:$0xff]
    %v1291 = vld [vmem:[#allocation9 + $0x4c8] sm:$0xff]
    %v1292 = vld [vmem:[#allocation9 + $0x4d0] sm:$0xff]
    %v1293 = vld [vmem:[#allocation9 + $0x4d8] sm:$0xff]
    %v1294 = vld [vmem:[#allocation9 + $0x4e0] sm:$0xff]
    %v1295 = vld [vmem:[#allocation9 + $0x4e8] sm:$0xff]
    %v1296 = vld [vmem:[#allocation9 + $0x4f0] sm:$0xff]
    %v1297 = vld [vmem:[#allocation9 + $0x4f8] sm:$0xff]
    %v1298 = vld [vmem:[#allocation9 + $0x500] sm:$0xff]
    %v1299 = vld [vmem:[#allocation9 + $0x508] sm:$0xff]
    %v1300 = vld [vmem:[#allocation9 + $0x510] sm:$0xff]
    %v1301 = vld [vmem:[#allocation9 + $0x518] sm:$0xff]
    %v1302 = vld [vmem:[#allocation9 + $0x520] sm:$0xff]
    %v1303 = vld [vmem:[#allocation9 + $0x528] sm:$0xff]
    %v1304 = vld [vmem:[#allocation9 + $0x530] sm:$0xff]
    %v1305 = vld [vmem:[#allocation9 + $0x538] sm:$0xff]
    %v1306 = vld [vmem:[#allocation9 + $0x540] sm:$0xff]
    %v1307 = vld [vmem:[#allocation9 + $0x548] sm:$0xff]
    %v1308 = vld [vmem:[#allocation9 + $0x550] sm:$0xff]
    %v1309 = vld [vmem:[#allocation9 + $0x558] sm:$0xff]
    %v1310 = vld [vmem:[#allocation9 + $0x560] sm:$0xff]
    %v1311 = vld [vmem:[#allocation9 + $0x568] sm:$0xff]
    %v1312 = vld [vmem:[#allocation9 + $0x570] sm:$0xff]
    %v1313 = vld [vmem:[#allocation9 + $0x578] sm:$0xff]
    %v1314 = vld [vmem:[#allocation9 + $0x580] sm:$0xff]
    %v1315 = vld [vmem:[#allocation9 + $0x588] sm:$0xff]
    %v1316 = vld [vmem:[#allocation9 + $0x590] sm:$0xff]
    %v1317 = vld [vmem:[#allocation9 + $0x598] sm:$0xff]
    %v1318 = vld [vmem:[#allocation9 + $0x5a0] sm:$0xff]
    %v1319 = vld [vmem:[#allocation9 + $0x5a8] sm:$0xff]
    %v1320 = vld [vmem:[#allocation9 + $0x5b0] sm:$0xff]
    %v1321 = vld [vmem:[#allocation9 + $0x5b8] sm:$0xff]
    %v1322 = vld [vmem:[#allocation9 + $0x5c0] sm:$0xff]
    %v1323 = vld [vmem:[#allocation9 + $0x5c8] sm:$0xff]
    %v1324 = vld [vmem:[#allocation9 + $0x5d0] sm:$0xff]
    %v1325 = vld [vmem:[#allocation9 + $0x5d8] sm:$0xff]
    %v1326 = vld [vmem:[#allocation9 + $0x5e0] sm:$0xff]
    %v1327 = vld [vmem:[#allocation9 + $0x5e8] sm:$0xff]
    %v1328 = vld [vmem:[#allocation9 + $0x5f0] sm:$0xff]
    %v1329 = vld [vmem:[#allocation9 + $0x5f8] sm:$0xff]
    %v1330 = vld [vmem:[#allocation9 + $0x600] sm:$0xff]
    %v1331 = vld [vmem:[#allocation9 + $0x608] sm:$0xff]
    %v1332 = vld [vmem:[#allocation9 + $0x610] sm:$0xff]
    %v1333 = vld [vmem:[#allocation9 + $0x618] sm:$0xff]
    %v1334 = vld [vmem:[#allocation9 + $0x620] sm:$0xff]
    %v1335 = vld [vmem:[#allocation9 + $0x628] sm:$0xff]
    %v1336 = vld [vmem:[#allocation9 + $0x630] sm:$0xff]
    %v1337 = vld [vmem:[#allocation9 + $0x638] sm:$0xff]
    %v1338 = vld [vmem:[#allocation9 + $0x640] sm:$0xff]
    %v1339 = vld [vmem:[#allocation9 + $0x648] sm:$0xff]
    %v1340 = vld [vmem:[#allocation9 + $0x650] sm:$0xff]
    %v1341 = vld [vmem:[#allocation9 + $0x658] sm:$0xff]
    %v1342 = vld [vmem:[#allocation9 + $0x660] sm:$0xff]
    %v1343 = vld [vmem:[#allocation9 + $0x668] sm:$0xff]
    %v1344 = vld [vmem:[#allocation9 + $0x670] sm:$0xff]
    %v1345 = vld [vmem:[#allocation9 + $0x678] sm:$0xff]
    %v1346 = vld [vmem:[#allocation9 + $0x680] sm:$0xff]
    %v1347 = vld [vmem:[#allocation9 + $0x688] sm:$0xff]
    %v1348 = vld [vmem:[#allocation9 + $0x690] sm:$0xff]
    %v1349 = vld [vmem:[#allocation9 + $0x698] sm:$0xff]
    %v1350 = vld [vmem:[#allocation9 + $0x6a0] sm:$0xff]
    %v1351 = vld [vmem:[#allocation9 + $0x6a8] sm:$0xff]
    %v1352 = vld [vmem:[#allocation9 + $0x6b0] sm:$0xff]
    %v1353 = vld [vmem:[#allocation9 + $0x6b8] sm:$0xff]
    %v1354 = vld [vmem:[#allocation9 + $0x6c0] sm:$0xff]
    %v1355 = vld [vmem:[#allocation9 + $0x6c8] sm:$0xff]
    %v1356 = vld [vmem:[#allocation9 + $0x6d0] sm:$0xff]
    %v1357 = vld [vmem:[#allocation9 + $0x6d8] sm:$0xff]
    %v1358 = vld [vmem:[#allocation9 + $0x6e0] sm:$0xff]
    %v1359 = vld [vmem:[#allocation9 + $0x6e8] sm:$0xff]
    %v1360 = vld [vmem:[#allocation9 + $0x6f0] sm:$0xff]
    %v1361 = vld [vmem:[#allocation9 + $0x6f8] sm:$0xff]
    %v1362 = vld [vmem:[#allocation9 + $0x700] sm:$0xff]
    %v1363 = vld [vmem:[#allocation9 + $0x708] sm:$0xff]
    %v1364 = vld [vmem:[#allocation9 + $0x710] sm:$0xff]
    %v1365 = vld [vmem:[#allocation9 + $0x718] sm:$0xff]
    %v1366 = vld [vmem:[#allocation9 + $0x720] sm:$0xff]
    %v1367 = vld [vmem:[#allocation9 + $0x728] sm:$0xff]
    %v1368 = vld [vmem:[#allocation9 + $0x730] sm:$0xff]
    %v1369 = vld [vmem:[#allocation9 + $0x738] sm:$0xff]
    %v1370 = vld [vmem:[#allocation9 + $0x740] sm:$0xff]
    %v1371 = vld [vmem:[#allocation9 + $0x748] sm:$0xff]
    %v1372 = vld [vmem:[#allocation9 + $0x750] sm:$0xff]
    %v1373 = vld [vmem:[#allocation9 + $0x758] sm:$0xff]
    %v1374 = vld [vmem:[#allocation9 + $0x760] sm:$0xff]
    %v1375 = vld [vmem:[#allocation9 + $0x768] sm:$0xff]
    %v1376 = vld [vmem:[#allocation9 + $0x770] sm:$0xff]
    %v1377 = vld [vmem:[#allocation9 + $0x778] sm:$0xff]
    %v1378 = vld [vmem:[#allocation9 + $0x780] sm:$0xff]
    %v1379 = vld [vmem:[#allocation9 + $0x788] sm:$0xff]
    %v1380 = vld [vmem:[#allocation9 + $0x790] sm:$0xff]
    %v1381 = vld [vmem:[#allocation9 + $0x798] sm:$0xff]
    %v1382 = vld [vmem:[#allocation9 + $0x7a0] sm:$0xff]
    %v1383 = vld [vmem:[#allocation9 + $0x7a8] sm:$0xff]
    %v1384 = vld [vmem:[#allocation9 + $0x7b0] sm:$0xff]
    %v1385 = vld [vmem:[#allocation9 + $0x7b8] sm:$0xff]
    %v1386 = vld [vmem:[#allocation9 + $0x7c0] sm:$0xff]
    %v1387 = vld [vmem:[#allocation9 + $0x7c8] sm:$0xff]
    %v1388 = vld [vmem:[#allocation9 + $0x7d0] sm:$0xff]
    %v1389 = vld [vmem:[#allocation9 + $0x7d8] sm:$0xff]
    %v1390 = vld [vmem:[#allocation9 + $0x7e0] sm:$0xff]
    %v1391 = vld [vmem:[#allocation9 + $0x7e8] sm:$0xff]
    %v1392 = vld [vmem:[#allocation9 + $0x7f0] sm:$0xff]
    %v1393 = vld [vmem:[#allocation9 + $0x7f8] sm:$0xff]
    %v1650 = vunpack.c.l.b16 %v1138
    %v1651 = vunpack.c.h.b16 %v1138
    %v1652 = vunpack.c.l.b16 %v1139
    %v1653 = vunpack.c.h.b16 %v1139
    %v1654 = vunpack.c.l.b16 %v1140
    %v1655 = vunpack.c.h.b16 %v1140
    %v1656 = vunpack.c.l.b16 %v1141
    %v1657 = vunpack.c.h.b16 %v1141
    %v1658 = vunpack.c.l.b16 %v1142
    %v1659 = vunpack.c.h.b16 %v1142
    %v1660 = vunpack.c.l.b16 %v1143
    %v1661 = vunpack.c.h.b16 %v1143
    %v1662 = vunpack.c.l.b16 %v1144
    %v1663 = vunpack.c.h.b16 %v1144
    %v1664 = vunpack.c.l.b16 %v1145
    %v1665 = vunpack.c.h.b16 %v1145
    %v1666 = vunpack.c.l.b16 %v1146
    %v1667 = vunpack.c.h.b16 %v1146
    %v1668 = vunpack.c.l.b16 %v1147
    %v1669 = vunpack.c.h.b16 %v1147
    %v1670 = vunpack.c.l.b16 %v1148
    %v1671 = vunpack.c.h.b16 %v1148
    %v1672 = vunpack.c.l.b16 %v1149
    %v1673 = vunpack.c.h.b16 %v1149
    %v1674 = vunpack.c.l.b16 %v1150
    %v1675 = vunpack.c.h.b16 %v1150
    %v1676 = vunpack.c.l.b16 %v1151
    %v1677 = vunpack.c.h.b16 %v1151
    %v1678 = vunpack.c.l.b16 %v1152
    %v1679 = vunpack.c.h.b16 %v1152
    %v1680 = vunpack.c.l.b16 %v1153
    %v1681 = vunpack.c.h.b16 %v1153
    %v1682 = vunpack.c.l.b16 %v1154
    %v1683 = vunpack.c.h.b16 %v1154
    %v1684 = vunpack.c.l.b16 %v1155
    %v1685 = vunpack.c.h.b16 %v1155
    %v1686 = vunpack.c.l.b16 %v1156
    %v1687 = vunpack.c.h.b16 %v1156
    %v1688 = vunpack.c.l.b16 %v1157
    %v1689 = vunpack.c.h.b16 %v1157
    %v1690 = vunpack.c.l.b16 %v1158
    %v1691 = vunpack.c.h.b16 %v1158
    %v1692 = vunpack.c.l.b16 %v1159
    %v1693 = vunpack.c.h.b16 %v1159
    %v1694 = vunpack.c.l.b16 %v1160
    %v1695 = vunpack.c.h.b16 %v1160
    %v1696 = vunpack.c.l.b16 %v1161
    %v1697 = vunpack.c.h.b16 %v1161
    %v1698 = vunpack.c.l.b16 %v1162
    %v1699 = vunpack.c.h.b16 %v1162
    %v1700 = vunpack.c.l.b16 %v1163
    %v1701 = vunpack.c.h.b16 %v1163
    %v1702 = vunpack.c.l.b16 %v1164
    %v1703 = vunpack.c.h.b16 %v1164
    %v1704 = vunpack.c.l.b16 %v1165
    %v1705 = vunpack.c.h.b16 %v1165
    %v1706 = vunpack.c.l.b16 %v1166
    %v1707 = vunpack.c.h.b16 %v1166
    %v1708 = vunpack.c.l.b16 %v1167
    %v1709 = vunpack.c.h.b16 %v1167
    %v1710 = vunpack.c.l.b16 %v1168
    %v1711 = vunpack.c.h.b16 %v1168
    %v1712 = vunpack.c.l.b16 %v1169
    %v1713 = vunpack.c.h.b16 %v1169
    %v1714 = vunpack.c.l.b16 %v1170
    %v1715 = vunpack.c.h.b16 %v1170
    %v1716 = vunpack.c.l.b16 %v1171
    %v1717 = vunpack.c.h.b16 %v1171
    %v1718 = vunpack.c.l.b16 %v1172
    %v1719 = vunpack.c.h.b16 %v1172
    %v1720 = vunpack.c.l.b16 %v1173
    %v1721 = vunpack.c.h.b16 %v1173
    %v1722 = vunpack.c.l.b16 %v1174
    %v1723 = vunpack.c.h.b16 %v1174
    %v1724 = vunpack.c.l.b16 %v1175
    %v1725 = vunpack.c.h.b16 %v1175
    %v1726 = vunpack.c.l.b16 %v1176
    %v1727 = vunpack.c.h.b16 %v1176
    %v1728 = vunpack.c.l.b16 %v1177
    %v1729 = vunpack.c.h.b16 %v1177
    %v1730 = vunpack.c.l.b16 %v1178
    %v1731 = vunpack.c.h.b16 %v1178
    %v1732 = vunpack.c.l.b16 %v1179
    %v1733 = vunpack.c.h.b16 %v1179
    %v1734 = vunpack.c.l.b16 %v1180
    %v1735 = vunpack.c.h.b16 %v1180
    %v1736 = vunpack.c.l.b16 %v1181
    %v1737 = vunpack.c.h.b16 %v1181
    %v1738 = vunpack.c.l.b16 %v1182
    %v1739 = vunpack.c.h.b16 %v1182
    %v1740 = vunpack.c.l.b16 %v1183
    %v1741 = vunpack.c.h.b16 %v1183
    %v1742 = vunpack.c.l.b16 %v1184
    %v1743 = vunpack.c.h.b16 %v1184
    %v1744 = vunpack.c.l.b16 %v1185
    %v1745 = vunpack.c.h.b16 %v1185
    %v1746 = vunpack.c.l.b16 %v1186
    %v1747 = vunpack.c.h.b16 %v1186
    %v1748 = vunpack.c.l.b16 %v1187
    %v1749 = vunpack.c.h.b16 %v1187
    %v1750 = vunpack.c.l.b16 %v1188
    %v1751 = vunpack.c.h.b16 %v1188
    %v1752 = vunpack.c.l.b16 %v1189
    %v1753 = vunpack.c.h.b16 %v1189
    %v1754 = vunpack.c.l.b16 %v1190
    %v1755 = vunpack.c.h.b16 %v1190
    %v1756 = vunpack.c.l.b16 %v1191
    %v1757 = vunpack.c.h.b16 %v1191
    %v1758 = vunpack.c.l.b16 %v1192
    %v1759 = vunpack.c.h.b16 %v1192
    %v1760 = vunpack.c.l.b16 %v1193
    %v1761 = vunpack.c.h.b16 %v1193
    %v1762 = vunpack.c.l.b16 %v1194
    %v1763 = vunpack.c.h.b16 %v1194
    %v1764 = vunpack.c.l.b16 %v1195
    %v1765 = vunpack.c.h.b16 %v1195
    %v1766 = vunpack.c.l.b16 %v1196
    %v1767 = vunpack.c.h.b16 %v1196
    %v1768 = vunpack.c.l.b16 %v1197
    %v1769 = vunpack.c.h.b16 %v1197
    %v1770 = vunpack.c.l.b16 %v1198
    %v1771 = vunpack.c.h.b16 %v1198
    %v1772 = vunpack.c.l.b16 %v1199
    %v1773 = vunpack.c.h.b16 %v1199
    %v1774 = vunpack.c.l.b16 %v1200
    %v1775 = vunpack.c.h.b16 %v1200
    %v1776 = vunpack.c.l.b16 %v1201
    %v1777 = vunpack.c.h.b16 %v1201
    %v1778 = vunpack.c.l.b16 %v1202
    %v1779 = vunpack.c.h.b16 %v1202
    %v1780 = vunpack.c.l.b16 %v1203
    %v1781 = vunpack.c.h.b16 %v1203
    %v1782 = vunpack.c.l.b16 %v1204
    %v1783 = vunpack.c.h.b16 %v1204
    %v1784 = vunpack.c.l.b16 %v1205
    %v1785 = vunpack.c.h.b16 %v1205
    %v1786 = vunpack.c.l.b16 %v1206
    %v1787 = vunpack.c.h.b16 %v1206
    %v1788 = vunpack.c.l.b16 %v1207
    %v1789 = vunpack.c.h.b16 %v1207
    %v1790 = vunpack.c.l.b16 %v1208
    %v1791 = vunpack.c.h.b16 %v1208
    %v1792 = vunpack.c.l.b16 %v1209
    %v1793 = vunpack.c.h.b16 %v1209
    %v1794 = vunpack.c.l.b16 %v1210
    %v1795 = vunpack.c.h.b16 %v1210
    %v1796 = vunpack.c.l.b16 %v1211
    %v1797 = vunpack.c.h.b16 %v1211
    %v1798 = vunpack.c.l.b16 %v1212
    %v1799 = vunpack.c.h.b16 %v1212
    %v1800 = vunpack.c.l.b16 %v1213
    %v1801 = vunpack.c.h.b16 %v1213
    %v1802 = vunpack.c.l.b16 %v1214
    %v1803 = vunpack.c.h.b16 %v1214
    %v1804 = vunpack.c.l.b16 %v1215
    %v1805 = vunpack.c.h.b16 %v1215
    %v1806 = vunpack.c.l.b16 %v1216
    %v1807 = vunpack.c.h.b16 %v1216
    %v1808 = vunpack.c.l.b16 %v1217
    %v1809 = vunpack.c.h.b16 %v1217
    %v1810 = vunpack.c.l.b16 %v1218
    %v1811 = vunpack.c.h.b16 %v1218
    %v1812 = vunpack.c.l.b16 %v1219
    %v1813 = vunpack.c.h.b16 %v1219
    %v1814 = vunpack.c.l.b16 %v1220
    %v1815 = vunpack.c.h.b16 %v1220
    %v1816 = vunpack.c.l.b16 %v1221
    %v1817 = vunpack.c.h.b16 %v1221
    %v1818 = vunpack.c.l.b16 %v1222
    %v1819 = vunpack.c.h.b16 %v1222
    %v1820 = vunpack.c.l.b16 %v1223
    %v1821 = vunpack.c.h.b16 %v1223
    %v1822 = vunpack.c.l.b16 %v1224
    %v1823 = vunpack.c.h.b16 %v1224
    %v1824 = vunpack.c.l.b16 %v1225
    %v1825 = vunpack.c.h.b16 %v1225
    %v1826 = vunpack.c.l.b16 %v1226
    %v1827 = vunpack.c.h.b16 %v1226
    %v1828 = vunpack.c.l.b16 %v1227
    %v1829 = vunpack.c.h.b16 %v1227
    %v1830 = vunpack.c.l.b16 %v1228
    %v1831 = vunpack.c.h.b16 %v1228
    %v1832 = vunpack.c.l.b16 %v1229
    %v1833 = vunpack.c.h.b16 %v1229
    %v1834 = vunpack.c.l.b16 %v1230
    %v1835 = vunpack.c.h.b16 %v1230
    %v1836 = vunpack.c.l.b16 %v1231
    %v1837 = vunpack.c.h.b16 %v1231
    %v1838 = vunpack.c.l.b16 %v1232
    %v1839 = vunpack.c.h.b16 %v1232
    %v1840 = vunpack.c.l.b16 %v1233
    %v1841 = vunpack.c.h.b16 %v1233
    %v1842 = vunpack.c.l.b16 %v1234
    %v1843 = vunpack.c.h.b16 %v1234
    %v1844 = vunpack.c.l.b16 %v1235
    %v1845 = vunpack.c.h.b16 %v1235
    %v1846 = vunpack.c.l.b16 %v1236
    %v1847 = vunpack.c.h.b16 %v1236
    %v1848 = vunpack.c.l.b16 %v1237
    %v1849 = vunpack.c.h.b16 %v1237
    %v1850 = vunpack.c.l.b16 %v1238
    %v1851 = vunpack.c.h.b16 %v1238
    %v1852 = vunpack.c.l.b16 %v1239
    %v1853 = vunpack.c.h.b16 %v1239
    %v1854 = vunpack.c.l.b16 %v1240
    %v1855 = vunpack.c.h.b16 %v1240
    %v1856 = vunpack.c.l.b16 %v1241
    %v1857 = vunpack.c.h.b16 %v1241
    %v1858 = vunpack.c.l.b16 %v1242
    %v1859 = vunpack.c.h.b16 %v1242
    %v1860 = vunpack.c.l.b16 %v1243
    %v1861 = vunpack.c.h.b16 %v1243
    %v1862 = vunpack.c.l.b16 %v1244
    %v1863 = vunpack.c.h.b16 %v1244
    %v1864 = vunpack.c.l.b16 %v1245
    %v1865 = vunpack.c.h.b16 %v1245
    %v1866 = vunpack.c.l.b16 %v1246
    %v1867 = vunpack.c.h.b16 %v1246
    %v1868 = vunpack.c.l.b16 %v1247
    %v1869 = vunpack.c.h.b16 %v1247
    %v1870 = vunpack.c.l.b16 %v1248
    %v1871 = vunpack.c.h.b16 %v1248
    %v1872 = vunpack.c.l.b16 %v1249
    %v1873 = vunpack.c.h.b16 %v1249
    %v1874 = vunpack.c.l.b16 %v1250
    %v1875 = vunpack.c.h.b16 %v1250
    %v1876 = vunpack.c.l.b16 %v1251
    %v1877 = vunpack.c.h.b16 %v1251
    %v1878 = vunpack.c.l.b16 %v1252
    %v1879 = vunpack.c.h.b16 %v1252
    %v1880 = vunpack.c.l.b16 %v1253
    %v1881 = vunpack.c.h.b16 %v1253
    %v1882 = vunpack.c.l.b16 %v1254
    %v1883 = vunpack.c.h.b16 %v1254
    %v1884 = vunpack.c.l.b16 %v1255
    %v1885 = vunpack.c.h.b16 %v1255
    %v1886 = vunpack.c.l.b16 %v1256
    %v1887 = vunpack.c.h.b16 %v1256
    %v1888 = vunpack.c.l.b16 %v1257
    %v1889 = vunpack.c.h.b16 %v1257
    %v1890 = vunpack.c.l.b16 %v1258
    %v1891 = vunpack.c.h.b16 %v1258
    %v1892 = vunpack.c.l.b16 %v1259
    %v1893 = vunpack.c.h.b16 %v1259
    %v1894 = vunpack.c.l.b16 %v1260
    %v1895 = vunpack.c.h.b16 %v1260
    %v1896 = vunpack.c.l.b16 %v1261
    %v1897 = vunpack.c.h.b16 %v1261
    %v1898 = vunpack.c.l.b16 %v1262
    %v1899 = vunpack.c.h.b16 %v1262
    %v1900 = vunpack.c.l.b16 %v1263
    %v1901 = vunpack.c.h.b16 %v1263
    %v1902 = vunpack.c.l.b16 %v1264
    %v1903 = vunpack.c.h.b16 %v1264
    %v1904 = vunpack.c.l.b16 %v1265
    %v1905 = vunpack.c.h.b16 %v1265
    %v1906 = vunpack.c.l.b16 %v1266
    %v1907 = vunpack.c.h.b16 %v1266
    %v1908 = vunpack.c.l.b16 %v1267
    %v1909 = vunpack.c.h.b16 %v1267
    %v1910 = vunpack.c.l.b16 %v1268
    %v1911 = vunpack.c.h.b16 %v1268
    %v1912 = vunpack.c.l.b16 %v1269
    %v1913 = vunpack.c.h.b16 %v1269
    %v1914 = vunpack.c.l.b16 %v1270
    %v1915 = vunpack.c.h.b16 %v1270
    %v1916 = vunpack.c.l.b16 %v1271
    %v1917 = vunpack.c.h.b16 %v1271
    %v1918 = vunpack.c.l.b16 %v1272
    %v1919 = vunpack.c.h.b16 %v1272
    %v1920 = vunpack.c.l.b16 %v1273
    %v1921 = vunpack.c.h.b16 %v1273
    %v1922 = vunpack.c.l.b16 %v1274
    %v1923 = vunpack.c.h.b16 %v1274
    %v1924 = vunpack.c.l.b16 %v1275
    %v1925 = vunpack.c.h.b16 %v1275
    %v1926 = vunpack.c.l.b16 %v1276
    %v1927 = vunpack.c.h.b16 %v1276
    %v1928 = vunpack.c.l.b16 %v1277
    %v1929 = vunpack.c.h.b16 %v1277
    %v1930 = vunpack.c.l.b16 %v1278
    %v1931 = vunpack.c.h.b16 %v1278
    %v1932 = vunpack.c.l.b16 %v1279
    %v1933 = vunpack.c.h.b16 %v1279
    %v1934 = vunpack.c.l.b16 %v1280
    %v1935 = vunpack.c.h.b16 %v1280
    %v1936 = vunpack.c.l.b16 %v1281
    %v1937 = vunpack.c.h.b16 %v1281
    %v1938 = vunpack.c.l.b16 %v1282
    %v1939 = vunpack.c.h.b16 %v1282
    %v1940 = vunpack.c.l.b16 %v1283
    %v1941 = vunpack.c.h.b16 %v1283
    %v1942 = vunpack.c.l.b16 %v1284
    %v1943 = vunpack.c.h.b16 %v1284
    %v1944 = vunpack.c.l.b16 %v1285
    %v1945 = vunpack.c.h.b16 %v1285
    %v1946 = vunpack.c.l.b16 %v1286
    %v1947 = vunpack.c.h.b16 %v1286
    %v1948 = vunpack.c.l.b16 %v1287
    %v1949 = vunpack.c.h.b16 %v1287
    %v1950 = vunpack.c.l.b16 %v1288
    %v1951 = vunpack.c.h.b16 %v1288
    %v1952 = vunpack.c.l.b16 %v1289
    %v1953 = vunpack.c.h.b16 %v1289
    %v1954 = vunpack.c.l.b16 %v1290
    %v1955 = vunpack.c.h.b16 %v1290
    %v1956 = vunpack.c.l.b16 %v1291
    %v1957 = vunpack.c.h.b16 %v1291
    %v1958 = vunpack.c.l.b16 %v1292
    %v1959 = vunpack.c.h.b16 %v1292
    %v1960 = vunpack.c.l.b16 %v1293
    %v1961 = vunpack.c.h.b16 %v1293
    %v1962 = vunpack.c.l.b16 %v1294
    %v1963 = vunpack.c.h.b16 %v1294
    %v1964 = vunpack.c.l.b16 %v1295
    %v1965 = vunpack.c.h.b16 %v1295
    %v1966 = vunpack.c.l.b16 %v1296
    %v1967 = vunpack.c.h.b16 %v1296
    %v1968 = vunpack.c.l.b16 %v1297
    %v1969 = vunpack.c.h.b16 %v1297
    %v1970 = vunpack.c.l.b16 %v1298
    %v1971 = vunpack.c.h.b16 %v1298
    %v1972 = vunpack.c.l.b16 %v1299
    %v1973 = vunpack.c.h.b16 %v1299
    %v1974 = vunpack.c.l.b16 %v1300
    %v1975 = vunpack.c.h.b16 %v1300
    %v1976 = vunpack.c.l.b16 %v1301
    %v1977 = vunpack.c.h.b16 %v1301
    %v1978 = vunpack.c.l.b16 %v1302
    %v1979 = vunpack.c.h.b16 %v1302
    %v1980 = vunpack.c.l.b16 %v1303
    %v1981 = vunpack.c.h.b16 %v1303
    %v1982 = vunpack.c.l.b16 %v1304
    %v1983 = vunpack.c.h.b16 %v1304
    %v1984 = vunpack.c.l.b16 %v1305
    %v1985 = vunpack.c.h.b16 %v1305
    %v1986 = vunpack.c.l.b16 %v1306
    %v1987 = vunpack.c.h.b16 %v1306
    %v1988 = vunpack.c.l.b16 %v1307
    %v1989 = vunpack.c.h.b16 %v1307
    %v1990 = vunpack.c.l.b16 %v1308
    %v1991 = vunpack.c.h.b16 %v1308
    %v1992 = vunpack.c.l.b16 %v1309
    %v1993 = vunpack.c.h.b16 %v1309
    %v1994 = vunpack.c.l.b16 %v1310
    %v1995 = vunpack.c.h.b16 %v1310
    %v1996 = vunpack.c.l.b16 %v1311
    %v1997 = vunpack.c.h.b16 %v1311
    %v1998 = vunpack.c.l.b16 %v1312
    %v1999 = vunpack.c.h.b16 %v1312
    %v2000 = vunpack.c.l.b16 %v1313
    %v2001 = vunpack.c.h.b16 %v1313
    %v2002 = vunpack.c.l.b16 %v1314
    %v2003 = vunpack.c.h.b16 %v1314
    %v2004 = vunpack.c.l.b16 %v1315
    %v2005 = vunpack.c.h.b16 %v1315
    %v2006 = vunpack.c.l.b16 %v1316
    %v2007 = vunpack.c.h.b16 %v1316
    %v2008 = vunpack.c.l.b16 %v1317
    %v2009 = vunpack.c.h.b16 %v1317
    %v2010 = vunpack.c.l.b16 %v1318
    %v2011 = vunpack.c.h.b16 %v1318
    %v2012 = vunpack.c.l.b16 %v1319
    %v2013 = vunpack.c.h.b16 %v1319
    %v2014 = vunpack.c.l.b16 %v1320
    %v2015 = vunpack.c.h.b16 %v1320
    %v2016 = vunpack.c.l.b16 %v1321
    %v2017 = vunpack.c.h.b16 %v1321
    %v2018 = vunpack.c.l.b16 %v1322
    %v2019 = vunpack.c.h.b16 %v1322
    %v2020 = vunpack.c.l.b16 %v1323
    %v2021 = vunpack.c.h.b16 %v1323
    %v2022 = vunpack.c.l.b16 %v1324
    %v2023 = vunpack.c.h.b16 %v1324
    %v2024 = vunpack.c.l.b16 %v1325
    %v2025 = vunpack.c.h.b16 %v1325
    %v2026 = vunpack.c.l.b16 %v1326
    %v2027 = vunpack.c.h.b16 %v1326
    %v2028 = vunpack.c.l.b16 %v1327
    %v2029 = vunpack.c.h.b16 %v1327
    %v2030 = vunpack.c.l.b16 %v1328
    %v2031 = vunpack.c.h.b16 %v1328
    %v2032 = vunpack.c.l.b16 %v1329
    %v2033 = vunpack.c.h.b16 %v1329
    %v2034 = vunpack.c.l.b16 %v1330
    %v2035 = vunpack.c.h.b16 %v1330
    %v2036 = vunpack.c.l.b16 %v1331
    %v2037 = vunpack.c.h.b16 %v1331
    %v2038 = vunpack.c.l.b16 %v1332
    %v2039 = vunpack.c.h.b16 %v1332
    %v2040 = vunpack.c.l.b16 %v1333
    %v2041 = vunpack.c.h.b16 %v1333
    %v2042 = vunpack.c.l.b16 %v1334
    %v2043 = vunpack.c.h.b16 %v1334
    %v2044 = vunpack.c.l.b16 %v1335
    %v2045 = vunpack.c.h.b16 %v1335
    %v2046 = vunpack.c.l.b16 %v1336
    %v2047 = vunpack.c.h.b16 %v1336
    %v2048 = vunpack.c.l.b16 %v1337
    %v2049 = vunpack.c.h.b16 %v1337
    %v2050 = vunpack.c.l.b16 %v1338
    %v2051 = vunpack.c.h.b16 %v1338
    %v2052 = vunpack.c.l.b16 %v1339
    %v2053 = vunpack.c.h.b16 %v1339
    %v2054 = vunpack.c.l.b16 %v1340
    %v2055 = vunpack.c.h.b16 %v1340
    %v2056 = vunpack.c.l.b16 %v1341
    %v2057 = vunpack.c.h.b16 %v1341
    %v2058 = vunpack.c.l.b16 %v1342
    %v2059 = vunpack.c.h.b16 %v1342
    %v2060 = vunpack.c.l.b16 %v1343
    %v2061 = vunpack.c.h.b16 %v1343
    %v2062 = vunpack.c.l.b16 %v1344
    %v2063 = vunpack.c.h.b16 %v1344
    %v2064 = vunpack.c.l.b16 %v1345
    %v2065 = vunpack.c.h.b16 %v1345
    %v2066 = vunpack.c.l.b16 %v1346
    %v2067 = vunpack.c.h.b16 %v1346
    %v2068 = vunpack.c.l.b16 %v1347
    %v2069 = vunpack.c.h.b16 %v1347
    %v2070 = vunpack.c.l.b16 %v1348
    %v2071 = vunpack.c.h.b16 %v1348
    %v2072 = vunpack.c.l.b16 %v1349
    %v2073 = vunpack.c.h.b16 %v1349
    %v2074 = vunpack.c.l.b16 %v1350
    %v2075 = vunpack.c.h.b16 %v1350
    %v2076 = vunpack.c.l.b16 %v1351
    %v2077 = vunpack.c.h.b16 %v1351
    %v2078 = vunpack.c.l.b16 %v1352
    %v2079 = vunpack.c.h.b16 %v1352
    %v2080 = vunpack.c.l.b16 %v1353
    %v2081 = vunpack.c.h.b16 %v1353
    %v2082 = vunpack.c.l.b16 %v1354
    %v2083 = vunpack.c.h.b16 %v1354
    %v2084 = vunpack.c.l.b16 %v1355
    %v2085 = vunpack.c.h.b16 %v1355
    %v2086 = vunpack.c.l.b16 %v1356
    %v2087 = vunpack.c.h.b16 %v1356
    %v2088 = vunpack.c.l.b16 %v1357
    %v2089 = vunpack.c.h.b16 %v1357
    %v2090 = vunpack.c.l.b16 %v1358
    %v2091 = vunpack.c.h.b16 %v1358
    %v2092 = vunpack.c.l.b16 %v1359
    %v2093 = vunpack.c.h.b16 %v1359
    %v2094 = vunpack.c.l.b16 %v1360
    %v2095 = vunpack.c.h.b16 %v1360
    %v2096 = vunpack.c.l.b16 %v1361
    %v2097 = vunpack.c.h.b16 %v1361
    %v2098 = vunpack.c.l.b16 %v1362
    %v2099 = vunpack.c.h.b16 %v1362
    %v2100 = vunpack.c.l.b16 %v1363
    %v2101 = vunpack.c.h.b16 %v1363
    %v2102 = vunpack.c.l.b16 %v1364
    %v2103 = vunpack.c.h.b16 %v1364
    %v2104 = vunpack.c.l.b16 %v1365
    %v2105 = vunpack.c.h.b16 %v1365
    %v2106 = vunpack.c.l.b16 %v1366
    %v2107 = vunpack.c.h.b16 %v1366
    %v2108 = vunpack.c.l.b16 %v1367
    %v2109 = vunpack.c.h.b16 %v1367
    %v2110 = vunpack.c.l.b16 %v1368
    %v2111 = vunpack.c.h.b16 %v1368
    %v2112 = vunpack.c.l.b16 %v1369
    %v2113 = vunpack.c.h.b16 %v1369
    %v2114 = vunpack.c.l.b16 %v1370
    %v2115 = vunpack.c.h.b16 %v1370
    %v2116 = vunpack.c.l.b16 %v1371
    %v2117 = vunpack.c.h.b16 %v1371
    %v2118 = vunpack.c.l.b16 %v1372
    %v2119 = vunpack.c.h.b16 %v1372
    %v2120 = vunpack.c.l.b16 %v1373
    %v2121 = vunpack.c.h.b16 %v1373
    %v2122 = vunpack.c.l.b16 %v1374
    %v2123 = vunpack.c.h.b16 %v1374
    %v2124 = vunpack.c.l.b16 %v1375
    %v2125 = vunpack.c.h.b16 %v1375
    %v2126 = vunpack.c.l.b16 %v1376
    %v2127 = vunpack.c.h.b16 %v1376
    %v2128 = vunpack.c.l.b16 %v1377
    %v2129 = vunpack.c.h.b16 %v1377
    %v2130 = vunpack.c.l.b16 %v1378
    %v2131 = vunpack.c.h.b16 %v1378
    %v2132 = vunpack.c.l.b16 %v1379
    %v2133 = vunpack.c.h.b16 %v1379
    %v2134 = vunpack.c.l.b16 %v1380
    %v2135 = vunpack.c.h.b16 %v1380
    %v2136 = vunpack.c.l.b16 %v1381
    %v2137 = vunpack.c.h.b16 %v1381
    %v2138 = vunpack.c.l.b16 %v1382
    %v2139 = vunpack.c.h.b16 %v1382
    %v2140 = vunpack.c.l.b16 %v1383
    %v2141 = vunpack.c.h.b16 %v1383
    %v2142 = vunpack.c.l.b16 %v1384
    %v2143 = vunpack.c.h.b16 %v1384
    %v2144 = vunpack.c.l.b16 %v1385
    %v2145 = vunpack.c.h.b16 %v1385
    %v2146 = vunpack.c.l.b16 %v1386
    %v2147 = vunpack.c.h.b16 %v1386
    %v2148 = vunpack.c.l.b16 %v1387
    %v2149 = vunpack.c.h.b16 %v1387
    %v2150 = vunpack.c.l.b16 %v1388
    %v2151 = vunpack.c.h.b16 %v1388
    %v2152 = vunpack.c.l.b16 %v1389
    %v2153 = vunpack.c.h.b16 %v1389
    %v2154 = vunpack.c.l.b16 %v1390
    %v2155 = vunpack.c.h.b16 %v1390
    %v2156 = vunpack.c.l.b16 %v1391
    %v2157 = vunpack.c.h.b16 %v1391
    %v2158 = vunpack.c.l.b16 %v1392
    %v2159 = vunpack.c.h.b16 %v1392
    %v2160 = vunpack.c.l.b16 %v1393
    %v2161 = vunpack.c.h.b16 %v1393
    %v2162 = vpack.c.b16 %v1654, %v1650
    %v2163 = vpack.c.b16 %v1655, %v1651
    %v2164 = vpack.c.b16 %v1656, %v1652
    %v2165 = vpack.c.b16 %v1657, %v1653
    %v2166 = vpack.c.b16 %v1662, %v1658
    %v2167 = vpack.c.b16 %v1663, %v1659
    %v2168 = vpack.c.b16 %v1664, %v1660
    %v2169 = vpack.c.b16 %v1665, %v1661
    %v2170 = vpack.c.b16 %v1670, %v1666
    %v2171 = vpack.c.b16 %v1671, %v1667
    %v2172 = vpack.c.b16 %v1672, %v1668
    %v2173 = vpack.c.b16 %v1673, %v1669
    %v2174 = vpack.c.b16 %v1678, %v1674
    %v2175 = vpack.c.b16 %v1679, %v1675
    %v2176 = vpack.c.b16 %v1680, %v1676
    %v2177 = vpack.c.b16 %v1681, %v1677
    %v2178 = vpack.c.b16 %v1686, %v1682
    %v2179 = vpack.c.b16 %v1687, %v1683
    %v2180 = vpack.c.b16 %v1688, %v1684
    %v2181 = vpack.c.b16 %v1689, %v1685
    %v2182 = vpack.c.b16 %v1694, %v1690
    %v2183 = vpack.c.b16 %v1695, %v1691
    %v2184 = vpack.c.b16 %v1696, %v1692
    %v2185 = vpack.c.b16 %v1697, %v1693
    %v2186 = vpack.c.b16 %v1702, %v1698
    %v2187 = vpack.c.b16 %v1703, %v1699
    %v2188 = vpack.c.b16 %v1704, %v1700
    %v2189 = vpack.c.b16 %v1705, %v1701
    %v2190 = vpack.c.b16 %v1710, %v1706
    %v2191 = vpack.c.b16 %v1711, %v1707
    %v2192 = vpack.c.b16 %v1712, %v1708
    %v2193 = vpack.c.b16 %v1713, %v1709
    %v2194 = vpack.c.b16 %v1718, %v1714
    %v2195 = vpack.c.b16 %v1719, %v1715
    %v2196 = vpack.c.b16 %v1720, %v1716
    %v2197 = vpack.c.b16 %v1721, %v1717
    %v2198 = vpack.c.b16 %v1726, %v1722
    %v2199 = vpack.c.b16 %v1727, %v1723
    %v2200 = vpack.c.b16 %v1728, %v1724
    %v2201 = vpack.c.b16 %v1729, %v1725
    %v2202 = vpack.c.b16 %v1734, %v1730
    %v2203 = vpack.c.b16 %v1735, %v1731
    %v2204 = vpack.c.b16 %v1736, %v1732
    %v2205 = vpack.c.b16 %v1737, %v1733
    %v2206 = vpack.c.b16 %v1742, %v1738
    %v2207 = vpack.c.b16 %v1743, %v1739
    %v2208 = vpack.c.b16 %v1744, %v1740
    %v2209 = vpack.c.b16 %v1745, %v1741
    %v2210 = vpack.c.b16 %v1750, %v1746
    %v2211 = vpack.c.b16 %v1751, %v1747
    %v2212 = vpack.c.b16 %v1752, %v1748
    %v2213 = vpack.c.b16 %v1753, %v1749
    %v2214 = vpack.c.b16 %v1758, %v1754
    %v2215 = vpack.c.b16 %v1759, %v1755
    %v2216 = vpack.c.b16 %v1760, %v1756
    %v2217 = vpack.c.b16 %v1761, %v1757
    %v2218 = vpack.c.b16 %v1766, %v1762
    %v2219 = vpack.c.b16 %v1767, %v1763
    %v2220 = vpack.c.b16 %v1768, %v1764
    %v2221 = vpack.c.b16 %v1769, %v1765
    %v2222 = vpack.c.b16 %v1774, %v1770
    %v2223 = vpack.c.b16 %v1775, %v1771
    %v2224 = vpack.c.b16 %v1776, %v1772
    %v2225 = vpack.c.b16 %v1777, %v1773
    %v2226 = vpack.c.b16 %v1782, %v1778
    %v2227 = vpack.c.b16 %v1783, %v1779
    %v2228 = vpack.c.b16 %v1784, %v1780
    %v2229 = vpack.c.b16 %v1785, %v1781
    %v2230 = vpack.c.b16 %v1790, %v1786
    %v2231 = vpack.c.b16 %v1791, %v1787
    %v2232 = vpack.c.b16 %v1792, %v1788
    %v2233 = vpack.c.b16 %v1793, %v1789
    %v2234 = vpack.c.b16 %v1798, %v1794
    %v2235 = vpack.c.b16 %v1799, %v1795
    %v2236 = vpack.c.b16 %v1800, %v1796
    %v2237 = vpack.c.b16 %v1801, %v1797
    %v2238 = vpack.c.b16 %v1806, %v1802
    %v2239 = vpack.c.b16 %v1807, %v1803
    %v2240 = vpack.c.b16 %v1808, %v1804
    %v2241 = vpack.c.b16 %v1809, %v1805
    %v2242 = vpack.c.b16 %v1814, %v1810
    %v2243 = vpack.c.b16 %v1815, %v1811
    %v2244 = vpack.c.b16 %v1816, %v1812
    %v2245 = vpack.c.b16 %v1817, %v1813
    %v2246 = vpack.c.b16 %v1822, %v1818
    %v2247 = vpack.c.b16 %v1823, %v1819
    %v2248 = vpack.c.b16 %v1824, %v1820
    %v2249 = vpack.c.b16 %v1825, %v1821
    %v2250 = vpack.c.b16 %v1830, %v1826
    %v2251 = vpack.c.b16 %v1831, %v1827
    %v2252 = vpack.c.b16 %v1832, %v1828
    %v2253 = vpack.c.b16 %v1833, %v1829
    %v2254 = vpack.c.b16 %v1838, %v1834
    %v2255 = vpack.c.b16 %v1839, %v1835
    %v2256 = vpack.c.b16 %v1840, %v1836
    %v2257 = vpack.c.b16 %v1841, %v1837
    %v2258 = vpack.c.b16 %v1846, %v1842
    %v2259 = vpack.c.b16 %v1847, %v1843
    %v2260 = vpack.c.b16 %v1848, %v1844
    %v2261 = vpack.c.b16 %v1849, %v1845
    %v2262 = vpack.c.b16 %v1854, %v1850
    %v2263 = vpack.c.b16 %v1855, %v1851
    %v2264 = vpack.c.b16 %v1856, %v1852
    %v2265 = vpack.c.b16 %v1857, %v1853
    %v2266 = vpack.c.b16 %v1862, %v1858
    %v2267 = vpack.c.b16 %v1863, %v1859
    %v2268 = vpack.c.b16 %v1864, %v1860
    %v2269 = vpack.c.b16 %v1865, %v1861
    %v2270 = vpack.c.b16 %v1870, %v1866
    %v2271 = vpack.c.b16 %v1871, %v1867
    %v2272 = vpack.c.b16 %v1872, %v1868
    %v2273 = vpack.c.b16 %v1873, %v1869
    %v2274 = vpack.c.b16 %v1878, %v1874
    %v2275 = vpack.c.b16 %v1879, %v1875
    %v2276 = vpack.c.b16 %v1880, %v1876
    %v2277 = vpack.c.b16 %v1881, %v1877
    %v2278 = vpack.c.b16 %v1886, %v1882
    %v2279 = vpack.c.b16 %v1887, %v1883
    %v2280 = vpack.c.b16 %v1888, %v1884
    %v2281 = vpack.c.b16 %v1889, %v1885
    %v2282 = vpack.c.b16 %v1894, %v1890
    %v2283 = vpack.c.b16 %v1895, %v1891
    %v2284 = vpack.c.b16 %v1896, %v1892
    %v2285 = vpack.c.b16 %v1897, %v1893
    %v2286 = vpack.c.b16 %v1902, %v1898
    %v2287 = vpack.c.b16 %v1903, %v1899
    %v2288 = vpack.c.b16 %v1904, %v1900
    %v2289 = vpack.c.b16 %v1905, %v1901
    %v2290 = vpack.c.b16 %v1910, %v1906
    %v2291 = vpack.c.b16 %v1911, %v1907
    %v2292 = vpack.c.b16 %v1912, %v1908
    %v2293 = vpack.c.b16 %v1913, %v1909
    %v2294 = vpack.c.b16 %v1918, %v1914
    %v2295 = vpack.c.b16 %v1919, %v1915
    %v2296 = vpack.c.b16 %v1920, %v1916
    %v2297 = vpack.c.b16 %v1921, %v1917
    %v2298 = vpack.c.b16 %v1926, %v1922
    %v2299 = vpack.c.b16 %v1927, %v1923
    %v2300 = vpack.c.b16 %v1928, %v1924
    %v2301 = vpack.c.b16 %v1929, %v1925
    %v2302 = vpack.c.b16 %v1934, %v1930
    %v2303 = vpack.c.b16 %v1935, %v1931
    %v2304 = vpack.c.b16 %v1936, %v1932
    %v2305 = vpack.c.b16 %v1937, %v1933
    %v2306 = vpack.c.b16 %v1942, %v1938
    %v2307 = vpack.c.b16 %v1943, %v1939
    %v2308 = vpack.c.b16 %v1944, %v1940
    %v2309 = vpack.c.b16 %v1945, %v1941
    %v2310 = vpack.c.b16 %v1950, %v1946
    %v2311 = vpack.c.b16 %v1951, %v1947
    %v2312 = vpack.c.b16 %v1952, %v1948
    %v2313 = vpack.c.b16 %v1953, %v1949
    %v2314 = vpack.c.b16 %v1958, %v1954
    %v2315 = vpack.c.b16 %v1959, %v1955
    %v2316 = vpack.c.b16 %v1960, %v1956
    %v2317 = vpack.c.b16 %v1961, %v1957
    %v2318 = vpack.c.b16 %v1966, %v1962
    %v2319 = vpack.c.b16 %v1967, %v1963
    %v2320 = vpack.c.b16 %v1968, %v1964
    %v2321 = vpack.c.b16 %v1969, %v1965
    %v2322 = vpack.c.b16 %v1974, %v1970
    %v2323 = vpack.c.b16 %v1975, %v1971
    %v2324 = vpack.c.b16 %v1976, %v1972
    %v2325 = vpack.c.b16 %v1977, %v1973
    %v2326 = vpack.c.b16 %v1982, %v1978
    %v2327 = vpack.c.b16 %v1983, %v1979
    %v2328 = vpack.c.b16 %v1984, %v1980
    %v2329 = vpack.c.b16 %v1985, %v1981
    %v2330 = vpack.c.b16 %v1990, %v1986
    %v2331 = vpack.c.b16 %v1991, %v1987
    %v2332 = vpack.c.b16 %v1992, %v1988
    %v2333 = vpack.c.b16 %v1993, %v1989
    %v2334 = vpack.c.b16 %v1998, %v1994
    %v2335 = vpack.c.b16 %v1999, %v1995
    %v2336 = vpack.c.b16 %v2000, %v1996
    %v2337 = vpack.c.b16 %v2001, %v1997
    %v2338 = vpack.c.b16 %v2006, %v2002
    %v2339 = vpack.c.b16 %v2007, %v2003
    %v2340 = vpack.c.b16 %v2008, %v2004
    %v2341 = vpack.c.b16 %v2009, %v2005
    %v2342 = vpack.c.b16 %v2014, %v2010
    %v2343 = vpack.c.b16 %v2015, %v2011
    %v2344 = vpack.c.b16 %v2016, %v2012
    %v2345 = vpack.c.b16 %v2017, %v2013
    %v2346 = vpack.c.b16 %v2022, %v2018
    %v2347 = vpack.c.b16 %v2023, %v2019
    %v2348 = vpack.c.b16 %v2024, %v2020
    %v2349 = vpack.c.b16 %v2025, %v2021
    %v2350 = vpack.c.b16 %v2030, %v2026
    %v2351 = vpack.c.b16 %v2031, %v2027
    %v2352 = vpack.c.b16 %v2032, %v2028
    %v2353 = vpack.c.b16 %v2033, %v2029
    %v2354 = vpack.c.b16 %v2038, %v2034
    %v2355 = vpack.c.b16 %v2039, %v2035
    %v2356 = vpack.c.b16 %v2040, %v2036
    %v2357 = vpack.c.b16 %v2041, %v2037
    %v2358 = vpack.c.b16 %v2046, %v2042
    %v2359 = vpack.c.b16 %v2047, %v2043
    %v2360 = vpack.c.b16 %v2048, %v2044
    %v2361 = vpack.c.b16 %v2049, %v2045
    %v2362 = vpack.c.b16 %v2054, %v2050
    %v2363 = vpack.c.b16 %v2055, %v2051
    %v2364 = vpack.c.b16 %v2056, %v2052
    %v2365 = vpack.c.b16 %v2057, %v2053
    %v2366 = vpack.c.b16 %v2062, %v2058
    %v2367 = vpack.c.b16 %v2063, %v2059
    %v2368 = vpack.c.b16 %v2064, %v2060
    %v2369 = vpack.c.b16 %v2065, %v2061
    %v2370 = vpack.c.b16 %v2070, %v2066
    %v2371 = vpack.c.b16 %v2071, %v2067
    %v2372 = vpack.c.b16 %v2072, %v2068
    %v2373 = vpack.c.b16 %v2073, %v2069
    %v2374 = vpack.c.b16 %v2078, %v2074
    %v2375 = vpack.c.b16 %v2079, %v2075
    %v2376 = vpack.c.b16 %v2080, %v2076
    %v2377 = vpack.c.b16 %v2081, %v2077
    %v2378 = vpack.c.b16 %v2086, %v2082
    %v2379 = vpack.c.b16 %v2087, %v2083
    %v2380 = vpack.c.b16 %v2088, %v2084
    %v2381 = vpack.c.b16 %v2089, %v2085
    %v2382 = vpack.c.b16 %v2094, %v2090
    %v2383 = vpack.c.b16 %v2095, %v2091
    %v2384 = vpack.c.b16 %v2096, %v2092
    %v2385 = vpack.c.b16 %v2097, %v2093
    %v2386 = vpack.c.b16 %v2102, %v2098
    %v2387 = vpack.c.b16 %v2103, %v2099
    %v2388 = vpack.c.b16 %v2104, %v2100
    %v2389 = vpack.c.b16 %v2105, %v2101
    %v2390 = vpack.c.b16 %v2110, %v2106
    %v2391 = vpack.c.b16 %v2111, %v2107
    %v2392 = vpack.c.b16 %v2112, %v2108
    %v2393 = vpack.c.b16 %v2113, %v2109
    %v2394 = vpack.c.b16 %v2118, %v2114
    %v2395 = vpack.c.b16 %v2119, %v2115
    %v2396 = vpack.c.b16 %v2120, %v2116
    %v2397 = vpack.c.b16 %v2121, %v2117
    %v2398 = vpack.c.b16 %v2126, %v2122
    %v2399 = vpack.c.b16 %v2127, %v2123
    %v2400 = vpack.c.b16 %v2128, %v2124
    %v2401 = vpack.c.b16 %v2129, %v2125
    %v2402 = vpack.c.b16 %v2134, %v2130
    %v2403 = vpack.c.b16 %v2135, %v2131
    %v2404 = vpack.c.b16 %v2136, %v2132
    %v2405 = vpack.c.b16 %v2137, %v2133
    %v2406 = vpack.c.b16 %v2142, %v2138
    %v2407 = vpack.c.b16 %v2143, %v2139
    %v2408 = vpack.c.b16 %v2144, %v2140
    %v2409 = vpack.c.b16 %v2145, %v2141
    %v2410 = vpack.c.b16 %v2150, %v2146
    %v2411 = vpack.c.b16 %v2151, %v2147
    %v2412 = vpack.c.b16 %v2152, %v2148
    %v2413 = vpack.c.b16 %v2153, %v2149
    %v2414 = vpack.c.b16 %v2158, %v2154
    %v2415 = vpack.c.b16 %v2159, %v2155
    %v2416 = vpack.c.b16 %v2160, %v2156
    %v2417 = vpack.c.b16 %v2161, %v2157
    %2674 = vmatprep.subr.bf16.mxu0 %v2191
    %2675 = vmatpush1.bf16.msra.mxu0 %v2190
    %2676 = vmatprep.subr.bf16.mxu0 %v2187
    %2677 = vmatpush1.bf16.msra.mxu0 %v2186
    %2678 = vmatprep.subr.bf16.mxu0 %v2183
    %2679 = vmatpush1.bf16.msra.mxu0 %v2182
    %2680 = vmatprep.subr.bf16.mxu0 %v2179
    %2681 = vmatpush1.bf16.msra.mxu0 %v2178
    %2682 = vmatprep.subr.bf16.mxu0 %v2175
    %2683 = vmatpush1.bf16.msra.mxu0 %v2174
    %2684 = vmatprep.subr.bf16.mxu0 %v2171
    %2685 = vmatpush1.bf16.msra.mxu0 %v2170
    %2686 = vmatprep.subr.bf16.mxu0 %v2167
    %2687 = vmatpush1.bf16.msra.mxu0 %v2166
    %2688 = vmatprep.subr.bf16.mxu0 %v2163
    %2689 = vmatpush1.bf16.msra.mxu0 %v2162
    %2690 = vmatprep.subr.bf16.mxu0 %v2223
    %2691 = vmatpush2.bf16.msra.mxu0 %v2222
    %2692 = vmatprep.subr.bf16.mxu0 %v2219
    %2693 = vmatpush2.bf16.msra.mxu0 %v2218
    %2694 = vmatprep.subr.bf16.mxu0 %v2215
    %2695 = vmatpush2.bf16.msra.mxu0 %v2214
    %2696 = vmatprep.subr.bf16.mxu0 %v2211
    %2697 = vmatpush2.bf16.msra.mxu0 %v2210
    %2698 = vmatprep.subr.bf16.mxu0 %v2207
    %2699 = vmatpush2.bf16.msra.mxu0 %v2206
    %2700 = vmatprep.subr.bf16.mxu0 %v2203
    %2701 = vmatpush2.bf16.msra.mxu0 %v2202
    %2702 = vmatprep.subr.bf16.mxu0 %v2199
    %2703 = vmatpush2.bf16.msra.mxu0 %v2198
    %2704 = vmatprep.subr.bf16.mxu0 %v2195
    %2705 = vmatpush2.bf16.msra.mxu0 %v2194
    %2706 = vmatprep.mubr.bf16.mxu0 %v1131
    %2707 = vmatmul.mubr.bf16.gmra.mxu0 %v1130
    %v2708 = vpop.f32.mrf.mxu0
    %v2709 = vadd.f32 0.0, %v2708
    %v2710 = vpop.f32.mrf.mxu0
    %v2711 = vadd.f32 0.0, %v2710
    %v2712 = vpop.f32.mrf.mxu0
    %v2713 = vadd.f32 0.0, %v2712
    %v2714 = vpop.f32.mrf.mxu0
    %v2715 = vadd.f32 0.0, %v2714
    %2716 = vdwg.mxu0
    %2717 = vmatprep.subr.bf16.mxu0 %v2255
    %2718 = vmatpush1.bf16.msra.mxu0 %v2254
    %2719 = vmatprep.subr.bf16.mxu0 %v2251
    %2720 = vmatpush1.bf16.msra.mxu0 %v2250
    %2721 = vmatprep.subr.bf16.mxu0 %v2247
    %2722 = vmatpush1.bf16.msra.mxu0 %v2246
    %2723 = vmatprep.subr.bf16.mxu0 %v2243
    %2724 = vmatpush1.bf16.msra.mxu0 %v2242
    %2725 = vmatprep.subr.bf16.mxu0 %v2239
    %2726 = vmatpush1.bf16.msra.mxu0 %v2238
    %2727 = vmatprep.subr.bf16.mxu0 %v2235
    %2728 = vmatpush1.bf16.msra.mxu0 %v2234
    %2729 = vmatprep.subr.bf16.mxu0 %v2231
    %2730 = vmatpush1.bf16.msra.mxu0 %v2230
    %2731 = vmatprep.subr.bf16.mxu0 %v2227
    %2732 = vmatpush1.bf16.msra.mxu0 %v2226
    %2733 = vmatprep.subr.bf16.mxu0 %v2287
    %2734 = vmatpush2.bf16.msra.mxu0 %v2286
    %2735 = vmatprep.subr.bf16.mxu0 %v2283
    %2736 = vmatpush2.bf16.msra.mxu0 %v2282
    %2737 = vmatprep.subr.bf16.mxu0 %v2279
    %2738 = vmatpush2.bf16.msra.mxu0 %v2278
    %2739 = vmatprep.subr.bf16.mxu0 %v2275
    %2740 = vmatpush2.bf16.msra.mxu0 %v2274
    %2741 = vmatprep.subr.bf16.mxu0 %v2271
    %2742 = vmatpush2.bf16.msra.mxu0 %v2270
    %2743 = vmatprep.subr.bf16.mxu0 %v2267
    %2744 = vmatpush2.bf16.msra.mxu0 %v2266
    %2745 = vmatprep.subr.bf16.mxu0 %v2263
    %2746 = vmatpush2.bf16.msra.mxu0 %v2262
    %2747 = vmatprep.subr.bf16.mxu0 %v2259
    %2748 = vmatpush2.bf16.msra.mxu0 %v2258
    %2749 = vmatprep.mubr.bf16.mxu0 %v1133
    %2750 = vmatmul.mubr.bf16.gmra.mxu0 %v1132
    %v2751 = vpop.f32.mrf.mxu0
    %v2752 = vadd.f32 %v2709, %v2751
    %v2753 = vpop.f32.mrf.mxu0
    %v2754 = vadd.f32 %v2711, %v2753
    %v2755 = vpop.f32.mrf.mxu0
    %v2756 = vadd.f32 %v2713, %v2755
    %v2757 = vpop.f32.mrf.mxu0
    %v2758 = vadd.f32 %v2715, %v2757
    %2759 = vdwg.mxu0
    %2760 = vmatprep.subr.bf16.mxu0 %v2319
    %2761 = vmatpush1.bf16.msra.mxu0 %v2318
    %2762 = vmatprep.subr.bf16.mxu0 %v2315
    %2763 = vmatpush1.bf16.msra.mxu0 %v2314
    %2764 = vmatprep.subr.bf16.mxu0 %v2311
    %2765 = vmatpush1.bf16.msra.mxu0 %v2310
    %2766 = vmatprep.subr.bf16.mxu0 %v2307
    %2767 = vmatpush1.bf16.msra.mxu0 %v2306
    %2768 = vmatprep.subr.bf16.mxu0 %v2303
    %2769 = vmatpush1.bf16.msra.mxu0 %v2302
    %2770 = vmatprep.subr.bf16.mxu0 %v2299
    %2771 = vmatpush1.bf16.msra.mxu0 %v2298
    %2772 = vmatprep.subr.bf16.mxu0 %v2295
    %2773 = vmatpush1.bf16.msra.mxu0 %v2294
    %2774 = vmatprep.subr.bf16.mxu0 %v2291
    %2775 = vmatpush1.bf16.msra.mxu0 %v2290
    %2776 = vmatprep.subr.bf16.mxu0 %v2351
    %2777 = vmatpush2.bf16.msra.mxu0 %v2350
    %2778 = vmatprep.subr.bf16.mxu0 %v2347
    %2779 = vmatpush2.bf16.msra.mxu0 %v2346
    %2780 = vmatprep.subr.bf16.mxu0 %v2343
    %2781 = vmatpush2.bf16.msra.mxu0 %v2342
    %2782 = vmatprep.subr.bf16.mxu0 %v2339
    %2783 = vmatpush2.bf16.msra.mxu0 %v2338
    %2784 = vmatprep.subr.bf16.mxu0 %v2335
    %2785 = vmatpush2.bf16.msra.mxu0 %v2334
    %2786 = vmatprep.subr.bf16.mxu0 %v2331
    %2787 = vmatpush2.bf16.msra.mxu0 %v2330
    %2788 = vmatprep.subr.bf16.mxu0 %v2327
    %2789 = vmatpush2.bf16.msra.mxu0 %v2326
    %2790 = vmatprep.subr.bf16.mxu0 %v2323
    %2791 = vmatpush2.bf16.msra.mxu0 %v2322
    %2792 = vmatprep.mubr.bf16.mxu0 %v1135
    %2793 = vmatmul.mubr.bf16.gmra.mxu0 %v1134
    %v2794 = vpop.f32.mrf.mxu0
    %v2795 = vadd.f32 %v2752, %v2794
    %v2796 = vpop.f32.mrf.mxu0
    %v2797 = vadd.f32 %v2754, %v2796
    %v2798 = vpop.f32.mrf.mxu0
    %v2799 = vadd.f32 %v2756, %v2798
    %v2800 = vpop.f32.mrf.mxu0
    %v2801 = vadd.f32 %v2758, %v2800
    %2802 = vdwg.mxu0
    %2803 = vmatprep.subr.bf16.mxu0 %v2383
    %2804 = vmatpush1.bf16.msra.mxu0 %v2382
    %2805 = vmatprep.subr.bf16.mxu0 %v2379
    %2806 = vmatpush1.bf16.msra.mxu0 %v2378
    %2807 = vmatprep.subr.bf16.mxu0 %v2375
    %2808 = vmatpush1.bf16.msra.mxu0 %v2374
    %2809 = vmatprep.subr.bf16.mxu0 %v2371
    %2810 = vmatpush1.bf16.msra.mxu0 %v2370
    %2811 = vmatprep.subr.bf16.mxu0 %v2367
    %2812 = vmatpush1.bf16.msra.mxu0 %v2366
    %2813 = vmatprep.subr.bf16.mxu0 %v2363
    %2814 = vmatpush1.bf16.msra.mxu0 %v2362
    %2815 = vmatprep.subr.bf16.mxu0 %v2359
    %2816 = vmatpush1.bf16.msra.mxu0 %v2358
    %2817 = vmatprep.subr.bf16.mxu0 %v2355
    %2818 = vmatpush1.bf16.msra.mxu0 %v2354
    %2819 = vmatprep.subr.bf16.mxu0 %v2415
    %2820 = vmatpush2.bf16.msra.mxu0 %v2414
    %2821 = vmatprep.subr.bf16.mxu0 %v2411
    %2822 = vmatpush2.bf16.msra.mxu0 %v2410
    %2823 = vmatprep.subr.bf16.mxu0 %v2407
    %2824 = vmatpush2.bf16.msra.mxu0 %v2406
    %2825 = vmatprep.subr.bf16.mxu0 %v2403
    %2826 = vmatpush2.bf16.msra.mxu0 %v2402
    %2827 = vmatprep.subr.bf16.mxu0 %v2399
    %2828 = vmatpush2.bf16.msra.mxu0 %v2398
    %2829 = vmatprep.subr.bf16.mxu0 %v2395
    %2830 = vmatpush2.bf16.msra.mxu0 %v2394
    %2831 = vmatprep.subr.bf16.mxu0 %v2391
    %2832 = vmatpush2.bf16.msra.mxu0 %v2390
    %2833 = vmatprep.subr.bf16.mxu0 %v2387
    %2834 = vmatpush2.bf16.msra.mxu0 %v2386
    %2835 = vmatprep.mubr.bf16.mxu0 %v1137
    %2836 = vmatmul.mubr.bf16.gmra.mxu0 %v1136
    %v2837 = vpop.f32.mrf.mxu0
    %v2838 = vadd.f32 %v2795, %v2837
    %v2839 = vpop.f32.mrf.mxu0
    %v2840 = vadd.f32 %v2797, %v2839
    %v2841 = vpop.f32.mrf.mxu0
    %v2842 = vadd.f32 %v2799, %v2841
    %v2843 = vpop.f32.mrf.mxu0
    %v2844 = vadd.f32 %v2801, %v2843
    %2845 = vdwg.mxu0
    %2846 = vmatprep.subr.bf16.mxu0 %v2193
    %2847 = vmatpush1.bf16.msra.mxu0 %v2192
    %2848 = vmatprep.subr.bf16.mxu0 %v2189
    %2849 = vmatpush1.bf16.msra.mxu0 %v2188
    %2850 = vmatprep.subr.bf16.mxu0 %v2185
    %2851 = vmatpush1.bf16.msra.mxu0 %v2184
    %2852 = vmatprep.subr.bf16.mxu0 %v2181
    %2853 = vmatpush1.bf16.msra.mxu0 %v2180
    %2854 = vmatprep.subr.bf16.mxu0 %v2177
    %2855 = vmatpush1.bf16.msra.mxu0 %v2176
    %2856 = vmatprep.subr.bf16.mxu0 %v2173
    %2857 = vmatpush1.bf16.msra.mxu0 %v2172
    %2858 = vmatprep.subr.bf16.mxu0 %v2169
    %2859 = vmatpush1.bf16.msra.mxu0 %v2168
    %2860 = vmatprep.subr.bf16.mxu0 %v2165
    %2861 = vmatpush1.bf16.msra.mxu0 %v2164
    %2862 = vmatprep.subr.bf16.mxu0 %v2225
    %2863 = vmatpush2.bf16.msra.mxu0 %v2224
    %2864 = vmatprep.subr.bf16.mxu0 %v2221
    %2865 = vmatpush2.bf16.msra.mxu0 %v2220
    %2866 = vmatprep.subr.bf16.mxu0 %v2217
    %2867 = vmatpush2.bf16.msra.mxu0 %v2216
    %2868 = vmatprep.subr.bf16.mxu0 %v2213
    %2869 = vmatpush2.bf16.msra.mxu0 %v2212
    %2870 = vmatprep.subr.bf16.mxu0 %v2209
    %2871 = vmatpush2.bf16.msra.mxu0 %v2208
    %2872 = vmatprep.subr.bf16.mxu0 %v2205
    %2873 = vmatpush2.bf16.msra.mxu0 %v2204
    %2874 = vmatprep.subr.bf16.mxu0 %v2201
    %2875 = vmatpush2.bf16.msra.mxu0 %v2200
    %2876 = vmatprep.subr.bf16.mxu0 %v2197
    %2877 = vmatpush2.bf16.msra.mxu0 %v2196
    %2878 = vmatprep.mubr.bf16.mxu0 %v1131
    %2879 = vmatmul.mubr.bf16.gmra.mxu0 %v1130
    %v2880 = vpop.f32.mrf.mxu0
    %v2881 = vadd.f32 0.0, %v2880
    %v2882 = vpop.f32.mrf.mxu0
    %v2883 = vadd.f32 0.0, %v2882
    %v2884 = vpop.f32.mrf.mxu0
    %v2885 = vadd.f32 0.0, %v2884
    %v2886 = vpop.f32.mrf.mxu0
    %v2887 = vadd.f32 0.0, %v2886
    %2888 = vdwg.mxu0
    %2889 = vmatprep.subr.bf16.mxu0 %v2257
    %2890 = vmatpush1.bf16.msra.mxu0 %v2256
    %2891 = vmatprep.subr.bf16.mxu0 %v2253
    %2892 = vmatpush1.bf16.msra.mxu0 %v2252
    %2893 = vmatprep.subr.bf16.mxu0 %v2249
    %2894 = vmatpush1.bf16.msra.mxu0 %v2248
    %2895 = vmatprep.subr.bf16.mxu0 %v2245
    %2896 = vmatpush1.bf16.msra.mxu0 %v2244
    %2897 = vmatprep.subr.bf16.mxu0 %v2241
    %2898 = vmatpush1.bf16.msra.mxu0 %v2240
    %2899 = vmatprep.subr.bf16.mxu0 %v2237
    %2900 = vmatpush1.bf16.msra.mxu0 %v2236
    %2901 = vmatprep.subr.bf16.mxu0 %v2233
    %2902 = vmatpush1.bf16.msra.mxu0 %v2232
    %2903 = vmatprep.subr.bf16.mxu0 %v2229
    %2904 = vmatpush1.bf16.msra.mxu0 %v2228
    %2905 = vmatprep.subr.bf16.mxu0 %v2289
    %2906 = vmatpush2.bf16.msra.mxu0 %v2288
    %2907 = vmatprep.subr.bf16.mxu0 %v2285
    %2908 = vmatpush2.bf16.msra.mxu0 %v2284
    %2909 = vmatprep.subr.bf16.mxu0 %v2281
    %2910 = vmatpush2.bf16.msra.mxu0 %v2280
    %2911 = vmatprep.subr.bf16.mxu0 %v2277
    %2912 = vmatpush2.bf16.msra.mxu0 %v2276
    %2913 = vmatprep.subr.bf16.mxu0 %v2273
    %2914 = vmatpush2.bf16.msra.mxu0 %v2272
    %2915 = vmatprep.subr.bf16.mxu0 %v2269
    %2916 = vmatpush2.bf16.msra.mxu0 %v2268
    %2917 = vmatprep.subr.bf16.mxu0 %v2265
    %2918 = vmatpush2.bf16.msra.mxu0 %v2264
    %2919 = vmatprep.subr.bf16.mxu0 %v2261
    %2920 = vmatpush2.bf16.msra.mxu0 %v2260
    %2921 = vmatprep.mubr.bf16.mxu0 %v1133
    %2922 = vmatmul.mubr.bf16.gmra.mxu0 %v1132
    %v2923 = vpop.f32.mrf.mxu0
    %v2924 = vadd.f32 %v2881, %v2923
    %v2925 = vpop.f32.mrf.mxu0
    %v2926 = vadd.f32 %v2883, %v2925
    %v2927 = vpop.f32.mrf.mxu0
    %v2928 = vadd.f32 %v2885, %v2927
    %v2929 = vpop.f32.mrf.mxu0
    %v2930 = vadd.f32 %v2887, %v2929
    %2931 = vdwg.mxu0
    %2932 = vmatprep.subr.bf16.mxu0 %v2321
    %2933 = vmatpush1.bf16.msra.mxu0 %v2320
    %2934 = vmatprep.subr.bf16.mxu0 %v2317
    %2935 = vmatpush1.bf16.msra.mxu0 %v2316
    %2936 = vmatprep.subr.bf16.mxu0 %v2313
    %2937 = vmatpush1.bf16.msra.mxu0 %v2312
    %2938 = vmatprep.subr.bf16.mxu0 %v2309
    %2939 = vmatpush1.bf16.msra.mxu0 %v2308
    %2940 = vmatprep.subr.bf16.mxu0 %v2305
    %2941 = vmatpush1.bf16.msra.mxu0 %v2304
    %2942 = vmatprep.subr.bf16.mxu0 %v2301
    %2943 = vmatpush1.bf16.msra.mxu0 %v2300
    %2944 = vmatprep.subr.bf16.mxu0 %v2297
    %2945 = vmatpush1.bf16.msra.mxu0 %v2296
    %2946 = vmatprep.subr.bf16.mxu0 %v2293
    %2947 = vmatpush1.bf16.msra.mxu0 %v2292
    %2948 = vmatprep.subr.bf16.mxu0 %v2353
    %2949 = vmatpush2.bf16.msra.mxu0 %v2352
    %2950 = vmatprep.subr.bf16.mxu0 %v2349
    %2951 = vmatpush2.bf16.msra.mxu0 %v2348
    %2952 = vmatprep.subr.bf16.mxu0 %v2345
    %2953 = vmatpush2.bf16.msra.mxu0 %v2344
    %2954 = vmatprep.subr.bf16.mxu0 %v2341
    %2955 = vmatpush2.bf16.msra.mxu0 %v2340
    %2956 = vmatprep.subr.bf16.mxu0 %v2337
    %2957 = vmatpush2.bf16.msra.mxu0 %v2336
    %2958 = vmatprep.subr.bf16.mxu0 %v2333
    %2959 = vmatpush2.bf16.msra.mxu0 %v2332
    %2960 = vmatprep.subr.bf16.mxu0 %v2329
    %2961 = vmatpush2.bf16.msra.mxu0 %v2328
    %2962 = vmatprep.subr.bf16.mxu0 %v2325
    %2963 = vmatpush2.bf16.msra.mxu0 %v2324
    %2964 = vmatprep.mubr.bf16.mxu0 %v1135
    %2965 = vmatmul.mubr.bf16.gmra.mxu0 %v1134
    %v2966 = vpop.f32.mrf.mxu0
    %v2967 = vadd.f32 %v2924, %v2966
    %v2968 = vpop.f32.mrf.mxu0
    %v2969 = vadd.f32 %v2926, %v2968
    %v2970 = vpop.f32.mrf.mxu0
    %v2971 = vadd.f32 %v2928, %v2970
    %v2972 = vpop.f32.mrf.mxu0
    %v2973 = vadd.f32 %v2930, %v2972
    %2974 = vdwg.mxu0
    %2975 = vmatprep.subr.bf16.mxu0 %v2385
    %2976 = vmatpush1.bf16.msra.mxu0 %v2384
    %2977 = vmatprep.subr.bf16.mxu0 %v2381
    %2978 = vmatpush1.bf16.msra.mxu0 %v2380
    %2979 = vmatprep.subr.bf16.mxu0 %v2377
    %2980 = vmatpush1.bf16.msra.mxu0 %v2376
    %2981 = vmatprep.subr.bf16.mxu0 %v2373
    %2982 = vmatpush1.bf16.msra.mxu0 %v2372
    %2983 = vmatprep.subr.bf16.mxu0 %v2369
    %2984 = vmatpush1.bf16.msra.mxu0 %v2368
    %2985 = vmatprep.subr.bf16.mxu0 %v2365
    %2986 = vmatpush1.bf16.msra.mxu0 %v2364
    %2987 = vmatprep.subr.bf16.mxu0 %v2361
    %2988 = vmatpush1.bf16.msra.mxu0 %v2360
    %2989 = vmatprep.subr.bf16.mxu0 %v2357
    %2990 = vmatpush1.bf16.msra.mxu0 %v2356
    %2991 = vmatprep.subr.bf16.mxu0 %v2417
    %2992 = vmatpush2.bf16.msra.mxu0 %v2416
    %2993 = vmatprep.subr.bf16.mxu0 %v2413
    %2994 = vmatpush2.bf16.msra.mxu0 %v2412
    %2995 = vmatprep.subr.bf16.mxu0 %v2409
    %2996 = vmatpush2.bf16.msra.mxu0 %v2408
    %2997 = vmatprep.subr.bf16.mxu0 %v2405
    %2998 = vmatpush2.bf16.msra.mxu0 %v2404
    %2999 = vmatprep.subr.bf16.mxu0 %v2401
    %3000 = vmatpush2.bf16.msra.mxu0 %v2400
    %3001 = vmatprep.subr.bf16.mxu0 %v2397
    %3002 = vmatpush2.bf16.msra.mxu0 %v2396
    %3003 = vmatprep.subr.bf16.mxu0 %v2393
    %3004 = vmatpush2.bf16.msra.mxu0 %v2392
    %3005 = vmatprep.subr.bf16.mxu0 %v2389
    %3006 = vmatpush2.bf16.msra.mxu0 %v2388
    %3007 = vmatprep.mubr.bf16.mxu0 %v1137
    %3008 = vmatmul.mubr.bf16.gmra.mxu0 %v1136
    %v3009 = vpop.f32.mrf.mxu0
    %v3010 = vadd.f32 %v2967, %v3009
    %v3011 = vpop.f32.mrf.mxu0
    %v3012 = vadd.f32 %v2969, %v3011
    %v3013 = vpop.f32.mrf.mxu0
    %v3014 = vadd.f32 %v2971, %v3013
    %v3015 = vpop.f32.mrf.mxu0
    %v3016 = vadd.f32 %v2973, %v3015
    %3017 = vdwg.mxu0
    %v3018 = vld [vmem:[#allocation18] ss:$8 sm:$0xf]
    %v3020 = vlaneseq
    %v3021 = vshrl.u32 %v3020, 7
    %v3022 = vsub.s32 0, %v3021
    %v3023 = vrot.slane %v3018, %v3022
    %v3024 = vlaneseq
    %v3025 = vshrl.u32 %v3024, 7
    %v3026 = vsub.s32 1, %v3025
    %v3027 = vrot.slane %v3018, %v3026
    %v3028 = vlaneseq
    %v3029 = vshrl.u32 %v3028, 7
    %v3030 = vsub.s32 2, %v3029
    %v3031 = vrot.slane %v3018, %v3030
    %v3032 = vlaneseq
    %v3033 = vshrl.u32 %v3032, 7
    %v3034 = vsub.s32 3, %v3033
    %v3035 = vrot.slane %v3018, %v3034
    %v3040 = vmul.f32 %v2838, %v3023
    %v3041 = vmul.f32 %v2840, %v3027
    %v3042 = vmul.f32 %v3010, %v3031
    %v3043 = vmul.f32 %v3012, %v3035
    %v3044 = vmul.f32 %v2842, %v3023
    %v3045 = vmul.f32 %v2844, %v3027
    %v3046 = vmul.f32 %v3014, %v3031
    %v3047 = vmul.f32 %v3016, %v3035
    %s3048 = scalar_lea.vmem [#allocation18], 64
    %v3049 = vld [vmem:[%s3048] ss:$8 sm:$0xf]
    %v3051 = vlaneseq
    %v3052 = vshrl.u32 %v3051, 7
    %v3053 = vsub.s32 0, %v3052
    %v3054 = vrot.slane %v3049, %v3053
    %v3055 = vlaneseq
    %v3056 = vshrl.u32 %v3055, 7
    %v3057 = vsub.s32 1, %v3056
    %v3058 = vrot.slane %v3049, %v3057
    %v3059 = vlaneseq
    %v3060 = vshrl.u32 %v3059, 7
    %v3061 = vsub.s32 2, %v3060
    %v3062 = vrot.slane %v3049, %v3061
    %v3063 = vlaneseq
    %v3064 = vshrl.u32 %v3063, 7
    %v3065 = vsub.s32 3, %v3064
    %v3066 = vrot.slane %v3049, %v3065
    %v3071 = vadd.f32 %v3040, %v3054
    %v3072 = vadd.f32 %v3041, %v3058
    %v3073 = vadd.f32 %v3042, %v3062
    %v3074 = vadd.f32 %v3043, %v3066
    %v3075 = vadd.f32 %v3044, %v3054
    %v3076 = vadd.f32 %v3045, %v3058
    %v3077 = vadd.f32 %v3046, %v3062
    %v3078 = vadd.f32 %v3047, %v3066
    %s3079 = sld [smem:[#allocation3]]
    %vm3080 = vcmp.gt.f32.partialorder %v3071, 0.0
    %vm3081 = vcmp.gt.f32.partialorder %v3072, 0.0
    %vm3082 = vcmp.gt.f32.partialorder %v3073, 0.0
    %vm3083 = vcmp.gt.f32.partialorder %v3074, 0.0
    %vm3084 = vcmp.gt.f32.partialorder %v3075, 0.0
    %vm3085 = vcmp.gt.f32.partialorder %v3076, 0.0
    %vm3086 = vcmp.gt.f32.partialorder %v3077, 0.0
    %vm3087 = vcmp.gt.f32.partialorder %v3078, 0.0
    %v3088 = vstv %s3079
    %v3089 = vmul.f32 %v3088, %v3071
    %v3090 = vmul.f32 %v3088, %v3072
    %v3091 = vmul.f32 %v3088, %v3073
    %v3092 = vmul.f32 %v3088, %v3074
    %v3093 = vmul.f32 %v3088, %v3075
    %v3094 = vmul.f32 %v3088, %v3076
    %v3095 = vmul.f32 %v3088, %v3077
    %v3096 = vmul.f32 %v3088, %v3078
    %v3097 = vsel %vm3080, %v3071, %v3089
    %v3098 = vsel %vm3081, %v3072, %v3090
    %v3099 = vsel %vm3082, %v3073, %v3091
    %v3100 = vsel %vm3083, %v3074, %v3092
    %v3101 = vsel %vm3084, %v3075, %v3093
    %v3102 = vsel %vm3085, %v3076, %v3094
    %v3103 = vsel %vm3086, %v3077, %v3095
    %v3104 = vsel %vm3087, %v3078, %v3096
    %v3105 = vpack.c.bf16 %v3101, %v3097
    %v3106 = vpack.c.bf16 %v3102, %v3098
    %v3107 = vpack.c.bf16 %v3103, %v3099
    %v3108 = vpack.c.bf16 %v3104, %v3100
    %v3109 = vld [vmem:[#allocation10] sm:$0xff]
    %v3110 = vld [vmem:[#allocation10 + $0x8] sm:$0xff]
    %v3111 = vld [vmem:[#allocation10 + $0x10] sm:$0xff]
    %v3112 = vld [vmem:[#allocation10 + $0x18] sm:$0xff]
    %v3113 = vld [vmem:[#allocation10 + $0x20] sm:$0xff]
    %v3114 = vld [vmem:[#allocation10 + $0x28] sm:$0xff]
    %v3115 = vld [vmem:[#allocation10 + $0x30] sm:$0xff]
    %v3116 = vld [vmem:[#allocation10 + $0x38] sm:$0xff]
    %v3117 = vld [vmem:[#allocation10 + $0x40] sm:$0xff]
    %v3118 = vld [vmem:[#allocation10 + $0x48] sm:$0xff]
    %v3119 = vld [vmem:[#allocation10 + $0x50] sm:$0xff]
    %v3120 = vld [vmem:[#allocation10 + $0x58] sm:$0xff]
    %v3121 = vld [vmem:[#allocation10 + $0x60] sm:$0xff]
    %v3122 = vld [vmem:[#allocation10 + $0x68] sm:$0xff]
    %v3123 = vld [vmem:[#allocation10 + $0x70] sm:$0xff]
    %v3124 = vld [vmem:[#allocation10 + $0x78] sm:$0xff]
    %v3125 = vld [vmem:[#allocation10 + $0x80] sm:$0xff]
    %v3126 = vld [vmem:[#allocation10 + $0x88] sm:$0xff]
    %v3127 = vld [vmem:[#allocation10 + $0x90] sm:$0xff]
    %v3128 = vld [vmem:[#allocation10 + $0x98] sm:$0xff]
    %v3129 = vld [vmem:[#allocation10 + $0xa0] sm:$0xff]
    %v3130 = vld [vmem:[#allocation10 + $0xa8] sm:$0xff]
    %v3131 = vld [vmem:[#allocation10 + $0xb0] sm:$0xff]
    %v3132 = vld [vmem:[#allocation10 + $0xb8] sm:$0xff]
    %v3133 = vld [vmem:[#allocation10 + $0xc0] sm:$0xff]
    %v3134 = vld [vmem:[#allocation10 + $0xc8] sm:$0xff]
    %v3135 = vld [vmem:[#allocation10 + $0xd0] sm:$0xff]
    %v3136 = vld [vmem:[#allocation10 + $0xd8] sm:$0xff]
    %v3137 = vld [vmem:[#allocation10 + $0xe0] sm:$0xff]
    %v3138 = vld [vmem:[#allocation10 + $0xe8] sm:$0xff]
    %v3139 = vld [vmem:[#allocation10 + $0xf0] sm:$0xff]
    %v3140 = vld [vmem:[#allocation10 + $0xf8] sm:$0xff]
    %v3141 = vld [vmem:[#allocation10 + $0x100] sm:$0xff]
    %v3142 = vld [vmem:[#allocation10 + $0x108] sm:$0xff]
    %v3143 = vld [vmem:[#allocation10 + $0x110] sm:$0xff]
    %v3144 = vld [vmem:[#allocation10 + $0x118] sm:$0xff]
    %v3145 = vld [vmem:[#allocation10 + $0x120] sm:$0xff]
    %v3146 = vld [vmem:[#allocation10 + $0x128] sm:$0xff]
    %v3147 = vld [vmem:[#allocation10 + $0x130] sm:$0xff]
    %v3148 = vld [vmem:[#allocation10 + $0x138] sm:$0xff]
    %v3149 = vld [vmem:[#allocation10 + $0x140] sm:$0xff]
    %v3150 = vld [vmem:[#allocation10 + $0x148] sm:$0xff]
    %v3151 = vld [vmem:[#allocation10 + $0x150] sm:$0xff]
    %v3152 = vld [vmem:[#allocation10 + $0x158] sm:$0xff]
    %v3153 = vld [vmem:[#allocation10 + $0x160] sm:$0xff]
    %v3154 = vld [vmem:[#allocation10 + $0x168] sm:$0xff]
    %v3155 = vld [vmem:[#allocation10 + $0x170] sm:$0xff]
    %v3156 = vld [vmem:[#allocation10 + $0x178] sm:$0xff]
    %v3157 = vld [vmem:[#allocation10 + $0x180] sm:$0xff]
    %v3158 = vld [vmem:[#allocation10 + $0x188] sm:$0xff]
    %v3159 = vld [vmem:[#allocation10 + $0x190] sm:$0xff]
    %v3160 = vld [vmem:[#allocation10 + $0x198] sm:$0xff]
    %v3161 = vld [vmem:[#allocation10 + $0x1a0] sm:$0xff]
    %v3162 = vld [vmem:[#allocation10 + $0x1a8] sm:$0xff]
    %v3163 = vld [vmem:[#allocation10 + $0x1b0] sm:$0xff]
    %v3164 = vld [vmem:[#allocation10 + $0x1b8] sm:$0xff]
    %v3165 = vld [vmem:[#allocation10 + $0x1c0] sm:$0xff]
    %v3166 = vld [vmem:[#allocation10 + $0x1c8] sm:$0xff]
    %v3167 = vld [vmem:[#allocation10 + $0x1d0] sm:$0xff]
    %v3168 = vld [vmem:[#allocation10 + $0x1d8] sm:$0xff]
    %v3169 = vld [vmem:[#allocation10 + $0x1e0] sm:$0xff]
    %v3170 = vld [vmem:[#allocation10 + $0x1e8] sm:$0xff]
    %v3171 = vld [vmem:[#allocation10 + $0x1f0] sm:$0xff]
    %v3172 = vld [vmem:[#allocation10 + $0x1f8] sm:$0xff]
    %v3237 = vunpack.c.l.b16 %v3109
    %v3238 = vunpack.c.h.b16 %v3109
    %v3239 = vunpack.c.l.b16 %v3110
    %v3240 = vunpack.c.h.b16 %v3110
    %v3241 = vunpack.c.l.b16 %v3111
    %v3242 = vunpack.c.h.b16 %v3111
    %v3243 = vunpack.c.l.b16 %v3112
    %v3244 = vunpack.c.h.b16 %v3112
    %v3245 = vunpack.c.l.b16 %v3113
    %v3246 = vunpack.c.h.b16 %v3113
    %v3247 = vunpack.c.l.b16 %v3114
    %v3248 = vunpack.c.h.b16 %v3114
    %v3249 = vunpack.c.l.b16 %v3115
    %v3250 = vunpack.c.h.b16 %v3115
    %v3251 = vunpack.c.l.b16 %v3116
    %v3252 = vunpack.c.h.b16 %v3116
    %v3253 = vunpack.c.l.b16 %v3117
    %v3254 = vunpack.c.h.b16 %v3117
    %v3255 = vunpack.c.l.b16 %v3118
    %v3256 = vunpack.c.h.b16 %v3118
    %v3257 = vunpack.c.l.b16 %v3119
    %v3258 = vunpack.c.h.b16 %v3119
    %v3259 = vunpack.c.l.b16 %v3120
    %v3260 = vunpack.c.h.b16 %v3120
    %v3261 = vunpack.c.l.b16 %v3121
    %v3262 = vunpack.c.h.b16 %v3121
    %v3263 = vunpack.c.l.b16 %v3122
    %v3264 = vunpack.c.h.b16 %v3122
    %v3265 = vunpack.c.l.b16 %v3123
    %v3266 = vunpack.c.h.b16 %v3123
    %v3267 = vunpack.c.l.b16 %v3124
    %v3268 = vunpack.c.h.b16 %v3124
    %v3269 = vunpack.c.l.b16 %v3125
    %v3270 = vunpack.c.h.b16 %v3125
    %v3271 = vunpack.c.l.b16 %v3126
    %v3272 = vunpack.c.h.b16 %v3126
    %v3273 = vunpack.c.l.b16 %v3127
    %v3274 = vunpack.c.h.b16 %v3127
    %v3275 = vunpack.c.l.b16 %v3128
    %v3276 = vunpack.c.h.b16 %v3128
    %v3277 = vunpack.c.l.b16 %v3129
    %v3278 = vunpack.c.h.b16 %v3129
    %v3279 = vunpack.c.l.b16 %v3130
    %v3280 = vunpack.c.h.b16 %v3130
    %v3281 = vunpack.c.l.b16 %v3131
    %v3282 = vunpack.c.h.b16 %v3131
    %v3283 = vunpack.c.l.b16 %v3132
    %v3284 = vunpack.c.h.b16 %v3132
    %v3285 = vunpack.c.l.b16 %v3133
    %v3286 = vunpack.c.h.b16 %v3133
    %v3287 = vunpack.c.l.b16 %v3134
    %v3288 = vunpack.c.h.b16 %v3134
    %v3289 = vunpack.c.l.b16 %v3135
    %v3290 = vunpack.c.h.b16 %v3135
    %v3291 = vunpack.c.l.b16 %v3136
    %v3292 = vunpack.c.h.b16 %v3136
    %v3293 = vunpack.c.l.b16 %v3137
    %v3294 = vunpack.c.h.b16 %v3137
    %v3295 = vunpack.c.l.b16 %v3138
    %v3296 = vunpack.c.h.b16 %v3138
    %v3297 = vunpack.c.l.b16 %v3139
    %v3298 = vunpack.c.h.b16 %v3139
    %v3299 = vunpack.c.l.b16 %v3140
    %v3300 = vunpack.c.h.b16 %v3140
    %v3301 = vunpack.c.l.b16 %v3141
    %v3302 = vunpack.c.h.b16 %v3141
    %v3303 = vunpack.c.l.b16 %v3142
    %v3304 = vunpack.c.h.b16 %v3142
    %v3305 = vunpack.c.l.b16 %v3143
    %v3306 = vunpack.c.h.b16 %v3143
    %v3307 = vunpack.c.l.b16 %v3144
    %v3308 = vunpack.c.h.b16 %v3144
    %v3309 = vunpack.c.l.b16 %v3145
    %v3310 = vunpack.c.h.b16 %v3145
    %v3311 = vunpack.c.l.b16 %v3146
    %v3312 = vunpack.c.h.b16 %v3146
    %v3313 = vunpack.c.l.b16 %v3147
    %v3314 = vunpack.c.h.b16 %v3147
    %v3315 = vunpack.c.l.b16 %v3148
    %v3316 = vunpack.c.h.b16 %v3148
    %v3317 = vunpack.c.l.b16 %v3149
    %v3318 = vunpack.c.h.b16 %v3149
    %v3319 = vunpack.c.l.b16 %v3150
    %v3320 = vunpack.c.h.b16 %v3150
    %v3321 = vunpack.c.l.b16 %v3151
    %v3322 = vunpack.c.h.b16 %v3151
    %v3323 = vunpack.c.l.b16 %v3152
    %v3324 = vunpack.c.h.b16 %v3152
    %v3325 = vunpack.c.l.b16 %v3153
    %v3326 = vunpack.c.h.b16 %v3153
    %v3327 = vunpack.c.l.b16 %v3154
    %v3328 = vunpack.c.h.b16 %v3154
    %v3329 = vunpack.c.l.b16 %v3155
    %v3330 = vunpack.c.h.b16 %v3155
    %v3331 = vunpack.c.l.b16 %v3156
    %v3332 = vunpack.c.h.b16 %v3156
    %v3333 = vunpack.c.l.b16 %v3157
    %v3334 = vunpack.c.h.b16 %v3157
    %v3335 = vunpack.c.l.b16 %v3158
    %v3336 = vunpack.c.h.b16 %v3158
    %v3337 = vunpack.c.l.b16 %v3159
    %v3338 = vunpack.c.h.b16 %v3159
    %v3339 = vunpack.c.l.b16 %v3160
    %v3340 = vunpack.c.h.b16 %v3160
    %v3341 = vunpack.c.l.b16 %v3161
    %v3342 = vunpack.c.h.b16 %v3161
    %v3343 = vunpack.c.l.b16 %v3162
    %v3344 = vunpack.c.h.b16 %v3162
    %v3345 = vunpack.c.l.b16 %v3163
    %v3346 = vunpack.c.h.b16 %v3163
    %v3347 = vunpack.c.l.b16 %v3164
    %v3348 = vunpack.c.h.b16 %v3164
    %v3349 = vunpack.c.l.b16 %v3165
    %v3350 = vunpack.c.h.b16 %v3165
    %v3351 = vunpack.c.l.b16 %v3166
    %v3352 = vunpack.c.h.b16 %v3166
    %v3353 = vunpack.c.l.b16 %v3167
    %v3354 = vunpack.c.h.b16 %v3167
    %v3355 = vunpack.c.l.b16 %v3168
    %v3356 = vunpack.c.h.b16 %v3168
    %v3357 = vunpack.c.l.b16 %v3169
    %v3358 = vunpack.c.h.b16 %v3169
    %v3359 = vunpack.c.l.b16 %v3170
    %v3360 = vunpack.c.h.b16 %v3170
    %v3361 = vunpack.c.l.b16 %v3171
    %v3362 = vunpack.c.h.b16 %v3171
    %v3363 = vunpack.c.l.b16 %v3172
    %v3364 = vunpack.c.h.b16 %v3172
    %v3365 = vpack.c.b16 %v3239, %v3237
    %v3366 = vpack.c.b16 %v3240, %v3238
    %v3367 = vpack.c.b16 %v3243, %v3241
    %v3368 = vpack.c.b16 %v3244, %v3242
    %v3369 = vpack.c.b16 %v3247, %v3245
    %v3370 = vpack.c.b16 %v3248, %v3246
    %v3371 = vpack.c.b16 %v3251, %v3249
    %v3372 = vpack.c.b16 %v3252, %v3250
    %v3373 = vpack.c.b16 %v3255, %v3253
    %v3374 = vpack.c.b16 %v3256, %v3254
    %v3375 = vpack.c.b16 %v3259, %v3257
    %v3376 = vpack.c.b16 %v3260, %v3258
    %v3377 = vpack.c.b16 %v3263, %v3261
    %v3378 = vpack.c.b16 %v3264, %v3262
    %v3379 = vpack.c.b16 %v3267, %v3265
    %v3380 = vpack.c.b16 %v3268, %v3266
    %v3381 = vpack.c.b16 %v3271, %v3269
    %v3382 = vpack.c.b16 %v3272, %v3270
    %v3383 = vpack.c.b16 %v3275, %v3273
    %v3384 = vpack.c.b16 %v3276, %v3274
    %v3385 = vpack.c.b16 %v3279, %v3277
    %v3386 = vpack.c.b16 %v3280, %v3278
    %v3387 = vpack.c.b16 %v3283, %v3281
    %v3388 = vpack.c.b16 %v3284, %v3282
    %v3389 = vpack.c.b16 %v3287, %v3285
    %v3390 = vpack.c.b16 %v3288, %v3286
    %v3391 = vpack.c.b16 %v3291, %v3289
    %v3392 = vpack.c.b16 %v3292, %v3290
    %v3393 = vpack.c.b16 %v3295, %v3293
    %v3394 = vpack.c.b16 %v3296, %v3294
    %v3395 = vpack.c.b16 %v3299, %v3297
    %v3396 = vpack.c.b16 %v3300, %v3298
    %v3397 = vpack.c.b16 %v3303, %v3301
    %v3398 = vpack.c.b16 %v3304, %v3302
    %v3399 = vpack.c.b16 %v3307, %v3305
    %v3400 = vpack.c.b16 %v3308, %v3306
    %v3401 = vpack.c.b16 %v3311, %v3309
    %v3402 = vpack.c.b16 %v3312, %v3310
    %v3403 = vpack.c.b16 %v3315, %v3313
    %v3404 = vpack.c.b16 %v3316, %v3314
    %v3405 = vpack.c.b16 %v3319, %v3317
    %v3406 = vpack.c.b16 %v3320, %v3318
    %v3407 = vpack.c.b16 %v3323, %v3321
    %v3408 = vpack.c.b16 %v3324, %v3322
    %v3409 = vpack.c.b16 %v3327, %v3325
    %v3410 = vpack.c.b16 %v3328, %v3326
    %v3411 = vpack.c.b16 %v3331, %v3329
    %v3412 = vpack.c.b16 %v3332, %v3330
    %v3413 = vpack.c.b16 %v3335, %v3333
    %v3414 = vpack.c.b16 %v3336, %v3334
    %v3415 = vpack.c.b16 %v3339, %v3337
    %v3416 = vpack.c.b16 %v3340, %v3338
    %v3417 = vpack.c.b16 %v3343, %v3341
    %v3418 = vpack.c.b16 %v3344, %v3342
    %v3419 = vpack.c.b16 %v3347, %v3345
    %v3420 = vpack.c.b16 %v3348, %v3346
    %v3421 = vpack.c.b16 %v3351, %v3349
    %v3422 = vpack.c.b16 %v3352, %v3350
    %v3423 = vpack.c.b16 %v3355, %v3353
    %v3424 = vpack.c.b16 %v3356, %v3354
    %v3425 = vpack.c.b16 %v3359, %v3357
    %v3426 = vpack.c.b16 %v3360, %v3358
    %v3427 = vpack.c.b16 %v3363, %v3361
    %v3428 = vpack.c.b16 %v3364, %v3362
    %3493 = vmatprep.subr.bf16.mxu0 %v3380
    %3494 = vmatpush1.bf16.msra.mxu0 %v3379
    %3495 = vmatprep.subr.bf16.mxu0 %v3378
    %3496 = vmatpush1.bf16.msra.mxu0 %v3377
    %3497 = vmatprep.subr.bf16.mxu0 %v3376
    %3498 = vmatpush1.bf16.msra.mxu0 %v3375
    %3499 = vmatprep.subr.bf16.mxu0 %v3374
    %3500 = vmatpush1.bf16.msra.mxu0 %v3373
    %3501 = vmatprep.subr.bf16.mxu0 %v3372
    %3502 = vmatpush1.bf16.msra.mxu0 %v3371
    %3503 = vmatprep.subr.bf16.mxu0 %v3370
    %3504 = vmatpush1.bf16.msra.mxu0 %v3369
    %3505 = vmatprep.subr.bf16.mxu0 %v3368
    %3506 = vmatpush1.bf16.msra.mxu0 %v3367
    %3507 = vmatprep.subr.bf16.mxu0 %v3366
    %3508 = vmatpush1.bf16.msra.mxu0 %v3365
    %3509 = vmatprep.subr.bf16.mxu0 %v3396
    %3510 = vmatpush2.bf16.msra.mxu0 %v3395
    %3511 = vmatprep.subr.bf16.mxu0 %v3394
    %3512 = vmatpush2.bf16.msra.mxu0 %v3393
    %3513 = vmatprep.subr.bf16.mxu0 %v3392
    %3514 = vmatpush2.bf16.msra.mxu0 %v3391
    %3515 = vmatprep.subr.bf16.mxu0 %v3390
    %3516 = vmatpush2.bf16.msra.mxu0 %v3389
    %3517 = vmatprep.subr.bf16.mxu0 %v3388
    %3518 = vmatpush2.bf16.msra.mxu0 %v3387
    %3519 = vmatprep.subr.bf16.mxu0 %v3386
    %3520 = vmatpush2.bf16.msra.mxu0 %v3385
    %3521 = vmatprep.subr.bf16.mxu0 %v3384
    %3522 = vmatpush2.bf16.msra.mxu0 %v3383
    %3523 = vmatprep.subr.bf16.mxu0 %v3382
    %3524 = vmatpush2.bf16.msra.mxu0 %v3381
    %3525 = vmatprep.mubr.bf16.mxu0 %v3106
    %3526 = vmatmul.mubr.bf16.gmra.mxu0 %v3105
    %v3527 = vpop.f32.mrf.mxu0
    %v3528 = vadd.f32 0.0, %v3527
    %v3529 = vpop.f32.mrf.mxu0
    %v3530 = vadd.f32 0.0, %v3529
    %v3531 = vpop.f32.mrf.mxu0
    %v3532 = vadd.f32 0.0, %v3531
    %v3533 = vpop.f32.mrf.mxu0
    %v3534 = vadd.f32 0.0, %v3533
    %3535 = vdwg.mxu0
    %3536 = vmatprep.subr.bf16.mxu0 %v3412
    %3537 = vmatpush1.bf16.msra.mxu0 %v3411
    %3538 = vmatprep.subr.bf16.mxu0 %v3410
    %3539 = vmatpush1.bf16.msra.mxu0 %v3409
    %3540 = vmatprep.subr.bf16.mxu0 %v3408
    %3541 = vmatpush1.bf16.msra.mxu0 %v3407
    %3542 = vmatprep.subr.bf16.mxu0 %v3406
    %3543 = vmatpush1.bf16.msra.mxu0 %v3405
    %3544 = vmatprep.subr.bf16.mxu0 %v3404
    %3545 = vmatpush1.bf16.msra.mxu0 %v3403
    %3546 = vmatprep.subr.bf16.mxu0 %v3402
    %3547 = vmatpush1.bf16.msra.mxu0 %v3401
    %3548 = vmatprep.subr.bf16.mxu0 %v3400
    %3549 = vmatpush1.bf16.msra.mxu0 %v3399
    %3550 = vmatprep.subr.bf16.mxu0 %v3398
    %3551 = vmatpush1.bf16.msra.mxu0 %v3397
    %3552 = vmatprep.subr.bf16.mxu0 %v3428
    %3553 = vmatpush2.bf16.msra.mxu0 %v3427
    %3554 = vmatprep.subr.bf16.mxu0 %v3426
    %3555 = vmatpush2.bf16.msra.mxu0 %v3425
    %3556 = vmatprep.subr.bf16.mxu0 %v3424
    %3557 = vmatpush2.bf16.msra.mxu0 %v3423
    %3558 = vmatprep.subr.bf16.mxu0 %v3422
    %3559 = vmatpush2.bf16.msra.mxu0 %v3421
    %3560 = vmatprep.subr.bf16.mxu0 %v3420
    %3561 = vmatpush2.bf16.msra.mxu0 %v3419
    %3562 = vmatprep.subr.bf16.mxu0 %v3418
    %3563 = vmatpush2.bf16.msra.mxu0 %v3417
    %3564 = vmatprep.subr.bf16.mxu0 %v3416
    %3565 = vmatpush2.bf16.msra.mxu0 %v3415
    %3566 = vmatprep.subr.bf16.mxu0 %v3414
    %3567 = vmatpush2.bf16.msra.mxu0 %v3413
    %3568 = vmatprep.mubr.bf16.mxu0 %v3108
    %3569 = vmatmul.mubr.bf16.gmra.mxu0 %v3107
    %v3570 = vpop.f32.mrf.mxu0
    %v3571 = vadd.f32 %v3528, %v3570
    %v3572 = vpop.f32.mrf.mxu0
    %v3573 = vadd.f32 %v3530, %v3572
    %v3574 = vpop.f32.mrf.mxu0
    %v3575 = vadd.f32 %v3532, %v3574
    %v3576 = vpop.f32.mrf.mxu0
    %v3577 = vadd.f32 %v3534, %v3576
    %3578 = vdwg.mxu0
    %s3579 = scalar_lea.vmem [#allocation18], 1
    %v3580 = vld [vmem:[%s3579] ss:$8 sm:$0x3]
    %v3582 = vlaneseq
    %v3583 = vshrl.u32 %v3582, 7
    %v3584 = vsub.s32 0, %v3583
    %v3585 = vrot.slane %v3580, %v3584
    %v3586 = vlaneseq
    %v3587 = vshrl.u32 %v3586, 7
    %v3588 = vsub.s32 1, %v3587
    %v3589 = vrot.slane %v3580, %v3588
    %v3592 = vmul.f32 %v3571, %v3585
    %v3593 = vmul.f32 %v3573, %v3589
    %v3594 = vmul.f32 %v3575, %v3585
    %v3595 = vmul.f32 %v3577, %v3589
    %s3596 = scalar_lea.vmem [#allocation18], 65
    %v3597 = vld [vmem:[%s3596] ss:$8 sm:$0x3]
    %v3599 = vlaneseq
    %v3600 = vshrl.u32 %v3599, 7
    %v3601 = vsub.s32 0, %v3600
    %v3602 = vrot.slane %v3597, %v3601
    %v3603 = vlaneseq
    %v3604 = vshrl.u32 %v3603, 7
    %v3605 = vsub.s32 1, %v3604
    %v3606 = vrot.slane %v3597, %v3605
    %v3609 = vadd.f32 %v3592, %v3602
    %v3610 = vadd.f32 %v3593, %v3606
    %v3611 = vadd.f32 %v3594, %v3602
    %v3612 = vadd.f32 %v3595, %v3606
    %s3613 = sld [smem:[#allocation3 + $0x1]]
    %vm3614 = vcmp.gt.f32.partialorder %v3609, 0.0
    %vm3615 = vcmp.gt.f32.partialorder %v3610, 0.0
    %vm3616 = vcmp.gt.f32.partialorder %v3611, 0.0
    %vm3617 = vcmp.gt.f32.partialorder %v3612, 0.0
    %v3618 = vstv %s3613
    %v3619 = vmul.f32 %v3618, %v3609
    %v3620 = vmul.f32 %v3618, %v3610
    %v3621 = vmul.f32 %v3618, %v3611
    %v3622 = vmul.f32 %v3618, %v3612
    %v3623 = vsel %vm3614, %v3609, %v3619
    %v3624 = vsel %vm3615, %v3610, %v3620
    %v3625 = vsel %vm3616, %v3611, %v3621
    %v3626 = vsel %vm3617, %v3612, %v3622
    %v3627 = vpack.c.bf16 %v3625, %v3623
    %v3628 = vpack.c.bf16 %v3626, %v3624
    %v3629 = vld [vmem:[#allocation12] sm:$0xf]
    %v3630 = vld [vmem:[#allocation12 + $0x4] sm:$0xf]
    %v3631 = vld [vmem:[#allocation12 + $0x8] sm:$0xf]
    %v3632 = vld [vmem:[#allocation12 + $0xc] sm:$0xf]
    %v3633 = vld [vmem:[#allocation12 + $0x10] sm:$0xf]
    %v3634 = vld [vmem:[#allocation12 + $0x14] sm:$0xf]
    %v3635 = vld [vmem:[#allocation12 + $0x18] sm:$0xf]
    %v3636 = vld [vmem:[#allocation12 + $0x1c] sm:$0xf]
    %v3637 = vld [vmem:[#allocation12 + $0x20] sm:$0xf]
    %v3638 = vld [vmem:[#allocation12 + $0x24] sm:$0xf]
    %v3639 = vld [vmem:[#allocation12 + $0x28] sm:$0xf]
    %v3640 = vld [vmem:[#allocation12 + $0x2c] sm:$0xf]
    %v3641 = vld [vmem:[#allocation12 + $0x30] sm:$0xf]
    %v3642 = vld [vmem:[#allocation12 + $0x34] sm:$0xf]
    %v3643 = vld [vmem:[#allocation12 + $0x38] sm:$0xf]
    %v3644 = vld [vmem:[#allocation12 + $0x3c] sm:$0xf]
    %v3645 = vld [vmem:[#allocation12 + $0x40] sm:$0xf]
    %v3646 = vld [vmem:[#allocation12 + $0x44] sm:$0xf]
    %v3647 = vld [vmem:[#allocation12 + $0x48] sm:$0xf]
    %v3648 = vld [vmem:[#allocation12 + $0x4c] sm:$0xf]
    %v3649 = vld [vmem:[#allocation12 + $0x50] sm:$0xf]
    %v3650 = vld [vmem:[#allocation12 + $0x54] sm:$0xf]
    %v3651 = vld [vmem:[#allocation12 + $0x58] sm:$0xf]
    %v3652 = vld [vmem:[#allocation12 + $0x5c] sm:$0xf]
    %v3653 = vld [vmem:[#allocation12 + $0x60] sm:$0xf]
    %v3654 = vld [vmem:[#allocation12 + $0x64] sm:$0xf]
    %v3655 = vld [vmem:[#allocation12 + $0x68] sm:$0xf]
    %v3656 = vld [vmem:[#allocation12 + $0x6c] sm:$0xf]
    %v3657 = vld [vmem:[#allocation12 + $0x70] sm:$0xf]
    %v3658 = vld [vmem:[#allocation12 + $0x74] sm:$0xf]
    %v3659 = vld [vmem:[#allocation12 + $0x78] sm:$0xf]
    %v3660 = vld [vmem:[#allocation12 + $0x7c] sm:$0xf]
    %v3693 = vunpack.c.l.b16 %v3629
    %v3694 = vunpack.c.l.b16 %v3630
    %v3695 = vunpack.c.l.b16 %v3631
    %v3696 = vunpack.c.l.b16 %v3632
    %v3697 = vunpack.c.l.b16 %v3633
    %v3698 = vunpack.c.l.b16 %v3634
    %v3699 = vunpack.c.l.b16 %v3635
    %v3700 = vunpack.c.l.b16 %v3636
    %v3701 = vunpack.c.l.b16 %v3637
    %v3702 = vunpack.c.l.b16 %v3638
    %v3703 = vunpack.c.l.b16 %v3639
    %v3704 = vunpack.c.l.b16 %v3640
    %v3705 = vunpack.c.l.b16 %v3641
    %v3706 = vunpack.c.l.b16 %v3642
    %v3707 = vunpack.c.l.b16 %v3643
    %v3708 = vunpack.c.l.b16 %v3644
    %v3709 = vunpack.c.l.b16 %v3645
    %v3710 = vunpack.c.l.b16 %v3646
    %v3711 = vunpack.c.l.b16 %v3647
    %v3712 = vunpack.c.l.b16 %v3648
    %v3713 = vunpack.c.l.b16 %v3649
    %v3714 = vunpack.c.l.b16 %v3650
    %v3715 = vunpack.c.l.b16 %v3651
    %v3716 = vunpack.c.l.b16 %v3652
    %v3717 = vunpack.c.l.b16 %v3653
    %v3718 = vunpack.c.l.b16 %v3654
    %v3719 = vunpack.c.l.b16 %v3655
    %v3720 = vunpack.c.l.b16 %v3656
    %v3721 = vunpack.c.l.b16 %v3657
    %v3722 = vunpack.c.l.b16 %v3658
    %v3723 = vunpack.c.l.b16 %v3659
    %v3724 = vunpack.c.l.b16 %v3660
    %v3725 = vpack.c.b16 %v3694, %v3693
    %v3726 = vpack.c.b16 %v3696, %v3695
    %v3727 = vpack.c.b16 %v3698, %v3697
    %v3728 = vpack.c.b16 %v3700, %v3699
    %v3729 = vpack.c.b16 %v3702, %v3701
    %v3730 = vpack.c.b16 %v3704, %v3703
    %v3731 = vpack.c.b16 %v3706, %v3705
    %v3732 = vpack.c.b16 %v3708, %v3707
    %v3733 = vpack.c.b16 %v3710, %v3709
    %v3734 = vpack.c.b16 %v3712, %v3711
    %v3735 = vpack.c.b16 %v3714, %v3713
    %v3736 = vpack.c.b16 %v3716, %v3715
    %v3737 = vpack.c.b16 %v3718, %v3717
    %v3738 = vpack.c.b16 %v3720, %v3719
    %v3739 = vpack.c.b16 %v3722, %v3721
    %v3740 = vpack.c.b16 %v3724, %v3723
    %3757 = vmatprep.subr.bf16.mxu0 0
    %3758 = vmatpush1.bf16.msra.mxu0 %v3732
    %3759 = vmatprep.subr.bf16.mxu0 0
    %3760 = vmatpush1.bf16.msra.mxu0 %v3731
    %3761 = vmatprep.subr.bf16.mxu0 0
    %3762 = vmatpush1.bf16.msra.mxu0 %v3730
    %3763 = vmatprep.subr.bf16.mxu0 0
    %3764 = vmatpush1.bf16.msra.mxu0 %v3729
    %3765 = vmatprep.subr.bf16.mxu0 0
    %3766 = vmatpush1.bf16.msra.mxu0 %v3728
    %3767 = vmatprep.subr.bf16.mxu0 0
    %3768 = vmatpush1.bf16.msra.mxu0 %v3727
    %3769 = vmatprep.subr.bf16.mxu0 0
    %3770 = vmatpush1.bf16.msra.mxu0 %v3726
    %3771 = vmatprep.subr.bf16.mxu0 0
    %3772 = vmatpush1.bf16.msra.mxu0 %v3725
    %3773 = vmatprep.subr.bf16.mxu0 0
    %3774 = vmatpush2.bf16.msra.mxu0 %v3740
    %3775 = vmatprep.subr.bf16.mxu0 0
    %3776 = vmatpush2.bf16.msra.mxu0 %v3739
    %3777 = vmatprep.subr.bf16.mxu0 0
    %3778 = vmatpush2.bf16.msra.mxu0 %v3738
    %3779 = vmatprep.subr.bf16.mxu0 0
    %3780 = vmatpush2.bf16.msra.mxu0 %v3737
    %3781 = vmatprep.subr.bf16.mxu0 0
    %3782 = vmatpush2.bf16.msra.mxu0 %v3736
    %3783 = vmatprep.subr.bf16.mxu0 0
    %3784 = vmatpush2.bf16.msra.mxu0 %v3735
    %3785 = vmatprep.subr.bf16.mxu0 0
    %3786 = vmatpush2.bf16.msra.mxu0 %v3734
    %3787 = vmatprep.subr.bf16.mxu0 0
    %3788 = vmatpush2.bf16.msra.mxu0 %v3733
    %3789 = vmatprep.mubr.bf16.mxu0 %v3628
    %3790 = vmatmul.mubr.bf16.gmra.mxu0 %v3627
    %v3791 = vpop.f32.mrf.mxu0
    %v3792 = vadd.f32 0.0, %v3791
    %v3793 = vpop.f32.mrf.mxu0
    %v3794 = vpop.f32.mrf.mxu0
    %v3795 = vadd.f32 0.0, %v3794
    %v3796 = vpop.f32.mrf.mxu0
    %3797 = vdwg.mxu0
    %v3798 = vld [vmem:[#allocation18 + $0x2] ss:$0 sm:$0xff]
    %v3799 = vmul.f32 %v3792, %v3798
    %v3800 = vmul.f32 %v3795, %v3798
    %v3801 = vld [vmem:[#allocation18 + $0x42] ss:$0 sm:$0xff]
    %v3802 = vadd.f32 %v3799, %v3801
    %v3803 = vadd.f32 %v3800, %v3801
    %s3804 = sld [smem:[#allocation3 + $0x2]]
    %vm3805 = vcmp.gt.f32.partialorder %v3802, 0.0
    %vm3806 = vcmp.gt.f32.partialorder %v3803, 0.0
    %v3807 = vstv %s3804
    %v3808 = vmul.f32 %v3807, %v3802
    %v3809 = vmul.f32 %v3807, %v3803
    %v3810 = vsel %vm3805, %v3802, %v3808
    %v3811 = vsel %vm3806, %v3803, %v3809
    %v3812 = vpack.c.bf16 %v3811, %v3810
    %v3813 = vld [vmem:[#allocation13] sm:$0xf]
    %v3814 = vld [vmem:[#allocation13 + $0x4] sm:$0xf]
    %v3815 = vld [vmem:[#allocation13 + $0x8] sm:$0xf]
    %v3816 = vld [vmem:[#allocation13 + $0xc] sm:$0xf]
    %v3817 = vld [vmem:[#allocation13 + $0x10] sm:$0xf]
    %v3818 = vld [vmem:[#allocation13 + $0x14] sm:$0xf]
    %v3819 = vld [vmem:[#allocation13 + $0x18] sm:$0xf]
    %v3820 = vld [vmem:[#allocation13 + $0x1c] sm:$0xf]
    %v3821 = vld [vmem:[#allocation13 + $0x20] sm:$0xf]
    %v3822 = vld [vmem:[#allocation13 + $0x24] sm:$0xf]
    %v3823 = vld [vmem:[#allocation13 + $0x28] sm:$0xf]
    %v3824 = vld [vmem:[#allocation13 + $0x2c] sm:$0xf]
    %v3825 = vld [vmem:[#allocation13 + $0x30] sm:$0xf]
    %v3826 = vld [vmem:[#allocation13 + $0x34] sm:$0xf]
    %v3827 = vld [vmem:[#allocation13 + $0x38] sm:$0xf]
    %v3828 = vld [vmem:[#allocation13 + $0x3c] sm:$0xf]
    %v3845 = vunpack.c.l.b16 %v3813
    %v3846 = vunpack.c.l.b16 %v3814
    %v3847 = vunpack.c.l.b16 %v3815
    %v3848 = vunpack.c.l.b16 %v3816
    %v3849 = vunpack.c.l.b16 %v3817
    %v3850 = vunpack.c.l.b16 %v3818
    %v3851 = vunpack.c.l.b16 %v3819
    %v3852 = vunpack.c.l.b16 %v3820
    %v3853 = vunpack.c.l.b16 %v3821
    %v3854 = vunpack.c.l.b16 %v3822
    %v3855 = vunpack.c.l.b16 %v3823
    %v3856 = vunpack.c.l.b16 %v3824
    %v3857 = vunpack.c.l.b16 %v3825
    %v3858 = vunpack.c.l.b16 %v3826
    %v3859 = vunpack.c.l.b16 %v3827
    %v3860 = vunpack.c.l.b16 %v3828
    %v3861 = vpack.c.b16 %v3846, %v3845
    %v3862 = vpack.c.b16 %v3848, %v3847
    %v3863 = vpack.c.b16 %v3850, %v3849
    %v3864 = vpack.c.b16 %v3852, %v3851
    %v3865 = vpack.c.b16 %v3854, %v3853
    %v3866 = vpack.c.b16 %v3856, %v3855
    %v3867 = vpack.c.b16 %v3858, %v3857
    %v3868 = vpack.c.b16 %v3860, %v3859
    %3877 = vmatprep.subr.bf16.mxu0 0
    %3878 = vmatpush1.bf16.msra.mxu0 %v3868
    %3879 = vmatprep.subr.bf16.mxu0 0
    %3880 = vmatpush1.bf16.msra.mxu0 %v3867
    %3881 = vmatprep.subr.bf16.mxu0 0
    %3882 = vmatpush1.bf16.msra.mxu0 %v3866
    %3883 = vmatprep.subr.bf16.mxu0 0
    %3884 = vmatpush1.bf16.msra.mxu0 %v3865
    %3885 = vmatprep.subr.bf16.mxu0 0
    %3886 = vmatpush1.bf16.msra.mxu0 %v3864
    %3887 = vmatprep.subr.bf16.mxu0 0
    %3888 = vmatpush1.bf16.msra.mxu0 %v3863
    %3889 = vmatprep.subr.bf16.mxu0 0
    %3890 = vmatpush1.bf16.msra.mxu0 %v3862
    %3891 = vmatprep.subr.bf16.mxu0 0
    %3892 = vmatpush1.bf16.msra.mxu0 %v3861
    %3893 = vmatprep.subr.bf16.mxu0 0
    %3894 = vmatpush2.bf16.msra.mxu0 0
    %3895 = vmatprep.subr.bf16.mxu0 0
    %3896 = vmatpush2.bf16.msra.mxu0 0
    %3897 = vmatprep.subr.bf16.mxu0 0
    %3898 = vmatpush2.bf16.msra.mxu0 0
    %3899 = vmatprep.subr.bf16.mxu0 0
    %3900 = vmatpush2.bf16.msra.mxu0 0
    %3901 = vmatprep.subr.bf16.mxu0 0
    %3902 = vmatpush2.bf16.msra.mxu0 0
    %3903 = vmatprep.subr.bf16.mxu0 0
    %3904 = vmatpush2.bf16.msra.mxu0 0
    %3905 = vmatprep.subr.bf16.mxu0 0
    %3906 = vmatpush2.bf16.msra.mxu0 0
    %3907 = vmatprep.subr.bf16.mxu0 0
    %3908 = vmatpush2.bf16.msra.mxu0 0
    %3909 = vmatprep.mubr.bf16.mxu0 0
    %3910 = vmatmul.mubr.bf16.gmra.mxu0 %v3812
    %v3911 = vpop.f32.mrf.mxu0
    %v3912 = vadd.f32 0.0, %v3911
    %v3913 = vpop.f32.mrf.mxu0
    %v3914 = vpop.f32.mrf.mxu0
    %v3915 = vadd.f32 0.0, %v3914
    %v3916 = vpop.f32.mrf.mxu0
    %3917 = vdwg.mxu0
    %v3918 = vld [vmem:[#allocation18 + $0x3] ss:$0 sm:$0xff]
    %v3919 = vmul.f32 %v3912, %v3918
    %v3920 = vmul.f32 %v3915, %v3918
    %v3921 = vld [vmem:[#allocation18 + $0x43] ss:$0 sm:$0xff]
    %v3922 = vadd.f32 %v3919, %v3921
    %v3923 = vadd.f32 %v3920, %v3921
    %s3924 = sld [smem:[#allocation3 + $0x3]]
    %vm3925 = vcmp.gt.f32.partialorder %v3922, 0.0
    %vm3926 = vcmp.gt.f32.partialorder %v3923, 0.0
    %v3927 = vstv %s3924
    %v3928 = vmul.f32 %v3927, %v3922
    %v3929 = vmul.f32 %v3927, %v3923
    %v3930 = vsel %vm3925, %v3922, %v3928
    %v3931 = vsel %vm3926, %v3923, %v3929
    %v3932 = vpack.c.bf16 %v3931, %v3930
    %v3933 = vld [vmem:[#allocation15] sm:$0xf]
    %v3934 = vld [vmem:[#allocation15 + $0x4] sm:$0xf]
    %v3935 = vld [vmem:[#allocation15 + $0x8] sm:$0xf]
    %v3936 = vld [vmem:[#allocation15 + $0xc] sm:$0xf]
    %v3937 = vld [vmem:[#allocation15 + $0x10] sm:$0xf]
    %v3938 = vld [vmem:[#allocation15 + $0x14] sm:$0xf]
    %v3939 = vld [vmem:[#allocation15 + $0x18] sm:$0xf]
    %v3940 = vld [vmem:[#allocation15 + $0x1c] sm:$0xf]
    %v3941 = vld [vmem:[#allocation15 + $0x20] sm:$0xf]
    %v3942 = vld [vmem:[#allocation15 + $0x24] sm:$0xf]
    %v3943 = vld [vmem:[#allocation15 + $0x28] sm:$0xf]
    %v3944 = vld [vmem:[#allocation15 + $0x2c] sm:$0xf]
    %v3945 = vld [vmem:[#allocation15 + $0x30] sm:$0xf]
    %v3946 = vld [vmem:[#allocation15 + $0x34] sm:$0xf]
    %v3947 = vld [vmem:[#allocation15 + $0x38] sm:$0xf]
    %v3948 = vld [vmem:[#allocation15 + $0x3c] sm:$0xf]
    %v3965 = vunpack.c.l.b16 %v3933
    %v3966 = vunpack.c.l.b16 %v3934
    %v3967 = vunpack.c.l.b16 %v3935
    %v3968 = vunpack.c.l.b16 %v3936
    %v3969 = vunpack.c.l.b16 %v3937
    %v3970 = vunpack.c.l.b16 %v3938
    %v3971 = vunpack.c.l.b16 %v3939
    %v3972 = vunpack.c.l.b16 %v3940
    %v3973 = vunpack.c.l.b16 %v3941
    %v3974 = vunpack.c.l.b16 %v3942
    %v3975 = vunpack.c.l.b16 %v3943
    %v3976 = vunpack.c.l.b16 %v3944
    %v3977 = vunpack.c.l.b16 %v3945
    %v3978 = vunpack.c.l.b16 %v3946
    %v3979 = vunpack.c.l.b16 %v3947
    %v3980 = vunpack.c.l.b16 %v3948
    %v3981 = vpack.c.b16 %v3966, %v3965
    %v3982 = vpack.c.b16 %v3968, %v3967
    %v3983 = vpack.c.b16 %v3970, %v3969
    %v3984 = vpack.c.b16 %v3972, %v3971
    %v3985 = vpack.c.b16 %v3974, %v3973
    %v3986 = vpack.c.b16 %v3976, %v3975
    %v3987 = vpack.c.b16 %v3978, %v3977
    %v3988 = vpack.c.b16 %v3980, %v3979
    %3997 = vmatprep.subr.bf16.mxu0 0
    %3998 = vmatpush1.bf16.msra.mxu0 %v3988
    %3999 = vmatprep.subr.bf16.mxu0 0
    %4000 = vmatpush1.bf16.msra.mxu0 %v3987
    %4001 = vmatprep.subr.bf16.mxu0 0
    %4002 = vmatpush1.bf16.msra.mxu0 %v3986
    %4003 = vmatprep.subr.bf16.mxu0 0
    %4004 = vmatpush1.bf16.msra.mxu0 %v3985
    %4005 = vmatprep.subr.bf16.mxu0 0
    %4006 = vmatpush1.bf16.msra.mxu0 %v3984
    %4007 = vmatprep.subr.bf16.mxu0 0
    %4008 = vmatpush1.bf16.msra.mxu0 %v3983
    %4009 = vmatprep.subr.bf16.mxu0 0
    %4010 = vmatpush1.bf16.msra.mxu0 %v3982
    %4011 = vmatprep.subr.bf16.mxu0 0
    %4012 = vmatpush1.bf16.msra.mxu0 %v3981
    %4013 = vmatprep.subr.bf16.mxu0 0
    %4014 = vmatpush2.bf16.msra.mxu0 0
    %4015 = vmatprep.subr.bf16.mxu0 0
    %4016 = vmatpush2.bf16.msra.mxu0 0
    %4017 = vmatprep.subr.bf16.mxu0 0
    %4018 = vmatpush2.bf16.msra.mxu0 0
    %4019 = vmatprep.subr.bf16.mxu0 0
    %4020 = vmatpush2.bf16.msra.mxu0 0
    %4021 = vmatprep.subr.bf16.mxu0 0
    %4022 = vmatpush2.bf16.msra.mxu0 0
    %4023 = vmatprep.subr.bf16.mxu0 0
    %4024 = vmatpush2.bf16.msra.mxu0 0
    %4025 = vmatprep.subr.bf16.mxu0 0
    %4026 = vmatpush2.bf16.msra.mxu0 0
    %4027 = vmatprep.subr.bf16.mxu0 0
    %4028 = vmatpush2.bf16.msra.mxu0 0
    %4029 = vmatprep.mubr.bf16.mxu0 0
    %4030 = vmatmul.mubr.bf16.gmra.mxu0 %v3932
    %v4031 = vpop.f32.mrf.mxu0
    %v4032 = vadd.f32 0.0, %v4031
    %v4033 = vpop.f32.mrf.mxu0
    %v4034 = vpop.f32.mrf.mxu0
    %v4035 = vadd.f32 0.0, %v4034
    %v4036 = vpop.f32.mrf.mxu0
    %4037 = vdwg.mxu0
    %v4038 = vld [vmem:[#allocation18 + $0x4] ss:$0 sm:$0xff]
    %v4039 = vmul.f32 %v4032, %v4038
    %v4040 = vmul.f32 %v4035, %v4038
    %v4041 = vld [vmem:[#allocation18 + $0x44] ss:$0 sm:$0xff]
    %v4042 = vadd.f32 %v4039, %v4041
    %v4043 = vadd.f32 %v4040, %v4041
    %s4044 = sld [smem:[#allocation3 + $0x4]]
    %vm4045 = vcmp.gt.f32.partialorder %v4042, 0.0
    %vm4046 = vcmp.gt.f32.partialorder %v4043, 0.0
    %v4047 = vstv %s4044
    %v4048 = vmul.f32 %v4047, %v4042
    %v4049 = vmul.f32 %v4047, %v4043
    %v4050 = vsel %vm4045, %v4042, %v4048
    %v4051 = vsel %vm4046, %v4043, %v4049
    %v4052 = vpack.c.bf16 %v4051, %v4050
    %v4053 = vld [vmem:[#allocation16] sm:$0xf]
    %v4054 = vld [vmem:[#allocation16 + $0x4] sm:$0xf]
    %v4055 = vld [vmem:[#allocation16 + $0x8] sm:$0xf]
    %v4056 = vld [vmem:[#allocation16 + $0xc] sm:$0xf]
    %v4057 = vld [vmem:[#allocation16 + $0x10] sm:$0xf]
    %v4058 = vld [vmem:[#allocation16 + $0x14] sm:$0xf]
    %v4059 = vld [vmem:[#allocation16 + $0x18] sm:$0xf]
    %v4060 = vld [vmem:[#allocation16 + $0x1c] sm:$0xf]
    %v4061 = vld [vmem:[#allocation16 + $0x20] sm:$0xf]
    %v4062 = vld [vmem:[#allocation16 + $0x24] sm:$0xf]
    %v4063 = vld [vmem:[#allocation16 + $0x28] sm:$0xf]
    %v4064 = vld [vmem:[#allocation16 + $0x2c] sm:$0xf]
    %v4065 = vld [vmem:[#allocation16 + $0x30] sm:$0xf]
    %v4066 = vld [vmem:[#allocation16 + $0x34] sm:$0xf]
    %v4067 = vld [vmem:[#allocation16 + $0x38] sm:$0xf]
    %v4068 = vld [vmem:[#allocation16 + $0x3c] sm:$0xf]
    %v4085 = vunpack.c.l.b16 %v4053
    %v4086 = vunpack.c.l.b16 %v4054
    %v4087 = vunpack.c.l.b16 %v4055
    %v4088 = vunpack.c.l.b16 %v4056
    %v4089 = vunpack.c.l.b16 %v4057
    %v4090 = vunpack.c.l.b16 %v4058
    %v4091 = vunpack.c.l.b16 %v4059
    %v4092 = vunpack.c.l.b16 %v4060
    %v4093 = vunpack.c.l.b16 %v4061
    %v4094 = vunpack.c.l.b16 %v4062
    %v4095 = vunpack.c.l.b16 %v4063
    %v4096 = vunpack.c.l.b16 %v4064
    %v4097 = vunpack.c.l.b16 %v4065
    %v4098 = vunpack.c.l.b16 %v4066
    %v4099 = vunpack.c.l.b16 %v4067
    %v4100 = vunpack.c.l.b16 %v4068
    %v4101 = vpack.c.b16 %v4086, %v4085
    %v4102 = vpack.c.b16 %v4088, %v4087
    %v4103 = vpack.c.b16 %v4090, %v4089
    %v4104 = vpack.c.b16 %v4092, %v4091
    %v4105 = vpack.c.b16 %v4094, %v4093
    %v4106 = vpack.c.b16 %v4096, %v4095
    %v4107 = vpack.c.b16 %v4098, %v4097
    %v4108 = vpack.c.b16 %v4100, %v4099
    %4117 = vmatprep.subr.bf16.mxu0 0
    %4118 = vmatpush1.bf16.msra.mxu0 %v4108
    %4119 = vmatprep.subr.bf16.mxu0 0
    %4120 = vmatpush1.bf16.msra.mxu0 %v4107
    %4121 = vmatprep.subr.bf16.mxu0 0
    %4122 = vmatpush1.bf16.msra.mxu0 %v4106
    %4123 = vmatprep.subr.bf16.mxu0 0
    %4124 = vmatpush1.bf16.msra.mxu0 %v4105
    %4125 = vmatprep.subr.bf16.mxu0 0
    %4126 = vmatpush1.bf16.msra.mxu0 %v4104
    %4127 = vmatprep.subr.bf16.mxu0 0
    %4128 = vmatpush1.bf16.msra.mxu0 %v4103
    %4129 = vmatprep.subr.bf16.mxu0 0
    %4130 = vmatpush1.bf16.msra.mxu0 %v4102
    %4131 = vmatprep.subr.bf16.mxu0 0
    %4132 = vmatpush1.bf16.msra.mxu0 %v4101
    %4133 = vmatprep.subr.bf16.mxu0 0
    %4134 = vmatpush2.bf16.msra.mxu0 0
    %4135 = vmatprep.subr.bf16.mxu0 0
    %4136 = vmatpush2.bf16.msra.mxu0 0
    %4137 = vmatprep.subr.bf16.mxu0 0
    %4138 = vmatpush2.bf16.msra.mxu0 0
    %4139 = vmatprep.subr.bf16.mxu0 0
    %4140 = vmatpush2.bf16.msra.mxu0 0
    %4141 = vmatprep.subr.bf16.mxu0 0
    %4142 = vmatpush2.bf16.msra.mxu0 0
    %4143 = vmatprep.subr.bf16.mxu0 0
    %4144 = vmatpush2.bf16.msra.mxu0 0
    %4145 = vmatprep.subr.bf16.mxu0 0
    %4146 = vmatpush2.bf16.msra.mxu0 0
    %4147 = vmatprep.subr.bf16.mxu0 0
    %4148 = vmatpush2.bf16.msra.mxu0 0
    %4149 = vmatprep.mubr.bf16.mxu0 0
    %4150 = vmatmul.mubr.bf16.gmra.mxu0 %v4052
    %v4151 = vpop.f32.mrf.mxu0
    %v4152 = vadd.f32 0.0, %v4151
    %v4153 = vpop.f32.mrf.mxu0
    %v4154 = vpop.f32.mrf.mxu0
    %v4155 = vadd.f32 0.0, %v4154
    %v4156 = vpop.f32.mrf.mxu0
    %4157 = vdwg.mxu0
    %v4158 = vld [vmem:[#allocation18 + $0x5] ss:$0 sm:$0xff]
    %v4159 = vmul.f32 %v4152, %v4158
    %v4160 = vmul.f32 %v4155, %v4158
    %v4161 = vld [vmem:[#allocation18 + $0x45] ss:$0 sm:$0xff]
    %v4162 = vadd.f32 %v4159, %v4161
    %v4163 = vadd.f32 %v4160, %v4161
    %s4164 = sld [smem:[#allocation3 + $0x5]]
    %vm4165 = vcmp.gt.f32.partialorder %v4162, 0.0
    %vm4166 = vcmp.gt.f32.partialorder %v4163, 0.0
    %v4167 = vstv %s4164
    %v4168 = vmul.f32 %v4167, %v4162
    %v4169 = vmul.f32 %v4167, %v4163
    %v4170 = vsel %vm4165, %v4162, %v4168
    %v4171 = vsel %vm4166, %v4163, %v4169
    %v4172 = vpack.c.bf16 %v4171, %v4170
    %v4173 = vld [vmem:[#allocation19] sm:$0xf]
    %v4174 = vld [vmem:[#allocation19 + $0x4] sm:$0xf]
    %v4175 = vld [vmem:[#allocation19 + $0x8] sm:$0xf]
    %v4176 = vld [vmem:[#allocation19 + $0xc] sm:$0xf]
    %v4177 = vld [vmem:[#allocation19 + $0x10] sm:$0xf]
    %v4178 = vld [vmem:[#allocation19 + $0x14] sm:$0xf]
    %v4179 = vld [vmem:[#allocation19 + $0x18] sm:$0xf]
    %v4180 = vld [vmem:[#allocation19 + $0x1c] sm:$0xf]
    %v4181 = vld [vmem:[#allocation19 + $0x20] sm:$0xf]
    %v4182 = vld [vmem:[#allocation19 + $0x24] sm:$0xf]
    %v4183 = vld [vmem:[#allocation19 + $0x28] sm:$0xf]
    %v4184 = vld [vmem:[#allocation19 + $0x2c] sm:$0xf]
    %v4185 = vld [vmem:[#allocation19 + $0x30] sm:$0xf]
    %v4186 = vld [vmem:[#allocation19 + $0x34] sm:$0xf]
    %v4187 = vld [vmem:[#allocation19 + $0x38] sm:$0xf]
    %v4188 = vld [vmem:[#allocation19 + $0x3c] sm:$0xf]
    %v4205 = vunpack.c.l.b16 %v4173
    %v4206 = vunpack.c.l.b16 %v4174
    %v4207 = vunpack.c.l.b16 %v4175
    %v4208 = vunpack.c.l.b16 %v4176
    %v4209 = vunpack.c.l.b16 %v4177
    %v4210 = vunpack.c.l.b16 %v4178
    %v4211 = vunpack.c.l.b16 %v4179
    %v4212 = vunpack.c.l.b16 %v4180
    %v4213 = vunpack.c.l.b16 %v4181
    %v4214 = vunpack.c.l.b16 %v4182
    %v4215 = vunpack.c.l.b16 %v4183
    %v4216 = vunpack.c.l.b16 %v4184
    %v4217 = vunpack.c.l.b16 %v4185
    %v4218 = vunpack.c.l.b16 %v4186
    %v4219 = vunpack.c.l.b16 %v4187
    %v4220 = vunpack.c.l.b16 %v4188
    %v4221 = vpack.c.b16 %v4206, %v4205
    %v4222 = vpack.c.b16 %v4208, %v4207
    %v4223 = vpack.c.b16 %v4210, %v4209
    %v4224 = vpack.c.b16 %v4212, %v4211
    %v4225 = vpack.c.b16 %v4214, %v4213
    %v4226 = vpack.c.b16 %v4216, %v4215
    %v4227 = vpack.c.b16 %v4218, %v4217
    %v4228 = vpack.c.b16 %v4220, %v4219
    %4237 = vmatprep.subr.bf16.mxu0 0
    %4238 = vmatpush1.bf16.msra.mxu0 %v4228
    %4239 = vmatprep.subr.bf16.mxu0 0
    %4240 = vmatpush1.bf16.msra.mxu0 %v4227
    %4241 = vmatprep.subr.bf16.mxu0 0
    %4242 = vmatpush1.bf16.msra.mxu0 %v4226
    %4243 = vmatprep.subr.bf16.mxu0 0
    %4244 = vmatpush1.bf16.msra.mxu0 %v4225
    %4245 = vmatprep.subr.bf16.mxu0 0
    %4246 = vmatpush1.bf16.msra.mxu0 %v4224
    %4247 = vmatprep.subr.bf16.mxu0 0
    %4248 = vmatpush1.bf16.msra.mxu0 %v4223
    %4249 = vmatprep.subr.bf16.mxu0 0
    %4250 = vmatpush1.bf16.msra.mxu0 %v4222
    %4251 = vmatprep.subr.bf16.mxu0 0
    %4252 = vmatpush1.bf16.msra.mxu0 %v4221
    %4253 = vmatprep.subr.bf16.mxu0 0
    %4254 = vmatpush2.bf16.msra.mxu0 0
    %4255 = vmatprep.subr.bf16.mxu0 0
    %4256 = vmatpush2.bf16.msra.mxu0 0
    %4257 = vmatprep.subr.bf16.mxu0 0
    %4258 = vmatpush2.bf16.msra.mxu0 0
    %4259 = vmatprep.subr.bf16.mxu0 0
    %4260 = vmatpush2.bf16.msra.mxu0 0
    %4261 = vmatprep.subr.bf16.mxu0 0
    %4262 = vmatpush2.bf16.msra.mxu0 0
    %4263 = vmatprep.subr.bf16.mxu0 0
    %4264 = vmatpush2.bf16.msra.mxu0 0
    %4265 = vmatprep.subr.bf16.mxu0 0
    %4266 = vmatpush2.bf16.msra.mxu0 0
    %4267 = vmatprep.subr.bf16.mxu0 0
    %4268 = vmatpush2.bf16.msra.mxu0 0
    %4269 = vmatprep.mubr.bf16.mxu0 0
    %4270 = vmatmul.mubr.bf16.gmra.mxu0 %v4172
    %v4271 = vpop.f32.mrf.mxu0
    %v4272 = vadd.f32 0.0, %v4271
    %v4273 = vpop.f32.mrf.mxu0
    %v4274 = vpop.f32.mrf.mxu0
    %v4275 = vadd.f32 0.0, %v4274
    %v4276 = vpop.f32.mrf.mxu0
    %4277 = vdwg.mxu0
    %4278 = vst [vmem:[#allocation21] sm:$0xff] %v4272
    %4279 = vst [vmem:[#allocation21 + $0x8] sm:$0xff] %v4275
    // Predicated region
    $region82: #{tpu_custom_call.1} parent=1 // pred_check
      _
    $region83: #{tpu_custom_call.1} parent=1 // pred_check_branch
      %4281 = sbr.rel (0) target = $region85
    $region84: #{tpu_custom_call.1} parent=1 // pred_region
      %s4283 = ssub.s32 256, 256
      %4284 = vsyncadd [#allocation6], %s4283
      %s4285 = sshll.u32 [#allocation21], 4
      %s4286 = int_to_ptr.vmem [resolvable:$true] %s4285
      %4291 = dma.vmem_to_hbm [thread:$0]  %s4286, 256, %s11, [#allocation6], 128, 128, 8
    $region85: #{tpu_custom_call.1} parent=1 // pred_fallthru
      _
    // Predicated region
    $region86: #{tpu_custom_call.1} parent=1 // pred_check
      _
    $region87: #{tpu_custom_call.1} parent=1 // pred_check_branch
      %4293 = sbr.rel (0) target = $region89
    $region88: #{tpu_custom_call.1} parent=1 // pred_region
      %4294 = dma.done [#allocation6], 256
    $region89: #{tpu_custom_call.1} parent=1 // pred_fallthru
      _
    %4295 = vsyncpa [#allocation5], 1
    %4296 = vsyncpa [#allocation8], 1
    %4297 = vsyncpa [#allocation11], 1
    %4298 = vsyncpa [#allocation14], 1
    %4299 = vsyncpa [#allocation17], 1
    %4300 = vsyncpa [#allocation20], 1
    %4301 = vsyncpa [#allocation6], 1

</llo_original>
